<compile_context>
chip_gen: v5e
topology: v5e:2x2
jax: 0.10.0
libtpu: 0.0.40
codegen_flags: <defaults>
</compile_context>

<pallas_src>
import functools

import jax
import jax.numpy as jnp
from jax.experimental import pallas as pl
from jax.experimental.pallas import tpu as pltpu

LANE = 128


def _rup(c, m=LANE):
    return ((c + m - 1) // m) * m


# ----------------------- roll direction / lowering probe --------------------

@functools.lru_cache(maxsize=None)
def _detect_roll_impl(p):
    """Probe pltpu.roll's rotation direction on a (P, 128) f32 sublane roll.

    Returns "neg" if pltpu.roll matches np.roll (result[i] = x[i - shift]),
    "pos" if it is the opposite convention, or "jnp" to fall back to
    jnp.roll-based shifting if the roll does not lower.
    """
    x = jnp.arange(p * LANE, dtype=jnp.float32).reshape(p, LANE)

    def probe_kernel(x_ref, o_ref):
        o_ref[...] = pltpu.roll(x_ref[...], 3, axis=0)

    try:
        y = pl.pallas_call(
            probe_kernel,
            out_shape=jax.ShapeDtypeStruct((p, LANE), jnp.float32))(x)
        y = jax.device_get(y)
    except Exception:                                   # noqa: BLE001
        return "jnp"
    if (y == jax.device_get(jnp.roll(x, 3, axis=0))).all():
        return "neg"
    if (y == jax.device_get(jnp.roll(x, -3, axis=0))).all():
        return "pos"
    return "jnp"


def _shift_rows(x, s, roll_impl):
    """Circular shift along axis 0 so that result[p] == x[(p + s) % P]."""
    if s == 0:
        return x
    p = x.shape[0]
    if roll_impl == "neg":
        return pltpu.roll(x, (-s) % p, axis=0)
    if roll_impl == "pos":
        return pltpu.roll(x, s % p, axis=0)
    return jnp.roll(x, -s, axis=0)      # fallback (slices + concat)


# ------------------------------ kernel helpers ------------------------------

def _conv3x3_bn_relu(x_f32, w_ref, shift_ref, masks_ref, wp, roll_impl):
    """3x3 conv (pad=1) + folded-BN shift + ReLU via shifted accumulation.

    x_f32: (P, Cin) f32, rows ordered p = h*Wp + w.
    w_ref: (3, 3, Cin, Cout) bf16 weights with the BN scale already folded in.
    masks_ref: (9, P, 1) f32 0/1 edge masks (tap order: dy outer, dx inner).
    """
    p = x_f32.shape[0]
    cout = w_ref.shape[-1]
    acc = jnp.zeros((p, cout), jnp.float32)
    for dy in (-1, 0, 1):
        for dx in (-1, 0, 1):
            s = dy * wp + dx
            shifted = _shift_rows(x_f32, s, roll_impl)
            if dy != 0 or dx != 0:
                shifted = shifted * masks_ref[(dy + 1) * 3 + (dx + 1)]
            acc = acc + jnp.dot(shifted.astype(jnp.bfloat16),
                                w_ref[dy + 1, dx + 1],
                                preferred_element_type=jnp.float32)
    return jnp.maximum(acc + shift_ref[...], 0.0)


# --------------------------------- kernel -----------------------------------

def inception_kernel(x_ref, masks_ref, we_ref, se_ref,
                     w1b_ref, s1b_ref, w2b_ref, s2b_ref, w2c_ref, s2c_ref,
                     wf0_ref, wf1_ref, wf2_ref, bf_ref, o_ref,
                     *, wp, c2p, post_scale, roll_impl):
    # ---- 2x2 max pool: input pre-arranged as (1, 2, 2, P, Cp) bf16 ----------
    x5 = x_ref[...]
    xp = jnp.maximum(jnp.maximum(x5[0, 0, 0], x5[0, 0, 1]),
                     jnp.maximum(x5[0, 1, 0], x5[0, 1, 1]))      # (P, Cp) bf16

    # ---- fused branch-entry 1x1 convs (w0 | w1a | w2a on Cout) --------------
    ent = jnp.dot(xp, we_ref[...], preferred_element_type=jnp.float32)
    ent = jnp.maximum(ent + se_ref[...], 0.0)                    # (P, 3*C2p)
    x0 = ent[:, :c2p]
    x1_in = ent[:, c2p:2 * c2p]
    x2_in = ent[:, 2 * c2p:]

    # ---- branch1: 1x1 -> 3x3 ------------------------------------------------
    x1 = _conv3x3_bn_relu(x1_in, w1b_ref, s1b_ref, masks_ref, wp, roll_impl)
    # ---- branch2: 1x1 -> 3x3 -> 3x3 ----------------------------------------
    t = _conv3x3_bn_relu(x2_in, w2b_ref, s2b_ref, masks_ref, wp, roll_impl)
    x2 = _conv3x3_bn_relu(t, w2c_ref, s2c_ref, masks_ref, wp, roll_impl)

    # ---- concat + final 1x1 conv (+bias) as a split matmul ------------------
    out = (jnp.dot(x0.astype(jnp.bfloat16), wf0_ref[...],
                   preferred_element_type=jnp.float32)
           + jnp.dot(x1.astype(jnp.bfloat16), wf1_ref[...],
                     preferred_element_type=jnp.float32)
           + jnp.dot(x2.astype(jnp.bfloat16), wf2_ref[...],
                     preferred_element_type=jnp.float32)
           + bf_ref[...])
    if post_scale != 1.0:          # only when `scale` < 0 (not foldable)
        out = out * post_scale
    o_ref[...] = jnp.maximum(out, 0.0)[None].astype(o_ref.dtype)


# ------------------------------ weight plumbing ------------------------------

def _pad_w_1x1(w, s, cin_p, cout_p):
    wf = w * s[None, :]
    return jnp.pad(wf, ((0, cin_p - wf.shape[0]), (0, cout_p - wf.shape[1])))


def _pad_w_3x3(w, s, cin_p, cout_p):
    wf = w * s[None, None, None, :]
    return jnp.pad(wf, ((0, 0), (0, 0),
                        (0, cin_p - wf.shape[2]), (0, cout_p - wf.shape[3])))


def _pad_vec(v, cout_p):
    return jnp.pad(v, (0, cout_p - v.shape[0])).reshape(1, cout_p)


def _make_tap_masks(hp, wp):
    p = hp * wp
    hh, ww = jnp.meshgrid(jnp.arange(hp), jnp.arange(wp), indexing="ij")
    hh = hh.reshape(p, 1)
    ww = ww.reshape(p, 1)
    masks = []
    for dy in (-1, 0, 1):
        for dx in (-1, 0, 1):
            m = ((hh + dy >= 0) & (hh + dy <= hp - 1) &
                 (ww + dx >= 0) & (ww + dx <= wp - 1))
            masks.append(m.astype(jnp.float32))
    return jnp.stack(masks, axis=0)                     # (9, P, 1)


# --------------------------------- wrapper -----------------------------------

def inception_forward(x_nchw, params, scale):
    n, cin, h, w = x_nchw.shape
    assert h % 2 == 0 and w % 2 == 0
    hp, wp = h // 2, w // 2
    p = hp * wp
    out_ch = params["conv2d_b"].shape[0]
    c2 = cin // 2

    cp = _rup(cin)
    c2p = _rup(c2)
    cmidp = _rup(c2 + cin)
    cb2p = _rup(2 * cin)
    ocp = _rup(out_ch)

    roll_impl = _detect_roll_impl(p)

    # input: NCHW -> (N, 2, 2, Hp*Wp, Cp) bf16 (pool factors leading, channels
    # zero-padded to a lane multiple and kept on the lane dim).
    x = jnp.transpose(x_nchw, (0, 2, 3, 1)).astype(jnp.float32)
    x = jnp.pad(x, ((0, 0), (0, 0), (0, 0), (0, cp - cin)))
    x = x.reshape(n, hp, 2, wp, 2, cp).transpose(0, 2, 4, 1, 3, 5)
    x_arr = x.reshape(n, 2, 2, p, cp).astype(jnp.bfloat16)

    masks_arr = _make_tap_masks(hp, wp)

    # weights: fold eval-mode BN scale into the conv weights, zero-pad channels
    # to lane multiples, pre-cast matmul operands to bf16.
    w0, s0, b0 = params["b0"]
    w1a, s1a, b1a = params["b1a"]
    w1b, s1b, b1b = params["b1b"]
    w2a, s2a, b2a = params["b2a"]
    w2b, s2b, b2b = params["b2b"]
    w2c, s2c, b2c = params["b2c"]

    we = jnp.concatenate([_pad_w_1x1(w0, s0, cp, c2p),
                          _pad_w_1x1(w1a, s1a, cp, c2p),
                          _pad_w_1x1(w2a, s2a, cp, c2p)],
                         axis=1).astype(jnp.bfloat16)
    se = jnp.concatenate([_pad_vec(b0, c2p), _pad_vec(b1a, c2p),
                          _pad_vec(b2a, c2p)], axis=1)

    w1b_p = _pad_w_3x3(w1b, s1b, c2p, c2p).astype(jnp.bfloat16)
    s1b_p = _pad_vec(b1b, c2p)
    w2b_p = _pad_w_3x3(w2b, s2b, c2p, cmidp).astype(jnp.bfloat16)
    s2b_p = _pad_vec(b2b, cmidp)
    w2c_p = _pad_w_3x3(w2c, s2c, cmidp, cb2p).astype(jnp.bfloat16)
    s2c_p = _pad_vec(b2c, cb2p)

    wf = params["conv2d_w"]
    bias = params["conv2d_b"]
    if scale >= 0:                 # ReLU(scale*(Wx+b)) == ReLU((scale*W)x + scale*b)
        wf = wf * scale
        bias = bias * scale
        post_scale = 1.0
    else:
        post_scale = float(scale)
    wf0 = jnp.pad(wf[:c2],
                  ((0, c2p - c2), (0, ocp - out_ch))).astype(jnp.bfloat16)
    wf1 = jnp.pad(wf[c2:2 * c2],
                  ((0, c2p - c2), (0, ocp - out_ch))).astype(jnp.bfloat16)
    wf2 = jnp.pad(wf[2 * c2:],
                  ((0, cb2p - 2 * cin), (0, ocp - out_ch))).astype(jnp.bfloat16)
    bfp = _pad_vec(bias, ocp)

    consts = [we, se, w1b_p, s1b_p, w2b_p, s2b_p, w2c_p, s2c_p,
              wf0, wf1, wf2, bfp]

    def const_spec(a):
        nd = a.ndim
        return pl.BlockSpec(a.shape, lambda i, _nd=nd: (0,) * _nd)

    in_specs = [pl.BlockSpec((1, 2, 2, p, cp), lambda i: (i, 0, 0, 0, 0)),
                const_spec(masks_arr)]
    in_specs += [const_spec(a) for a in consts]
    out_spec = pl.BlockSpec((1, p, ocp), lambda i: (i, 0, 0))

    kernel = functools.partial(inception_kernel, wp=wp, c2p=c2p,
                               post_scale=post_scale, roll_impl=roll_impl)

    out = pl.pallas_call(
        kernel,
        out_shape=jax.ShapeDtypeStruct((n, p, ocp), jnp.float32),
        grid=(n,),
        in_specs=in_specs,
        out_specs=out_spec,
        compiler_params=pltpu.CompilerParams(
            dimension_semantics=("parallel",),
            vmem_limit_bytes=32 * 1024 * 1024),
    )(x_arr, masks_arr, *consts)

    out = out.reshape(n, hp, wp, ocp)[..., :out_ch]
    return jnp.transpose(out, (0, 3, 1, 2))             # NHWC -> NCHW


# ------------------------------ pure-JAX reference ---------------------------

def inception_reference(x_nchw, params, scale):
    """f32 NHWC reference (XLA convs) of InceptionLayer.forward (BN eval)."""
    x = jnp.transpose(x_nchw, (0, 2, 3, 1)).astype(jnp.float32)
    x = jax.lax.reduce_window(x, -jnp.inf, jax.lax.max,
                              (1, 2, 2, 1), (1, 2, 2, 1), "VALID")

    def basic(x, wgt, s, b, pad):
        y = jax.lax.conv_general_dilated(
            x, wgt, window_strides=(1, 1), padding=((pad, pad), (pad, pad)),
            dimension_numbers=("NHWC", "HWIO", "NHWC"),
            precision=jax.lax.Precision.HIGHEST)
        return jnp.maximum(y * s + b, 0.0)

    w0, s0, b0 = params["b0"]
    w1a, s1a, b1a = params["b1a"]
    w1b, s1b, b1b = params["b1b"]
    w2a, s2a, b2a = params["b2a"]
    w2b, s2b, b2b = params["b2b"]
    w2c, s2c, b2c = params["b2c"]

    x0 = basic(x, w0[None, None], s0, b0, 0)
    x1 = basic(basic(x, w1a[None, None], s1a, b1a, 0), w1b, s1b, b1b, 1)
    t = basic(x, w2a[None, None], s2a, b2a, 0)
    t = basic(t, w2b, s2b, b2b, 1)
    x2 = basic(t, w2c, s2c, b2c, 1)

    cat = jnp.concatenate([x0, x1, x2], axis=-1)
    out = jax.lax.conv_general_dilated(
        cat, params["conv2d_w"][None, None], (1, 1), ((0, 0), (0, 0)),
        dimension_numbers=("NHWC", "HWIO", "NHWC"),
        precision=jax.lax.Precision.HIGHEST) + params["conv2d_b"]
    out = jnp.maximum(out * scale, 0.0)
    return jnp.transpose(out, (0, 3, 1, 2))


# ------------------------------ parameter init -------------------------------

def _init_basic_conv(key, cin, cout, ksize, eps=1e-3):
    kw, kg, kb, km, kv = jax.random.split(key, 5)
    w_shape = (cin, cout) if ksize == 1 else (ksize, ksize, cin, cout)
    fan_in = cin * ksize * ksize
    wgt = jax.random.normal(kw, w_shape, jnp.float32) / jnp.sqrt(fan_in)
    gamma = 1.0 + 0.1 * jax.random.normal(kg, (cout,), jnp.float32)
    beta = 0.1 * jax.random.normal(kb, (cout,), jnp.float32)
    mean = 0.1 * jax.random.normal(km, (cout,), jnp.float32)
    var = jax.random.uniform(kv, (cout,), jnp.float32, minval=0.5, maxval=1.5)
    s = gamma * jax.lax.rsqrt(var + eps)   # eval-mode BN -> per-channel scale
    b = beta - mean * s                    #                and shift
    return wgt, s, b


def init_params(key, in_ch, out_ch):
    c2 = in_ch // 2
    ks = jax.random.split(key, 8)
    prm = {
        "b0": _init_basic_conv(ks[0], in_ch, c2, 1),
        "b1a": _init_basic_conv(ks[1], in_ch, c2, 1),
        "b1b": _init_basic_conv(ks[2], c2, c2, 3),
        "b2a": _init_basic_conv(ks[3], in_ch, c2, 1),
        "b2b": _init_basic_conv(ks[4], c2, c2 + in_ch, 3),
        "b2c": _init_basic_conv(ks[5], c2 + in_ch, 2 * in_ch, 3),
        "conv2d_w": jax.random.normal(ks[6], (3 * in_ch, out_ch),
                                      jnp.float32) / jnp.sqrt(3 * in_ch),
        "conv2d_b": 0.1 * jax.random.normal(ks[7], (out_ch,), jnp.float32),
    }
    return prm


# ----------------------------------- main ------------------------------------

if __name__ == "__main__":
    key = jax.random.PRNGKey(0)
    kx, kp = jax.random.split(key)

    in_ch, out_ch, scale = 4, 8, 0.5
    n, h, w = 2, 16, 16

    x = jax.random.normal(kx, (n, in_ch, h, w), jnp.float32)   # NCHW (PyTorch)
    params = init_params(kp, in_ch, out_ch)

    y = inception_forward(x, params, scale)
    jax.block_until_ready(y)
    assert y.shape == (n, out_ch, h // 2, w // 2), y.shape

    y_ref = inception_reference(x, params, scale)
    max_err = float(jnp.max(jnp.abs(y - y_ref)))
    assert jnp.allclose(y, y_ref, rtol=5e-2, atol=1e-1), (
        f"mismatch vs reference, max abs err = {max_err}")
    print("KERNEL_OK")
</pallas_src>

<mosaic_0001>
module attributes {stable_mosaic.version = 11 : i64} {
  func.func @probe_kernel(%arg0: memref<64x128xf32, #tpu.memory_space<vmem>>, %arg1: memref<64x128xf32, #tpu.memory_space<vmem>>) attributes {dimension_semantics = [], scalar_prefetch = 0 : i64, scratch_operands = 0 : i64, tpu.core_type = #tpu.core_type<tc>} {
    %c0 = arith.constant 0 : index
    %c0_0 = arith.constant 0 : index
    %0 = vector.load %arg0[%c0, %c0_0] : memref<64x128xf32, #tpu.memory_space<vmem>>, vector<64x128xf32>
    %c3_i32 = arith.constant 3 : i32
    %1 = tpu.dynamic_rotate %0 by %c3_i32 dim 0 : vector<64x128xf32>, i32 -> vector<64x128xf32>
    %c0_1 = arith.constant 0 : index
    %c0_2 = arith.constant 0 : index
    %2 = vector.load %arg1[%c0_1, %c0_2] : memref<64x128xf32, #tpu.memory_space<vmem>>, vector<64x128xf32>
    tpu.vector_store %arg1[%c0_1, %c0_2], %1 {strides = array<i32>} : memref<64x128xf32, #tpu.memory_space<vmem>>, vector<64x128xf32>,
    return
  }
}

module attributes {stable_mosaic.version = 11 : i64} {
  func.func @inception_kernel(%arg0: i32, %arg1: memref<1x2x2x64x128xbf16, #tpu.memory_space<vmem>>, %arg2: memref<9x64x1xf32, #tpu.memory_space<vmem>>, %arg3: memref<128x384xbf16, #tpu.memory_space<vmem>>, %arg4: memref<1x384xf32, #tpu.memory_space<vmem>>, %arg5: memref<3x3x128x128xbf16, #tpu.memory_space<vmem>>, %arg6: memref<1x128xf32, #tpu.memory_space<vmem>>, %arg7: memref<3x3x128x128xbf16, #tpu.memory_space<vmem>>, %arg8: memref<1x128xf32, #tpu.memory_space<vmem>>, %arg9: memref<3x3x128x128xbf16, #tpu.memory_space<vmem>>, %arg10: memref<1x128xf32, #tpu.memory_space<vmem>>, %arg11: memref<128x128xbf16, #tpu.memory_space<vmem>>, %arg12: memref<128x128xbf16, #tpu.memory_space<vmem>>, %arg13: memref<128x128xbf16, #tpu.memory_space<vmem>>, %arg14: memref<1x128xf32, #tpu.memory_space<vmem>>, %arg15: memref<1x64x128xf32, #tpu.memory_space<vmem>>) attributes {dimension_semantics = [#tpu.dimension_semantics<parallel>], iteration_bounds = array<i64: 2>, scalar_prefetch = 0 : i64, scratch_operands = 0 : i64, tpu.core_type = #tpu.core_type<tc>, window_params = [{transform_indices = @transform_0, window_bounds = array<i64: 1, 2, 2, 64, 128>}, {pipeline_mode = #tpu.pipeline_mode<synchronous>, transform_indices = @transform_1, window_bounds = array<i64: 9, 64, 1>}, {pipeline_mode = #tpu.pipeline_mode<synchronous>, transform_indices = @transform_2, window_bounds = array<i64: 128, 384>}, {pipeline_mode = #tpu.pipeline_mode<synchronous>, transform_indices = @transform_3, window_bounds = array<i64: 1, 384>}, {pipeline_mode = #tpu.pipeline_mode<synchronous>, transform_indices = @transform_4, window_bounds = array<i64: 3, 3, 128, 128>}, {pipeline_mode = #tpu.pipeline_mode<synchronous>, transform_indices = @transform_5, window_bounds = array<i64: 1, 128>}, {pipeline_mode = #tpu.pipeline_mode<synchronous>, transform_indices = @transform_6, window_bounds = array<i64: 3, 3, 128, 128>}, {pipeline_mode = #tpu.pipeline_mode<synchronous>, transform_indices = @transform_7, window_bounds = array<i64: 1, 128>}, {pipeline_mode = #tpu.pipeline_mode<synchronous>, transform_indices = @transform_8, window_bounds = array<i64: 3, 3, 128, 128>}, {pipeline_mode = #tpu.pipeline_mode<synchronous>, transform_indices = @transform_9, window_bounds = array<i64: 1, 128>}, {pipeline_mode = #tpu.pipeline_mode<synchronous>, transform_indices = @transform_10, window_bounds = array<i64: 128, 128>}, {pipeline_mode = #tpu.pipeline_mode<synchronous>, transform_indices = @transform_11, window_bounds = array<i64: 128, 128>}, {pipeline_mode = #tpu.pipeline_mode<synchronous>, transform_indices = @transform_12, window_bounds = array<i64: 128, 128>}, {pipeline_mode = #tpu.pipeline_mode<synchronous>, transform_indices = @transform_13, window_bounds = array<i64: 1, 128>}, {transform_indices = @transform_14, window_bounds = array<i64: 1, 64, 128>}]} {
    %c0 = arith.constant 0 : index
    %c0_0 = arith.constant 0 : index
    %c0_1 = arith.constant 0 : index
    %c0_2 = arith.constant 0 : index
    %c0_3 = arith.constant 0 : index
    %0 = vector.load %arg1[%c0, %c0_0, %c0_1, %c0_2, %c0_3] : memref<1x2x2x64x128xbf16, #tpu.memory_space<vmem>>, vector<1x2x2x64x128xbf16>
    %1 = vector.extract_strided_slice %0 {offsets = [0, 0, 0, 0, 0], sizes = [1, 1, 1, 64, 128], strides = [1, 1, 1, 1, 1]} : vector<1x2x2x64x128xbf16> to vector<1x1x1x64x128xbf16>
    %2 = vector.shape_cast %1 : vector<1x1x1x64x128xbf16> to vector<64x128xbf16>
    %3 = vector.extract_strided_slice %0 {offsets = [0, 0, 1, 0, 0], sizes = [1, 1, 1, 64, 128], strides = [1, 1, 1, 1, 1]} : vector<1x2x2x64x128xbf16> to vector<1x1x1x64x128xbf16>
    %4 = vector.shape_cast %3 : vector<1x1x1x64x128xbf16> to vector<64x128xbf16>
    %5 = arith.maximumf %2, %4 : vector<64x128xbf16>
    %6 = vector.extract_strided_slice %0 {offsets = [0, 1, 0, 0, 0], sizes = [1, 1, 1, 64, 128], strides = [1, 1, 1, 1, 1]} : vector<1x2x2x64x128xbf16> to vector<1x1x1x64x128xbf16>
    %7 = vector.shape_cast %6 : vector<1x1x1x64x128xbf16> to vector<64x128xbf16>
    %8 = vector.extract_strided_slice %0 {offsets = [0, 1, 1, 0, 0], sizes = [1, 1, 1, 64, 128], strides = [1, 1, 1, 1, 1]} : vector<1x2x2x64x128xbf16> to vector<1x1x1x64x128xbf16>
    %9 = vector.shape_cast %8 : vector<1x1x1x64x128xbf16> to vector<64x128xbf16>
    %10 = arith.maximumf %7, %9 : vector<64x128xbf16>
    %11 = arith.maximumf %5, %10 : vector<64x128xbf16>
    %c0_4 = arith.constant 0 : index
    %c0_5 = arith.constant 0 : index
    %12 = vector.load %arg3[%c0_4, %c0_5] : memref<128x384xbf16, #tpu.memory_space<vmem>>, vector<128x384xbf16>
    %cst = arith.constant dense<0.000000e+00> : vector<64x384xf32>
    %13 = tpu.matmul %11, %12, %cst {dimension_numbers = #tpu.dot_dimension_numbers<[1], [0], [0], [1], [0, 0, 1, 1], [], []>} : vector<64x128xbf16>, vector<128x384xbf16>, vector<64x384xf32> -> vector<64x384xf32>
    %c0_6 = arith.constant 0 : index
    %c0_7 = arith.constant 0 : index
    %14 = vector.load %arg4[%c0_6, %c0_7] : memref<1x384xf32, #tpu.memory_space<vmem>>, vector<1x384xf32>
    %15 = vector.broadcast %14 : vector<1x384xf32> to vector<64x384xf32>
    %16 = arith.addf %13, %15 : vector<64x384xf32>
    %cst_8 = arith.constant 0.000000e+00 : f32
    %17 = vector.broadcast %cst_8 : f32 to vector<64x384xf32>
    %18 = arith.maximumf %16, %17 : vector<64x384xf32>
    %19 = vector.extract_strided_slice %18 {offsets = [0, 0], sizes = [64, 128], strides = [1, 1]} : vector<64x384xf32> to vector<64x128xf32>
    %20 = vector.extract_strided_slice %18 {offsets = [0, 128], sizes = [64, 128], strides = [1, 1]} : vector<64x384xf32> to vector<64x128xf32>
    %21 = vector.extract_strided_slice %18 {offsets = [0, 256], sizes = [64, 128], strides = [1, 1]} : vector<64x384xf32> to vector<64x128xf32>
    %cst_9 = arith.constant 0.000000e+00 : f32
    %22 = vector.broadcast %cst_9 : f32 to vector<64x128xf32>
    %23 = vector.extract_strided_slice %20 {offsets = [55, 0], sizes = [9, 128], strides = [1, 1]} : vector<64x128xf32> to vector<9x128xf32>
    %24 = vector.extract_strided_slice %20 {offsets = [0, 0], sizes = [55, 128], strides = [1, 1]} : vector<64x128xf32> to vector<55x128xf32>
    %25 = tpu.concatenate %23, %24 in 0 : vector<9x128xf32>, vector<55x128xf32> -> vector<64x128xf32>
    %c0_10 = arith.constant 0 : index
    %c0_11 = arith.constant 0 : index
    %c0_12 = arith.constant 0 : index
    %26 = vector.load %arg2[%c0_10, %c0_11, %c0_12] : memref<9x64x1xf32, #tpu.memory_space<vmem>>, vector<1x64x1xf32>
    %27 = vector.shape_cast %26 : vector<1x64x1xf32> to vector<64x1xf32>
    %28 = vector.broadcast %27 : vector<64x1xf32> to vector<64x128xf32>
    %29 = arith.mulf %25, %28 : vector<64x128xf32>
    %30 = arith.truncf %29 : vector<64x128xf32> to vector<64x128xbf16>
    %c0_13 = arith.constant 0 : index
    %c0_14 = arith.constant 0 : index
    %c0_15 = arith.constant 0 : index
    %c0_16 = arith.constant 0 : index
    %31 = vector.load %arg5[%c0_13, %c0_14, %c0_15, %c0_16] : memref<3x3x128x128xbf16, #tpu.memory_space<vmem>>, vector<1x1x128x128xbf16>
    %32 = vector.shape_cast %31 : vector<1x1x128x128xbf16> to vector<128x128xbf16>
    %cst_17 = arith.constant dense<0.000000e+00> : vector<64x128xf32>
    %33 = tpu.matmul %30, %32, %cst_17 {dimension_numbers = #tpu.dot_dimension_numbers<[1], [0], [0], [1], [0, 0, 1, 1], [], []>} : vector<64x128xbf16>, vector<128x128xbf16>, vector<64x128xf32> -> vector<64x128xf32>
    %34 = arith.addf %22, %33 : vector<64x128xf32>
    %35 = vector.extract_strided_slice %20 {offsets = [56, 0], sizes = [8, 128], strides = [1, 1]} : vector<64x128xf32> to vector<8x128xf32>
    %36 = vector.extract_strided_slice %20 {offsets = [0, 0], sizes = [56, 128], strides = [1, 1]} : vector<64x128xf32> to vector<56x128xf32>
    %37 = tpu.concatenate %35, %36 in 0 : vector<8x128xf32>, vector<56x128xf32> -> vector<64x128xf32>
    %c1 = arith.constant 1 : index
    %c0_18 = arith.constant 0 : index
    %c0_19 = arith.constant 0 : index
    %38 = vector.load %arg2[%c1, %c0_18, %c0_19] : memref<9x64x1xf32, #tpu.memory_space<vmem>>, vector<1x64x1xf32>
    %39 = vector.shape_cast %38 : vector<1x64x1xf32> to vector<64x1xf32>
    %40 = vector.broadcast %39 : vector<64x1xf32> to vector<64x128xf32>
    %41 = arith.mulf %37, %40 : vector<64x128xf32>
    %42 = arith.truncf %41 : vector<64x128xf32> to vector<64x128xbf16>
    %c0_20 = arith.constant 0 : index
    %c1_21 = arith.constant 1 : index
    %c0_22 = arith.constant 0 : index
    %c0_23 = arith.constant 0 : index
    %43 = vector.load %arg5[%c0_20, %c1_21, %c0_22, %c0_23] : memref<3x3x128x128xbf16, #tpu.memory_space<vmem>>, vector<1x1x128x128xbf16>
    %44 = vector.shape_cast %43 : vector<1x1x128x128xbf16> to vector<128x128xbf16>
    %cst_24 = arith.constant dense<0.000000e+00> : vector<64x128xf32>
    %45 = tpu.matmul %42, %44, %cst_24 {dimension_numbers = #tpu.dot_dimension_numbers<[1], [0], [0], [1], [0, 0, 1, 1], [], []>} : vector<64x128xbf16>, vector<128x128xbf16>, vector<64x128xf32> -> vector<64x128xf32>
    %46 = arith.addf %34, %45 : vector<64x128xf32>
    %47 = vector.extract_strided_slice %20 {offsets = [57, 0], sizes = [7, 128], strides = [1, 1]} : vector<64x128xf32> to vector<7x128xf32>
    %48 = vector.extract_strided_slice %20 {offsets = [0, 0], sizes = [57, 128], strides = [1, 1]} : vector<64x128xf32> to vector<57x128xf32>
    %49 = tpu.concatenate %47, %48 in 0 : vector<7x128xf32>, vector<57x128xf32> -> vector<64x128xf32>
    %c2 = arith.constant 2 : index
    %c0_25 = arith.constant 0 : index
    %c0_26 = arith.constant 0 : index
    %50 = vector.load %arg2[%c2, %c0_25, %c0_26] : memref<9x64x1xf32, #tpu.memory_space<vmem>>, vector<1x64x1xf32>
    %51 = vector.shape_cast %50 : vector<1x64x1xf32> to vector<64x1xf32>
    %52 = vector.broadcast %51 : vector<64x1xf32> to vector<64x128xf32>
    %53 = arith.mulf %49, %52 : vector<64x128xf32>
    %54 = arith.truncf %53 : vector<64x128xf32> to vector<64x128xbf16>
    %c0_27 = arith.constant 0 : index
    %c2_28 = arith.constant 2 : index
    %c0_29 = arith.constant 0 : index
    %c0_30 = arith.constant 0 : index
    %55 = vector.load %arg5[%c0_27, %c2_28, %c0_29, %c0_30] : memref<3x3x128x128xbf16, #tpu.memory_space<vmem>>, vector<1x1x128x128xbf16>
    %56 = vector.shape_cast %55 : vector<1x1x128x128xbf16> to vector<128x128xbf16>
    %cst_31 = arith.constant dense<0.000000e+00> : vector<64x128xf32>
    %57 = tpu.matmul %54, %56, %cst_31 {dimension_numbers = #tpu.dot_dimension_numbers<[1], [0], [0], [1], [0, 0, 1, 1], [], []>} : vector<64x128xbf16>, vector<128x128xbf16>, vector<64x128xf32> -> vector<64x128xf32>
    %58 = arith.addf %46, %57 : vector<64x128xf32>
    %59 = vector.extract_strided_slice %20 {offsets = [63, 0], sizes = [1, 128], strides = [1, 1]} : vector<64x128xf32> to vector<1x128xf32>
    %60 = vector.extract_strided_slice %20 {offsets = [0, 0], sizes = [63, 128], strides = [1, 1]} : vector<64x128xf32> to vector<63x128xf32>
    %61 = tpu.concatenate %59, %60 in 0 : vector<1x128xf32>, vector<63x128xf32> -> vector<64x128xf32>
    %c3 = arith.constant 3 : index
    %c0_32 = arith.constant 0 : index
    %c0_33 = arith.constant 0 : index
    %62 = vector.load %arg2[%c3, %c0_32, %c0_33] : memref<9x64x1xf32, #tpu.memory_space<vmem>>, vector<1x64x1xf32>
    %63 = vector.shape_cast %62 : vector<1x64x1xf32> to vector<64x1xf32>
    %64 = vector.broadcast %63 : vector<64x1xf32> to vector<64x128xf32>
    %65 = arith.mulf %61, %64 : vector<64x128xf32>
    %66 = arith.truncf %65 : vector<64x128xf32> to vector<64x128xbf16>
    %c1_34 = arith.constant 1 : index
    %c0_35 = arith.constant 0 : index
    %c0_36 = arith.constant 0 : index
    %c0_37 = arith.constant 0 : index
    %67 = vector.load %arg5[%c1_34, %c0_35, %c0_36, %c0_37] : memref<3x3x128x128xbf16, #tpu.memory_space<vmem>>, vector<1x1x128x128xbf16>
    %68 = vector.shape_cast %67 : vector<1x1x128x128xbf16> to vector<128x128xbf16>
    %cst_38 = arith.constant dense<0.000000e+00> : vector<64x128xf32>
    %69 = tpu.matmul %66, %68, %cst_38 {dimension_numbers = #tpu.dot_dimension_numbers<[1], [0], [0], [1], [0, 0, 1, 1], [], []>} : vector<64x128xbf16>, vector<128x128xbf16>, vector<64x128xf32> -> vector<64x128xf32>
    %70 = arith.addf %58, %69 : vector<64x128xf32>
    %71 = arith.truncf %20 : vector<64x128xf32> to vector<64x128xbf16>
    %c1_39 = arith.constant 1 : index
    %c1_40 = arith.constant 1 : index
    %c0_41 = arith.constant 0 : index
    %c0_42 = arith.constant 0 : index
    %72 = vector.load %arg5[%c1_39, %c1_40, %c0_41, %c0_42] : memref<3x3x128x128xbf16, #tpu.memory_space<vmem>>, vector<1x1x128x128xbf16>
    %73 = vector.shape_cast %72 : vector<1x1x128x128xbf16> to vector<128x128xbf16>
    %cst_43 = arith.constant dense<0.000000e+00> : vector<64x128xf32>
    %74 = tpu.matmul %71, %73, %cst_43 {dimension_numbers = #tpu.dot_dimension_numbers<[1], [0], [0], [1], [0, 0, 1, 1], [], []>} : vector<64x128xbf16>, vector<128x128xbf16>, vector<64x128xf32> -> vector<64x128xf32>
    %75 = arith.addf %70, %74 : vector<64x128xf32>
    %76 = vector.extract_strided_slice %20 {offsets = [1, 0], sizes = [63, 128], strides = [1, 1]} : vector<64x128xf32> to vector<63x128xf32>
    %77 = vector.extract_strided_slice %20 {offsets = [0, 0], sizes = [1, 128], strides = [1, 1]} : vector<64x128xf32> to vector<1x128xf32>
    %78 = tpu.concatenate %76, %77 in 0 : vector<63x128xf32>, vector<1x128xf32> -> vector<64x128xf32>
    %c5 = arith.constant 5 : index
    %c0_44 = arith.constant 0 : index
    %c0_45 = arith.constant 0 : index
    %79 = vector.load %arg2[%c5, %c0_44, %c0_45] : memref<9x64x1xf32, #tpu.memory_space<vmem>>, vector<1x64x1xf32>
    %80 = vector.shape_cast %79 : vector<1x64x1xf32> to vector<64x1xf32>
    %81 = vector.broadcast %80 : vector<64x1xf32> to vector<64x128xf32>
    %82 = arith.mulf %78, %81 : vector<64x128xf32>
    %83 = arith.truncf %82 : vector<64x128xf32> to vector<64x128xbf16>
    %c1_46 = arith.constant 1 : index
    %c2_47 = arith.constant 2 : index
    %c0_48 = arith.constant 0 : index
    %c0_49 = arith.constant 0 : index
    %84 = vector.load %arg5[%c1_46, %c2_47, %c0_48, %c0_49] : memref<3x3x128x128xbf16, #tpu.memory_space<vmem>>, vector<1x1x128x128xbf16>
    %85 = vector.shape_cast %84 : vector<1x1x128x128xbf16> to vector<128x128xbf16>
    %cst_50 = arith.constant dense<0.000000e+00> : vector<64x128xf32>
    %86 = tpu.matmul %83, %85, %cst_50 {dimension_numbers = #tpu.dot_dimension_numbers<[1], [0], [0], [1], [0, 0, 1, 1], [], []>} : vector<64x128xbf16>, vector<128x128xbf16>, vector<64x128xf32> -> vector<64x128xf32>
    %87 = arith.addf %75, %86 : vector<64x128xf32>
    %88 = vector.extract_strided_slice %20 {offsets = [7, 0], sizes = [57, 128], strides = [1, 1]} : vector<64x128xf32> to vector<57x128xf32>
    %89 = vector.extract_strided_slice %20 {offsets = [0, 0], sizes = [7, 128], strides = [1, 1]} : vector<64x128xf32> to vector<7x128xf32>
    %90 = tpu.concatenate %88, %89 in 0 : vector<57x128xf32>, vector<7x128xf32> -> vector<64x128xf32>
    %c6 = arith.constant 6 : index
    %c0_51 = arith.constant 0 : index
    %c0_52 = arith.constant 0 : index
    %91 = vector.load %arg2[%c6, %c0_51, %c0_52] : memref<9x64x1xf32, #tpu.memory_space<vmem>>, vector<1x64x1xf32>
    %92 = vector.shape_cast %91 : vector<1x64x1xf32> to vector<64x1xf32>
    %93 = vector.broadcast %92 : vector<64x1xf32> to vector<64x128xf32>
    %94 = arith.mulf %90, %93 : vector<64x128xf32>
    %95 = arith.truncf %94 : vector<64x128xf32> to vector<64x128xbf16>
    %c2_53 = arith.constant 2 : index
    %c0_54 = arith.constant 0 : index
    %c0_55 = arith.constant 0 : index
    %c0_56 = arith.constant 0 : index
    %96 = vector.load %arg5[%c2_53, %c0_54, %c0_55, %c0_56] : memref<3x3x128x128xbf16, #tpu.memory_space<vmem>>, vector<1x1x128x128xbf16>
    %97 = vector.shape_cast %96 : vector<1x1x128x128xbf16> to vector<128x128xbf16>
    %cst_57 = arith.constant dense<0.000000e+00> : vector<64x128xf32>
    %98 = tpu.matmul %95, %97, %cst_57 {dimension_numbers = #tpu.dot_dimension_numbers<[1], [0], [0], [1], [0, 0, 1, 1], [], []>} : vector<64x128xbf16>, vector<128x128xbf16>, vector<64x128xf32> -> vector<64x128xf32>
    %99 = arith.addf %87, %98 : vector<64x128xf32>
    %100 = vector.extract_strided_slice %20 {offsets = [8, 0], sizes = [56, 128], strides = [1, 1]} : vector<64x128xf32> to vector<56x128xf32>
    %101 = vector.extract_strided_slice %20 {offsets = [0, 0], sizes = [8, 128], strides = [1, 1]} : vector<64x128xf32> to vector<8x128xf32>
    %102 = tpu.concatenate %100, %101 in 0 : vector<56x128xf32>, vector<8x128xf32> -> vector<64x128xf32>
    %c7 = arith.constant 7 : index
    %c0_58 = arith.constant 0 : index
    %c0_59 = arith.constant 0 : index
    %103 = vector.load %arg2[%c7, %c0_58, %c0_59] : memref<9x64x1xf32, #tpu.memory_space<vmem>>, vector<1x64x1xf32>
    %104 = vector.shape_cast %103 : vector<1x64x1xf32> to vector<64x1xf32>
    %105 = vector.broadcast %104 : vector<64x1xf32> to vector<64x128xf32>
    %106 = arith.mulf %102, %105 : vector<64x128xf32>
    %107 = arith.truncf %106 : vector<64x128xf32> to vector<64x128xbf16>
    %c2_60 = arith.constant 2 : index
    %c1_61 = arith.constant 1 : index
    %c0_62 = arith.constant 0 : index
    %c0_63 = arith.constant 0 : index
    %108 = vector.load %arg5[%c2_60, %c1_61, %c0_62, %c0_63] : memref<3x3x128x128xbf16, #tpu.memory_space<vmem>>, vector<1x1x128x128xbf16>
    %109 = vector.shape_cast %108 : vector<1x1x128x128xbf16> to vector<128x128xbf16>
    %cst_64 = arith.constant dense<0.000000e+00> : vector<64x128xf32>
    %110 = tpu.matmul %107, %109, %cst_64 {dimension_numbers = #tpu.dot_dimension_numbers<[1], [0], [0], [1], [0, 0, 1, 1], [], []>} : vector<64x128xbf16>, vector<128x128xbf16>, vector<64x128xf32> -> vector<64x128xf32>
    %111 = arith.addf %99, %110 : vector<64x128xf32>
    %112 = vector.extract_strided_slice %20 {offsets = [9, 0], sizes = [55, 128], strides = [1, 1]} : vector<64x128xf32> to vector<55x128xf32>
    %113 = vector.extract_strided_slice %20 {offsets = [0, 0], sizes = [9, 128], strides = [1, 1]} : vector<64x128xf32> to vector<9x128xf32>
    %114 = tpu.concatenate %112, %113 in 0 : vector<55x128xf32>, vector<9x128xf32> -> vector<64x128xf32>
    %c8 = arith.constant 8 : index
    %c0_65 = arith.constant 0 : index
    %c0_66 = arith.constant 0 : index
    %115 = vector.load %arg2[%c8, %c0_65, %c0_66] : memref<9x64x1xf32, #tpu.memory_space<vmem>>, vector<1x64x1xf32>
    %116 = vector.shape_cast %115 : vector<1x64x1xf32> to vector<64x1xf32>
    %117 = vector.broadcast %116 : vector<64x1xf32> to vector<64x128xf32>
    %118 = arith.mulf %114, %117 : vector<64x128xf32>
    %119 = arith.truncf %118 : vector<64x128xf32> to vector<64x128xbf16>
    %c2_67 = arith.constant 2 : index
    %c2_68 = arith.constant 2 : index
    %c0_69 = arith.constant 0 : index
    %c0_70 = arith.constant 0 : index
    %120 = vector.load %arg5[%c2_67, %c2_68, %c0_69, %c0_70] : memref<3x3x128x128xbf16, #tpu.memory_space<vmem>>, vector<1x1x128x128xbf16>
    %121 = vector.shape_cast %120 : vector<1x1x128x128xbf16> to vector<128x128xbf16>
    %cst_71 = arith.constant dense<0.000000e+00> : vector<64x128xf32>
    %122 = tpu.matmul %119, %121, %cst_71 {dimension_numbers = #tpu.dot_dimension_numbers<[1], [0], [0], [1], [0, 0, 1, 1], [], []>} : vector<64x128xbf16>, vector<128x128xbf16>, vector<64x128xf32> -> vector<64x128xf32>
    %123 = arith.addf %111, %122 : vector<64x128xf32>
    %c0_72 = arith.constant 0 : index
    %c0_73 = arith.constant 0 : index
    %124 = vector.load %arg6[%c0_72, %c0_73] : memref<1x128xf32, #tpu.memory_space<vmem>>, vector<1x128xf32>
    %125 = vector.broadcast %124 : vector<1x128xf32> to vector<64x128xf32>
    %126 = arith.addf %123, %125 : vector<64x128xf32>
    %cst_74 = arith.constant 0.000000e+00 : f32
    %127 = vector.broadcast %cst_74 : f32 to vector<64x128xf32>
    %128 = arith.maximumf %126, %127 : vector<64x128xf32>
    %cst_75 = arith.constant 0.000000e+00 : f32
    %129 = vector.broadcast %cst_75 : f32 to vector<64x128xf32>
    %130 = vector.extract_strided_slice %21 {offsets = [55, 0], sizes = [9, 128], strides = [1, 1]} : vector<64x128xf32> to vector<9x128xf32>
    %131 = vector.extract_strided_slice %21 {offsets = [0, 0], sizes = [55, 128], strides = [1, 1]} : vector<64x128xf32> to vector<55x128xf32>
    %132 = tpu.concatenate %130, %131 in 0 : vector<9x128xf32>, vector<55x128xf32> -> vector<64x128xf32>
    %c0_76 = arith.constant 0 : index
    %c0_77 = arith.constant 0 : index
    %c0_78 = arith.constant 0 : index
    %133 = vector.load %arg2[%c0_76, %c0_77, %c0_78] : memref<9x64x1xf32, #tpu.memory_space<vmem>>, vector<1x64x1xf32>
    %134 = vector.shape_cast %133 : vector<1x64x1xf32> to vector<64x1xf32>
    %135 = vector.broadcast %134 : vector<64x1xf32> to vector<64x128xf32>
    %136 = arith.mulf %132, %135 : vector<64x128xf32>
    %137 = arith.truncf %136 : vector<64x128xf32> to vector<64x128xbf16>
    %c0_79 = arith.constant 0 : index
    %c0_80 = arith.constant 0 : index
    %c0_81 = arith.constant 0 : index
    %c0_82 = arith.constant 0 : index
    %138 = vector.load %arg7[%c0_79, %c0_80, %c0_81, %c0_82] : memref<3x3x128x128xbf16, #tpu.memory_space<vmem>>, vector<1x1x128x128xbf16>
    %139 = vector.shape_cast %138 : vector<1x1x128x128xbf16> to vector<128x128xbf16>
    %cst_83 = arith.constant dense<0.000000e+00> : vector<64x128xf32>
    %140 = tpu.matmul %137, %139, %cst_83 {dimension_numbers = #tpu.dot_dimension_numbers<[1], [0], [0], [1], [0, 0, 1, 1], [], []>} : vector<64x128xbf16>, vector<128x128xbf16>, vector<64x128xf32> -> vector<64x128xf32>
    %141 = arith.addf %129, %140 : vector<64x128xf32>
    %142 = vector.extract_strided_slice %21 {offsets = [56, 0], sizes = [8, 128], strides = [1, 1]} : vector<64x128xf32> to vector<8x128xf32>
    %143 = vector.extract_strided_slice %21 {offsets = [0, 0], sizes = [56, 128], strides = [1, 1]} : vector<64x128xf32> to vector<56x128xf32>
    %144 = tpu.concatenate %142, %143 in 0 : vector<8x128xf32>, vector<56x128xf32> -> vector<64x128xf32>
    %c1_84 = arith.constant 1 : index
    %c0_85 = arith.constant 0 : index
    %c0_86 = arith.constant 0 : index
    %145 = vector.load %arg2[%c1_84, %c0_85, %c0_86] : memref<9x64x1xf32, #tpu.memory_space<vmem>>, vector<1x64x1xf32>
    %146 = vector.shape_cast %145 : vector<1x64x1xf32> to vector<64x1xf32>
    %147 = vector.broadcast %146 : vector<64x1xf32> to vector<64x128xf32>
    %148 = arith.mulf %144, %147 : vector<64x128xf32>
    %149 = arith.truncf %148 : vector<64x128xf32> to vector<64x128xbf16>
    %c0_87 = arith.constant 0 : index
    %c1_88 = arith.constant 1 : index
    %c0_89 = arith.constant 0 : index
    %c0_90 = arith.constant 0 : index
    %150 = vector.load %arg7[%c0_87, %c1_88, %c0_89, %c0_90] : memref<3x3x128x128xbf16, #tpu.memory_space<vmem>>, vector<1x1x128x128xbf16>
    %151 = vector.shape_cast %150 : vector<1x1x128x128xbf16> to vector<128x128xbf16>
    %cst_91 = arith.constant dense<0.000000e+00> : vector<64x128xf32>
    %152 = tpu.matmul %149, %151, %cst_91 {dimension_numbers = #tpu.dot_dimension_numbers<[1], [0], [0], [1], [0, 0, 1, 1], [], []>} : vector<64x128xbf16>, vector<128x128xbf16>, vector<64x128xf32> -> vector<64x128xf32>
    %153 = arith.addf %141, %152 : vector<64x128xf32>
    %154 = vector.extract_strided_slice %21 {offsets = [57, 0], sizes = [7, 128], strides = [1, 1]} : vector<64x128xf32> to vector<7x128xf32>
    %155 = vector.extract_strided_slice %21 {offsets = [0, 0], sizes = [57, 128], strides = [1, 1]} : vector<64x128xf32> to vector<57x128xf32>
    %156 = tpu.concatenate %154, %155 in 0 : vector<7x128xf32>, vector<57x128xf32> -> vector<64x128xf32>
    %c2_92 = arith.constant 2 : index
    %c0_93 = arith.constant 0 : index
    %c0_94 = arith.constant 0 : index
    %157 = vector.load %arg2[%c2_92, %c0_93, %c0_94] : memref<9x64x1xf32, #tpu.memory_space<vmem>>, vector<1x64x1xf32>
    %158 = vector.shape_cast %157 : vector<1x64x1xf32> to vector<64x1xf32>
    %159 = vector.broadcast %158 : vector<64x1xf32> to vector<64x128xf32>
    %160 = arith.mulf %156, %159 : vector<64x128xf32>
    %161 = arith.truncf %160 : vector<64x128xf32> to vector<64x128xbf16>
    %c0_95 = arith.constant 0 : index
    %c2_96 = arith.constant 2 : index
    %c0_97 = arith.constant 0 : index
    %c0_98 = arith.constant 0 : index
    %162 = vector.load %arg7[%c0_95, %c2_96, %c0_97, %c0_98] : memref<3x3x128x128xbf16, #tpu.memory_space<vmem>>, vector<1x1x128x128xbf16>
    %163 = vector.shape_cast %162 : vector<1x1x128x128xbf16> to vector<128x128xbf16>
    %cst_99 = arith.constant dense<0.000000e+00> : vector<64x128xf32>
    %164 = tpu.matmul %161, %163, %cst_99 {dimension_numbers = #tpu.dot_dimension_numbers<[1], [0], [0], [1], [0, 0, 1, 1], [], []>} : vector<64x128xbf16>, vector<128x128xbf16>, vector<64x128xf32> -> vector<64x128xf32>
    %165 = arith.addf %153, %164 : vector<64x128xf32>
    %166 = vector.extract_strided_slice %21 {offsets = [63, 0], sizes = [1, 128], strides = [1, 1]} : vector<64x128xf32> to vector<1x128xf32>
    %167 = vector.extract_strided_slice %21 {offsets = [0, 0], sizes = [63, 128], strides = [1, 1]} : vector<64x128xf32> to vector<63x128xf32>
    %168 = tpu.concatenate %166, %167 in 0 : vector<1x128xf32>, vector<63x128xf32> -> vector<64x128xf32>
    %c3_100 = arith.constant 3 : index
    %c0_101 = arith.constant 0 : index
    %c0_102 = arith.constant 0 : index
    %169 = vector.load %arg2[%c3_100, %c0_101, %c0_102] : memref<9x64x1xf32, #tpu.memory_space<vmem>>, vector<1x64x1xf32>
    %170 = vector.shape_cast %169 : vector<1x64x1xf32> to vector<64x1xf32>
    %171 = vector.broadcast %170 : vector<64x1xf32> to vector<64x128xf32>
    %172 = arith.mulf %168, %171 : vector<64x128xf32>
    %173 = arith.truncf %172 : vector<64x128xf32> to vector<64x128xbf16>
    %c1_103 = arith.constant 1 : index
    %c0_104 = arith.constant 0 : index
    %c0_105 = arith.constant 0 : index
    %c0_106 = arith.constant 0 : index
    %174 = vector.load %arg7[%c1_103, %c0_104, %c0_105, %c0_106] : memref<3x3x128x128xbf16, #tpu.memory_space<vmem>>, vector<1x1x128x128xbf16>
    %175 = vector.shape_cast %174 : vector<1x1x128x128xbf16> to vector<128x128xbf16>
    %cst_107 = arith.constant dense<0.000000e+00> : vector<64x128xf32>
    %176 = tpu.matmul %173, %175, %cst_107 {dimension_numbers = #tpu.dot_dimension_numbers<[1], [0], [0], [1], [0, 0, 1, 1], [], []>} : vector<64x128xbf16>, vector<128x128xbf16>, vector<64x128xf32> -> vector<64x128xf32>
    %177 = arith.addf %165, %176 : vector<64x128xf32>
    %178 = arith.truncf %21 : vector<64x128xf32> to vector<64x128xbf16>
    %c1_108 = arith.constant 1 : index
    %c1_109 = arith.constant 1 : index
    %c0_110 = arith.constant 0 : index
    %c0_111 = arith.constant 0 : index
    %179 = vector.load %arg7[%c1_108, %c1_109, %c0_110, %c0_111] : memref<3x3x128x128xbf16, #tpu.memory_space<vmem>>, vector<1x1x128x128xbf16>
    %180 = vector.shape_cast %179 : vector<1x1x128x128xbf16> to vector<128x128xbf16>
    %cst_112 = arith.constant dense<0.000000e+00> : vector<64x128xf32>
    %181 = tpu.matmul %178, %180, %cst_112 {dimension_numbers = #tpu.dot_dimension_numbers<[1], [0], [0], [1], [0, 0, 1, 1], [], []>} : vector<64x128xbf16>, vector<128x128xbf16>, vector<64x128xf32> -> vector<64x128xf32>
    %182 = arith.addf %177, %181 : vector<64x128xf32>
    %183 = vector.extract_strided_slice %21 {offsets = [1, 0], sizes = [63, 128], strides = [1, 1]} : vector<64x128xf32> to vector<63x128xf32>
    %184 = vector.extract_strided_slice %21 {offsets = [0, 0], sizes = [1, 128], strides = [1, 1]} : vector<64x128xf32> to vector<1x128xf32>
    %185 = tpu.concatenate %183, %184 in 0 : vector<63x128xf32>, vector<1x128xf32> -> vector<64x128xf32>
    %c5_113 = arith.constant 5 : index
    %c0_114 = arith.constant 0 : index
    %c0_115 = arith.constant 0 : index
    %186 = vector.load %arg2[%c5_113, %c0_114, %c0_115] : memref<9x64x1xf32, #tpu.memory_space<vmem>>, vector<1x64x1xf32>
    %187 = vector.shape_cast %186 : vector<1x64x1xf32> to vector<64x1xf32>
    %188 = vector.broadcast %187 : vector<64x1xf32> to vector<64x128xf32>
    %189 = arith.mulf %185, %188 : vector<64x128xf32>
    %190 = arith.truncf %189 : vector<64x128xf32> to vector<64x128xbf16>
    %c1_116 = arith.constant 1 : index
    %c2_117 = arith.constant 2 : index
    %c0_118 = arith.constant 0 : index
    %c0_119 = arith.constant 0 : index
    %191 = vector.load %arg7[%c1_116, %c2_117, %c0_118, %c0_119] : memref<3x3x128x128xbf16, #tpu.memory_space<vmem>>, vector<1x1x128x128xbf16>
    %192 = vector.shape_cast %191 : vector<1x1x128x128xbf16> to vector<128x128xbf16>
    %cst_120 = arith.constant dense<0.000000e+00> : vector<64x128xf32>
    %193 = tpu.matmul %190, %192, %cst_120 {dimension_numbers = #tpu.dot_dimension_numbers<[1], [0], [0], [1], [0, 0, 1, 1], [], []>} : vector<64x128xbf16>, vector<128x128xbf16>, vector<64x128xf32> -> vector<64x128xf32>
    %194 = arith.addf %182, %193 : vector<64x128xf32>
    %195 = vector.extract_strided_slice %21 {offsets = [7, 0], sizes = [57, 128], strides = [1, 1]} : vector<64x128xf32> to vector<57x128xf32>
    %196 = vector.extract_strided_slice %21 {offsets = [0, 0], sizes = [7, 128], strides = [1, 1]} : vector<64x128xf32> to vector<7x128xf32>
    %197 = tpu.concatenate %195, %196 in 0 : vector<57x128xf32>, vector<7x128xf32> -> vector<64x128xf32>
    %c6_121 = arith.constant 6 : index
    %c0_122 = arith.constant 0 : index
    %c0_123 = arith.constant 0 : index
    %198 = vector.load %arg2[%c6_121, %c0_122, %c0_123] : memref<9x64x1xf32, #tpu.memory_space<vmem>>, vector<1x64x1xf32>
    %199 = vector.shape_cast %198 : vector<1x64x1xf32> to vector<64x1xf32>
    %200 = vector.broadcast %199 : vector<64x1xf32> to vector<64x128xf32>
    %201 = arith.mulf %197, %200 : vector<64x128xf32>
    %202 = arith.truncf %201 : vector<64x128xf32> to vector<64x128xbf16>
    %c2_124 = arith.constant 2 : index
    %c0_125 = arith.constant 0 : index
    %c0_126 = arith.constant 0 : index
    %c0_127 = arith.constant 0 : index
    %203 = vector.load %arg7[%c2_124, %c0_125, %c0_126, %c0_127] : memref<3x3x128x128xbf16, #tpu.memory_space<vmem>>, vector<1x1x128x128xbf16>
    %204 = vector.shape_cast %203 : vector<1x1x128x128xbf16> to vector<128x128xbf16>
    %cst_128 = arith.constant dense<0.000000e+00> : vector<64x128xf32>
    %205 = tpu.matmul %202, %204, %cst_128 {dimension_numbers = #tpu.dot_dimension_numbers<[1], [0], [0], [1], [0, 0, 1, 1], [], []>} : vector<64x128xbf16>, vector<128x128xbf16>, vector<64x128xf32> -> vector<64x128xf32>
    %206 = arith.addf %194, %205 : vector<64x128xf32>
    %207 = vector.extract_strided_slice %21 {offsets = [8, 0], sizes = [56, 128], strides = [1, 1]} : vector<64x128xf32> to vector<56x128xf32>
    %208 = vector.extract_strided_slice %21 {offsets = [0, 0], sizes = [8, 128], strides = [1, 1]} : vector<64x128xf32> to vector<8x128xf32>
    %209 = tpu.concatenate %207, %208 in 0 : vector<56x128xf32>, vector<8x128xf32> -> vector<64x128xf32>
    %c7_129 = arith.constant 7 : index
    %c0_130 = arith.constant 0 : index
    %c0_131 = arith.constant 0 : index
    %210 = vector.load %arg2[%c7_129, %c0_130, %c0_131] : memref<9x64x1xf32, #tpu.memory_space<vmem>>, vector<1x64x1xf32>
    %211 = vector.shape_cast %210 : vector<1x64x1xf32> to vector<64x1xf32>
    %212 = vector.broadcast %211 : vector<64x1xf32> to vector<64x128xf32>
    %213 = arith.mulf %209, %212 : vector<64x128xf32>
    %214 = arith.truncf %213 : vector<64x128xf32> to vector<64x128xbf16>
    %c2_132 = arith.constant 2 : index
    %c1_133 = arith.constant 1 : index
    %c0_134 = arith.constant 0 : index
    %c0_135 = arith.constant 0 : index
    %215 = vector.load %arg7[%c2_132, %c1_133, %c0_134, %c0_135] : memref<3x3x128x128xbf16, #tpu.memory_space<vmem>>, vector<1x1x128x128xbf16>
    %216 = vector.shape_cast %215 : vector<1x1x128x128xbf16> to vector<128x128xbf16>
    %cst_136 = arith.constant dense<0.000000e+00> : vector<64x128xf32>
    %217 = tpu.matmul %214, %216, %cst_136 {dimension_numbers = #tpu.dot_dimension_numbers<[1], [0], [0], [1], [0, 0, 1, 1], [], []>} : vector<64x128xbf16>, vector<128x128xbf16>, vector<64x128xf32> -> vector<64x128xf32>
    %218 = arith.addf %206, %217 : vector<64x128xf32>
    %219 = vector.extract_strided_slice %21 {offsets = [9, 0], sizes = [55, 128], strides = [1, 1]} : vector<64x128xf32> to vector<55x128xf32>
    %220 = vector.extract_strided_slice %21 {offsets = [0, 0], sizes = [9, 128], strides = [1, 1]} : vector<64x128xf32> to vector<9x128xf32>
    %221 = tpu.concatenate %219, %220 in 0 : vector<55x128xf32>, vector<9x128xf32> -> vector<64x128xf32>
    %c8_137 = arith.constant 8 : index
    %c0_138 = arith.constant 0 : index
    %c0_139 = arith.constant 0 : index
    %222 = vector.load %arg2[%c8_137, %c0_138, %c0_139] : memref<9x64x1xf32, #tpu.memory_space<vmem>>, vector<1x64x1xf32>
    %223 = vector.shape_cast %222 : vector<1x64x1xf32> to vector<64x1xf32>
    %224 = vector.broadcast %223 : vector<64x1xf32> to vector<64x128xf32>
    %225 = arith.mulf %221, %224 : vector<64x128xf32>
    %226 = arith.truncf %225 : vector<64x128xf32> to vector<64x128xbf16>
    %c2_140 = arith.constant 2 : index
    %c2_141 = arith.constant 2 : index
    %c0_142 = arith.constant 0 : index
    %c0_143 = arith.constant 0 : index
    %227 = vector.load %arg7[%c2_140, %c2_141, %c0_142, %c0_143] : memref<3x3x128x128xbf16, #tpu.memory_space<vmem>>, vector<1x1x128x128xbf16>
    %228 = vector.shape_cast %227 : vector<1x1x128x128xbf16> to vector<128x128xbf16>
    %cst_144 = arith.constant dense<0.000000e+00> : vector<64x128xf32>
    %229 = tpu.matmul %226, %228, %cst_144 {dimension_numbers = #tpu.dot_dimension_numbers<[1], [0], [0], [1], [0, 0, 1, 1], [], []>} : vector<64x128xbf16>, vector<128x128xbf16>, vector<64x128xf32> -> vector<64x128xf32>
    %230 = arith.addf %218, %229 : vector<64x128xf32>
    %c0_145 = arith.constant 0 : index
    %c0_146 = arith.constant 0 : index
    %231 = vector.load %arg8[%c0_145, %c0_146] : memref<1x128xf32, #tpu.memory_space<vmem>>, vector<1x128xf32>
    %232 = vector.broadcast %231 : vector<1x128xf32> to vector<64x128xf32>
    %233 = arith.addf %230, %232 : vector<64x128xf32>
    %cst_147 = arith.constant 0.000000e+00 : f32
    %234 = vector.broadcast %cst_147 : f32 to vector<64x128xf32>
    %235 = arith.maximumf %233, %234 : vector<64x128xf32>
    %cst_148 = arith.constant 0.000000e+00 : f32
    %236 = vector.broadcast %cst_148 : f32 to vector<64x128xf32>
    %237 = vector.extract_strided_slice %235 {offsets = [55, 0], sizes = [9, 128], strides = [1, 1]} : vector<64x128xf32> to vector<9x128xf32>
    %238 = vector.extract_strided_slice %235 {offsets = [0, 0], sizes = [55, 128], strides = [1, 1]} : vector<64x128xf32> to vector<55x128xf32>
    %239 = tpu.concatenate %237, %238 in 0 : vector<9x128xf32>, vector<55x128xf32> -> vector<64x128xf32>
    %c0_149 = arith.constant 0 : index
    %c0_150 = arith.constant 0 : index
    %c0_151 = arith.constant 0 : index
    %240 = vector.load %arg2[%c0_149, %c0_150, %c0_151] : memref<9x64x1xf32, #tpu.memory_space<vmem>>, vector<1x64x1xf32>
    %241 = vector.shape_cast %240 : vector<1x64x1xf32> to vector<64x1xf32>
    %242 = vector.broadcast %241 : vector<64x1xf32> to vector<64x128xf32>
    %243 = arith.mulf %239, %242 : vector<64x128xf32>
    %244 = arith.truncf %243 : vector<64x128xf32> to vector<64x128xbf16>
    %c0_152 = arith.constant 0 : index
    %c0_153 = arith.constant 0 : index
    %c0_154 = arith.constant 0 : index
    %c0_155 = arith.constant 0 : index
    %245 = vector.load %arg9[%c0_152, %c0_153, %c0_154, %c0_155] : memref<3x3x128x128xbf16, #tpu.memory_space<vmem>>, vector<1x1x128x128xbf16>
    %246 = vector.shape_cast %245 : vector<1x1x128x128xbf16> to vector<128x128xbf16>
    %cst_156 = arith.constant dense<0.000000e+00> : vector<64x128xf32>
    %247 = tpu.matmul %244, %246, %cst_156 {dimension_numbers = #tpu.dot_dimension_numbers<[1], [0], [0], [1], [0, 0, 1, 1], [], []>} : vector<64x128xbf16>, vector<128x128xbf16>, vector<64x128xf32> -> vector<64x128xf32>
    %248 = arith.addf %236, %247 : vector<64x128xf32>
    %249 = vector.extract_strided_slice %235 {offsets = [56, 0], sizes = [8, 128], strides = [1, 1]} : vector<64x128xf32> to vector<8x128xf32>
    %250 = vector.extract_strided_slice %235 {offsets = [0, 0], sizes = [56, 128], strides = [1, 1]} : vector<64x128xf32> to vector<56x128xf32>
    %251 = tpu.concatenate %249, %250 in 0 : vector<8x128xf32>, vector<56x128xf32> -> vector<64x128xf32>
    %c1_157 = arith.constant 1 : index
    %c0_158 = arith.constant 0 : index
    %c0_159 = arith.constant 0 : index
    %252 = vector.load %arg2[%c1_157, %c0_158, %c0_159] : memref<9x64x1xf32, #tpu.memory_space<vmem>>, vector<1x64x1xf32>
    %253 = vector.shape_cast %252 : vector<1x64x1xf32> to vector<64x1xf32>
    %254 = vector.broadcast %253 : vector<64x1xf32> to vector<64x128xf32>
    %255 = arith.mulf %251, %254 : vector<64x128xf32>
    %256 = arith.truncf %255 : vector<64x128xf32> to vector<64x128xbf16>
    %c0_160 = arith.constant 0 : index
    %c1_161 = arith.constant 1 : index
    %c0_162 = arith.constant 0 : index
    %c0_163 = arith.constant 0 : index
    %257 = vector.load %arg9[%c0_160, %c1_161, %c0_162, %c0_163] : memref<3x3x128x128xbf16, #tpu.memory_space<vmem>>, vector<1x1x128x128xbf16>
    %258 = vector.shape_cast %257 : vector<1x1x128x128xbf16> to vector<128x128xbf16>
    %cst_164 = arith.constant dense<0.000000e+00> : vector<64x128xf32>
    %259 = tpu.matmul %256, %258, %cst_164 {dimension_numbers = #tpu.dot_dimension_numbers<[1], [0], [0], [1], [0, 0, 1, 1], [], []>} : vector<64x128xbf16>, vector<128x128xbf16>, vector<64x128xf32> -> vector<64x128xf32>
    %260 = arith.addf %248, %259 : vector<64x128xf32>
    %261 = vector.extract_strided_slice %235 {offsets = [57, 0], sizes = [7, 128], strides = [1, 1]} : vector<64x128xf32> to vector<7x128xf32>
    %262 = vector.extract_strided_slice %235 {offsets = [0, 0], sizes = [57, 128], strides = [1, 1]} : vector<64x128xf32> to vector<57x128xf32>
    %263 = tpu.concatenate %261, %262 in 0 : vector<7x128xf32>, vector<57x128xf32> -> vector<64x128xf32>
    %c2_165 = arith.constant 2 : index
    %c0_166 = arith.constant 0 : index
    %c0_167 = arith.constant 0 : index
    %264 = vector.load %arg2[%c2_165, %c0_166, %c0_167] : memref<9x64x1xf32, #tpu.memory_space<vmem>>, vector<1x64x1xf32>
    %265 = vector.shape_cast %264 : vector<1x64x1xf32> to vector<64x1xf32>
    %266 = vector.broadcast %265 : vector<64x1xf32> to vector<64x128xf32>
    %267 = arith.mulf %263, %266 : vector<64x128xf32>
    %268 = arith.truncf %267 : vector<64x128xf32> to vector<64x128xbf16>
    %c0_168 = arith.constant 0 : index
    %c2_169 = arith.constant 2 : index
    %c0_170 = arith.constant 0 : index
    %c0_171 = arith.constant 0 : index
    %269 = vector.load %arg9[%c0_168, %c2_169, %c0_170, %c0_171] : memref<3x3x128x128xbf16, #tpu.memory_space<vmem>>, vector<1x1x128x128xbf16>
    %270 = vector.shape_cast %269 : vector<1x1x128x128xbf16> to vector<128x128xbf16>
    %cst_172 = arith.constant dense<0.000000e+00> : vector<64x128xf32>
    %271 = tpu.matmul %268, %270, %cst_172 {dimension_numbers = #tpu.dot_dimension_numbers<[1], [0], [0], [1], [0, 0, 1, 1], [], []>} : vector<64x128xbf16>, vector<128x128xbf16>, vector<64x128xf32> -> vector<64x128xf32>
    %272 = arith.addf %260, %271 : vector<64x128xf32>
    %273 = vector.extract_strided_slice %235 {offsets = [63, 0], sizes = [1, 128], strides = [1, 1]} : vector<64x128xf32> to vector<1x128xf32>
    %274 = vector.extract_strided_slice %235 {offsets = [0, 0], sizes = [63, 128], strides = [1, 1]} : vector<64x128xf32> to vector<63x128xf32>
    %275 = tpu.concatenate %273, %274 in 0 : vector<1x128xf32>, vector<63x128xf32> -> vector<64x128xf32>
    %c3_173 = arith.constant 3 : index
    %c0_174 = arith.constant 0 : index
    %c0_175 = arith.constant 0 : index
    %276 = vector.load %arg2[%c3_173, %c0_174, %c0_175] : memref<9x64x1xf32, #tpu.memory_space<vmem>>, vector<1x64x1xf32>
    %277 = vector.shape_cast %276 : vector<1x64x1xf32> to vector<64x1xf32>
    %278 = vector.broadcast %277 : vector<64x1xf32> to vector<64x128xf32>
    %279 = arith.mulf %275, %278 : vector<64x128xf32>
    %280 = arith.truncf %279 : vector<64x128xf32> to vector<64x128xbf16>
    %c1_176 = arith.constant 1 : index
    %c0_177 = arith.constant 0 : index
    %c0_178 = arith.constant 0 : index
    %c0_179 = arith.constant 0 : index
    %281 = vector.load %arg9[%c1_176, %c0_177, %c0_178, %c0_179] : memref<3x3x128x128xbf16, #tpu.memory_space<vmem>>, vector<1x1x128x128xbf16>
    %282 = vector.shape_cast %281 : vector<1x1x128x128xbf16> to vector<128x128xbf16>
    %cst_180 = arith.constant dense<0.000000e+00> : vector<64x128xf32>
    %283 = tpu.matmul %280, %282, %cst_180 {dimension_numbers = #tpu.dot_dimension_numbers<[1], [0], [0], [1], [0, 0, 1, 1], [], []>} : vector<64x128xbf16>, vector<128x128xbf16>, vector<64x128xf32> -> vector<64x128xf32>
    %284 = arith.addf %272, %283 : vector<64x128xf32>
    %285 = arith.truncf %235 : vector<64x128xf32> to vector<64x128xbf16>
    %c1_181 = arith.constant 1 : index
    %c1_182 = arith.constant 1 : index
    %c0_183 = arith.constant 0 : index
    %c0_184 = arith.constant 0 : index
    %286 = vector.load %arg9[%c1_181, %c1_182, %c0_183, %c0_184] : memref<3x3x128x128xbf16, #tpu.memory_space<vmem>>, vector<1x1x128x128xbf16>
    %287 = vector.shape_cast %286 : vector<1x1x128x128xbf16> to vector<128x128xbf16>
    %cst_185 = arith.constant dense<0.000000e+00> : vector<64x128xf32>
    %288 = tpu.matmul %285, %287, %cst_185 {dimension_numbers = #tpu.dot_dimension_numbers<[1], [0], [0], [1], [0, 0, 1, 1], [], []>} : vector<64x128xbf16>, vector<128x128xbf16>, vector<64x128xf32> -> vector<64x128xf32>
    %289 = arith.addf %284, %288 : vector<64x128xf32>
    %290 = vector.extract_strided_slice %235 {offsets = [1, 0], sizes = [63, 128], strides = [1, 1]} : vector<64x128xf32> to vector<63x128xf32>
    %291 = vector.extract_strided_slice %235 {offsets = [0, 0], sizes = [1, 128], strides = [1, 1]} : vector<64x128xf32> to vector<1x128xf32>
    %292 = tpu.concatenate %290, %291 in 0 : vector<63x128xf32>, vector<1x128xf32> -> vector<64x128xf32>
    %c5_186 = arith.constant 5 : index
    %c0_187 = arith.constant 0 : index
    %c0_188 = arith.constant 0 : index
    %293 = vector.load %arg2[%c5_186, %c0_187, %c0_188] : memref<9x64x1xf32, #tpu.memory_space<vmem>>, vector<1x64x1xf32>
    %294 = vector.shape_cast %293 : vector<1x64x1xf32> to vector<64x1xf32>
    %295 = vector.broadcast %294 : vector<64x1xf32> to vector<64x128xf32>
    %296 = arith.mulf %292, %295 : vector<64x128xf32>
    %297 = arith.truncf %296 : vector<64x128xf32> to vector<64x128xbf16>
    %c1_189 = arith.constant 1 : index
    %c2_190 = arith.constant 2 : index
    %c0_191 = arith.constant 0 : index
    %c0_192 = arith.constant 0 : index
    %298 = vector.load %arg9[%c1_189, %c2_190, %c0_191, %c0_192] : memref<3x3x128x128xbf16, #tpu.memory_space<vmem>>, vector<1x1x128x128xbf16>
    %299 = vector.shape_cast %298 : vector<1x1x128x128xbf16> to vector<128x128xbf16>
    %cst_193 = arith.constant dense<0.000000e+00> : vector<64x128xf32>
    %300 = tpu.matmul %297, %299, %cst_193 {dimension_numbers = #tpu.dot_dimension_numbers<[1], [0], [0], [1], [0, 0, 1, 1], [], []>} : vector<64x128xbf16>, vector<128x128xbf16>, vector<64x128xf32> -> vector<64x128xf32>
    %301 = arith.addf %289, %300 : vector<64x128xf32>
    %302 = vector.extract_strided_slice %235 {offsets = [7, 0], sizes = [57, 128], strides = [1, 1]} : vector<64x128xf32> to vector<57x128xf32>
    %303 = vector.extract_strided_slice %235 {offsets = [0, 0], sizes = [7, 128], strides = [1, 1]} : vector<64x128xf32> to vector<7x128xf32>
    %304 = tpu.concatenate %302, %303 in 0 : vector<57x128xf32>, vector<7x128xf32> -> vector<64x128xf32>
    %c6_194 = arith.constant 6 : index
    %c0_195 = arith.constant 0 : index
    %c0_196 = arith.constant 0 : index
    %305 = vector.load %arg2[%c6_194, %c0_195, %c0_196] : memref<9x64x1xf32, #tpu.memory_space<vmem>>, vector<1x64x1xf32>
    %306 = vector.shape_cast %305 : vector<1x64x1xf32> to vector<64x1xf32>
    %307 = vector.broadcast %306 : vector<64x1xf32> to vector<64x128xf32>
    %308 = arith.mulf %304, %307 : vector<64x128xf32>
    %309 = arith.truncf %308 : vector<64x128xf32> to vector<64x128xbf16>
    %c2_197 = arith.constant 2 : index
    %c0_198 = arith.constant 0 : index
    %c0_199 = arith.constant 0 : index
    %c0_200 = arith.constant 0 : index
    %310 = vector.load %arg9[%c2_197, %c0_198, %c0_199, %c0_200] : memref<3x3x128x128xbf16, #tpu.memory_space<vmem>>, vector<1x1x128x128xbf16>
    %311 = vector.shape_cast %310 : vector<1x1x128x128xbf16> to vector<128x128xbf16>
    %cst_201 = arith.constant dense<0.000000e+00> : vector<64x128xf32>
    %312 = tpu.matmul %309, %311, %cst_201 {dimension_numbers = #tpu.dot_dimension_numbers<[1], [0], [0], [1], [0, 0, 1, 1], [], []>} : vector<64x128xbf16>, vector<128x128xbf16>, vector<64x128xf32> -> vector<64x128xf32>
    %313 = arith.addf %301, %312 : vector<64x128xf32>
    %314 = vector.extract_strided_slice %235 {offsets = [8, 0], sizes = [56, 128], strides = [1, 1]} : vector<64x128xf32> to vector<56x128xf32>
    %315 = vector.extract_strided_slice %235 {offsets = [0, 0], sizes = [8, 128], strides = [1, 1]} : vector<64x128xf32> to vector<8x128xf32>
    %316 = tpu.concatenate %314, %315 in 0 : vector<56x128xf32>, vector<8x128xf32> -> vector<64x128xf32>
    %c7_202 = arith.constant 7 : index
    %c0_203 = arith.constant 0 : index
    %c0_204 = arith.constant 0 : index
    %317 = vector.load %arg2[%c7_202, %c0_203, %c0_204] : memref<9x64x1xf32, #tpu.memory_space<vmem>>, vector<1x64x1xf32>
    %318 = vector.shape_cast %317 : vector<1x64x1xf32> to vector<64x1xf32>
    %319 = vector.broadcast %318 : vector<64x1xf32> to vector<64x128xf32>
    %320 = arith.mulf %316, %319 : vector<64x128xf32>
    %321 = arith.truncf %320 : vector<64x128xf32> to vector<64x128xbf16>
    %c2_205 = arith.constant 2 : index
    %c1_206 = arith.constant 1 : index
    %c0_207 = arith.constant 0 : index
    %c0_208 = arith.constant 0 : index
    %322 = vector.load %arg9[%c2_205, %c1_206, %c0_207, %c0_208] : memref<3x3x128x128xbf16, #tpu.memory_space<vmem>>, vector<1x1x128x128xbf16>
    %323 = vector.shape_cast %322 : vector<1x1x128x128xbf16> to vector<128x128xbf16>
    %cst_209 = arith.constant dense<0.000000e+00> : vector<64x128xf32>
    %324 = tpu.matmul %321, %323, %cst_209 {dimension_numbers = #tpu.dot_dimension_numbers<[1], [0], [0], [1], [0, 0, 1, 1], [], []>} : vector<64x128xbf16>, vector<128x128xbf16>, vector<64x128xf32> -> vector<64x128xf32>
    %325 = arith.addf %313, %324 : vector<64x128xf32>
    %326 = vector.extract_strided_slice %235 {offsets = [9, 0], sizes = [55, 128], strides = [1, 1]} : vector<64x128xf32> to vector<55x128xf32>
    %327 = vector.extract_strided_slice %235 {offsets = [0, 0], sizes = [9, 128], strides = [1, 1]} : vector<64x128xf32> to vector<9x128xf32>
    %328 = tpu.concatenate %326, %327 in 0 : vector<55x128xf32>, vector<9x128xf32> -> vector<64x128xf32>
    %c8_210 = arith.constant 8 : index
    %c0_211 = arith.constant 0 : index
    %c0_212 = arith.constant 0 : index
    %329 = vector.load %arg2[%c8_210, %c0_211, %c0_212] : memref<9x64x1xf32, #tpu.memory_space<vmem>>, vector<1x64x1xf32>
    %330 = vector.shape_cast %329 : vector<1x64x1xf32> to vector<64x1xf32>
    %331 = vector.broadcast %330 : vector<64x1xf32> to vector<64x128xf32>
    %332 = arith.mulf %328, %331 : vector<64x128xf32>
    %333 = arith.truncf %332 : vector<64x128xf32> to vector<64x128xbf16>
    %c2_213 = arith.constant 2 : index
    %c2_214 = arith.constant 2 : index
    %c0_215 = arith.constant 0 : index
    %c0_216 = arith.constant 0 : index
    %334 = vector.load %arg9[%c2_213, %c2_214, %c0_215, %c0_216] : memref<3x3x128x128xbf16, #tpu.memory_space<vmem>>, vector<1x1x128x128xbf16>
    %335 = vector.shape_cast %334 : vector<1x1x128x128xbf16> to vector<128x128xbf16>
    %cst_217 = arith.constant dense<0.000000e+00> : vector<64x128xf32>
    %336 = tpu.matmul %333, %335, %cst_217 {dimension_numbers = #tpu.dot_dimension_numbers<[1], [0], [0], [1], [0, 0, 1, 1], [], []>} : vector<64x128xbf16>, vector<128x128xbf16>, vector<64x128xf32> -> vector<64x128xf32>
    %337 = arith.addf %325, %336 : vector<64x128xf32>
    %c0_218 = arith.constant 0 : index
    %c0_219 = arith.constant 0 : index
    %338 = vector.load %arg10[%c0_218, %c0_219] : memref<1x128xf32, #tpu.memory_space<vmem>>, vector<1x128xf32>
    %339 = vector.broadcast %338 : vector<1x128xf32> to vector<64x128xf32>
    %340 = arith.addf %337, %339 : vector<64x128xf32>
    %cst_220 = arith.constant 0.000000e+00 : f32
    %341 = vector.broadcast %cst_220 : f32 to vector<64x128xf32>
    %342 = arith.maximumf %340, %341 : vector<64x128xf32>
    %343 = arith.truncf %19 : vector<64x128xf32> to vector<64x128xbf16>
    %c0_221 = arith.constant 0 : index
    %c0_222 = arith.constant 0 : index
    %344 = vector.load %arg11[%c0_221, %c0_222] : memref<128x128xbf16, #tpu.memory_space<vmem>>, vector<128x128xbf16>
    %cst_223 = arith.constant dense<0.000000e+00> : vector<64x128xf32>
    %345 = tpu.matmul %343, %344, %cst_223 {dimension_numbers = #tpu.dot_dimension_numbers<[1], [0], [0], [1], [0, 0, 1, 1], [], []>} : vector<64x128xbf16>, vector<128x128xbf16>, vector<64x128xf32> -> vector<64x128xf32>
    %346 = arith.truncf %128 : vector<64x128xf32> to vector<64x128xbf16>
    %c0_224 = arith.constant 0 : index
    %c0_225 = arith.constant 0 : index
    %347 = vector.load %arg12[%c0_224, %c0_225] : memref<128x128xbf16, #tpu.memory_space<vmem>>, vector<128x128xbf16>
    %cst_226 = arith.constant dense<0.000000e+00> : vector<64x128xf32>
    %348 = tpu.matmul %346, %347, %cst_226 {dimension_numbers = #tpu.dot_dimension_numbers<[1], [0], [0], [1], [0, 0, 1, 1], [], []>} : vector<64x128xbf16>, vector<128x128xbf16>, vector<64x128xf32> -> vector<64x128xf32>
    %349 = arith.addf %345, %348 : vector<64x128xf32>
    %350 = arith.truncf %342 : vector<64x128xf32> to vector<64x128xbf16>
    %c0_227 = arith.constant 0 : index
    %c0_228 = arith.constant 0 : index
    %351 = vector.load %arg13[%c0_227, %c0_228] : memref<128x128xbf16, #tpu.memory_space<vmem>>, vector<128x128xbf16>
    %cst_229 = arith.constant dense<0.000000e+00> : vector<64x128xf32>
    %352 = tpu.matmul %350, %351, %cst_229 {dimension_numbers = #tpu.dot_dimension_numbers<[1], [0], [0], [1], [0, 0, 1, 1], [], []>} : vector<64x128xbf16>, vector<128x128xbf16>, vector<64x128xf32> -> vector<64x128xf32>
    %353 = arith.addf %349, %352 : vector<64x128xf32>
    %c0_230 = arith.constant 0 : index
    %c0_231 = arith.constant 0 : index
    %354 = vector.load %arg14[%c0_230, %c0_231] : memref<1x128xf32, #tpu.memory_space<vmem>>, vector<1x128xf32>
    %355 = vector.broadcast %354 : vector<1x128xf32> to vector<64x128xf32>
    %356 = arith.addf %353, %355 : vector<64x128xf32>
    %cst_232 = arith.constant 0.000000e+00 : f32
    %357 = vector.broadcast %cst_232 : f32 to vector<64x128xf32>
    %358 = arith.maximumf %356, %357 : vector<64x128xf32>
    %359 = vector.shape_cast %358 : vector<64x128xf32> to vector<1x64x128xf32>
    %c0_233 = arith.constant 0 : index
    %c0_234 = arith.constant 0 : index
    %c0_235 = arith.constant 0 : index
    %360 = vector.load %arg15[%c0_233, %c0_234, %c0_235] : memref<1x64x128xf32, #tpu.memory_space<vmem>>, vector<1x64x128xf32>
    tpu.vector_store %arg15[%c0_233, %c0_234, %c0_235], %359 {strides = array<i32>} : memref<1x64x128xf32, #tpu.memory_space<vmem>>, vector<1x64x128xf32>,
    return
  }
  func.func @transform_0(%arg0: i32) -> (i32, i32, i32, i32, i32) {
    %c0_i32 = arith.constant 0 : i32
    %c0_i32_0 = arith.constant 0 : i32
    %c0_i32_1 = arith.constant 0 : i32
    %c0_i32_2 = arith.constant 0 : i32
    %c0_i32_3 = arith.constant 0 : i32
    return %arg0, %c0_i32, %c0_i32_0, %c0_i32_1, %c0_i32_2 : i32, i32, i32, i32, i32
  }
  func.func @transform_1(%arg0: i32) -> (i32, i32, i32) {
    %c0_i32 = arith.constant 0 : i32
    %c0_i32_0 = arith.constant 0 : i32
    %c0_i32_1 = arith.constant 0 : i32
    %c0_i32_2 = arith.constant 0 : i32
    return %c0_i32, %c0_i32_0, %c0_i32_1 : i32, i32, i32
  }
  func.func @transform_2(%arg0: i32) -> (i32, i32) {
    %c0_i32 = arith.constant 0 : i32
    %c0_i32_0 = arith.constant 0 : i32
    %c0_i32_1 = arith.constant 0 : i32
    return %c0_i32, %c0_i32_0 : i32, i32
  }
  func.func @transform_3(%arg0: i32) -> (i32, i32) {
    %c0_i32 = arith.constant 0 : i32
    %c0_i32_0 = arith.constant 0 : i32
    %c0_i32_1 = arith.constant 0 : i32
    return %c0_i32, %c0_i32_0 : i32, i32
  }
  func.func @transform_4(%arg0: i32) -> (i32, i32, i32, i32) {
    %c0_i32 = arith.constant 0 : i32
    %c0_i32_0 = arith.constant 0 : i32
    %c0_i32_1 = arith.constant 0 : i32
    %c0_i32_2 = arith.constant 0 : i32
    %c0_i32_3 = arith.constant 0 : i32
    return %c0_i32, %c0_i32_0, %c0_i32_1, %c0_i32_2 : i32, i32, i32, i32
  }
  func.func @transform_5(%arg0: i32) -> (i32, i32) {
    %c0_i32 = arith.constant 0 : i32
    %c0_i32_0 = arith.constant 0 : i32
    %c0_i32_1 = arith.constant 0 : i32
    return %c0_i32, %c0_i32_0 : i32, i32
  }
  func.func @transform_6(%arg0: i32) -> (i32, i32, i32, i32) {
    %c0_i32 = arith.constant 0 : i32
    %c0_i32_0 = arith.constant 0 : i32
    %c0_i32_1 = arith.constant 0 : i32
    %c0_i32_2 = arith.constant 0 : i32
    %c0_i32_3 = arith.constant 0 : i32
    return %c0_i32, %c0_i32_0, %c0_i32_1, %c0_i32_2 : i32, i32, i32, i32
  }
  func.func @transform_7(%arg0: i32) -> (i32, i32) {
    %c0_i32 = arith.constant 0 : i32
    %c0_i32_0 = arith.constant 0 : i32
    %c0_i32_1 = arith.constant 0 : i32
    return %c0_i32, %c0_i32_0 : i32, i32
  }
  func.func @transform_8(%arg0: i32) -> (i32, i32, i32, i32) {
    %c0_i32 = arith.constant 0 : i32
    %c0_i32_0 = arith.constant 0 : i32
    %c0_i32_1 = arith.constant 0 : i32
    %c0_i32_2 = arith.constant 0 : i32
    %c0_i32_3 = arith.constant 0 : i32
    return %c0_i32, %c0_i32_0, %c0_i32_1, %c0_i32_2 : i32, i32, i32, i32
  }
  func.func @transform_9(%arg0: i32) -> (i32, i32) {
    %c0_i32 = arith.constant 0 : i32
    %c0_i32_0 = arith.constant 0 : i32
    %c0_i32_1 = arith.constant 0 : i32
    return %c0_i32, %c0_i32_0 : i32, i32
  }
  func.func @transform_10(%arg0: i32) -> (i32, i32) {
    %c0_i32 = arith.constant 0 : i32
    %c0_i32_0 = arith.constant 0 : i32
    %c0_i32_1 = arith.constant 0 : i32
    return %c0_i32, %c0_i32_0 : i32, i32
  }
  func.func @transform_11(%arg0: i32) -> (i32, i32) {
    %c0_i32 = arith.constant 0 : i32
    %c0_i32_0 = arith.constant 0 : i32
    %c0_i32_1 = arith.constant 0 : i32
    return %c0_i32, %c0_i32_0 : i32, i32
  }
  func.func @transform_12(%arg0: i32) -> (i32, i32) {
    %c0_i32 = arith.constant 0 : i32
    %c0_i32_0 = arith.constant 0 : i32
    %c0_i32_1 = arith.constant 0 : i32
    return %c0_i32, %c0_i32_0 : i32, i32
  }
  func.func @transform_13(%arg0: i32) -> (i32, i32) {
    %c0_i32 = arith.constant 0 : i32
    %c0_i32_0 = arith.constant 0 : i32
    %c0_i32_1 = arith.constant 0 : i32
    return %c0_i32, %c0_i32_0 : i32, i32
  }
  func.func @transform_14(%arg0: i32) -> (i32, i32, i32) {
    %c0_i32 = arith.constant 0 : i32
    %c0_i32_0 = arith.constant 0 : i32
    %c0_i32_1 = arith.constant 0 : i32
    return %arg0, %c0_i32, %c0_i32_0 : i32, i32, i32
  }
}

</mosaic_0001>

<llo_original>
// kernel: tpu_custom_call.1
$region0: #{tpu_custom_call.1}
  #allocation0 [shape = 'u32[]', space=smem, size = 0x4, offset = 0x4, fixed_abs, tag = 'smem constant byte address 0x4 - core index']
  #allocation1 [shape = 'u32[72,128]{1,0:T(1,128)}', space=vmem, size = 0x9000, scoped, tag = 'internal scratch']
  %s0 = inlined_call_operand.hbm [shape: f32[64,128], index: 0, kind: input, shape index: {}]
  %s1 = inlined_call_operand.hbm [shape: f32[64,128], index: 1, kind: output, shape index: {}]
  %s2 = sld [smem:[#allocation0]]
  $region18: #{tpu_custom_call.1} parent=0
    _
  %s4 = ssub.s32 1, %s2
  %s5 = scalar_select 0, %s4, %s2
  $region1: #{tpu_custom_call.1} parent=0
    #allocation2 [shape = 'u8[32768]{0}', space=vmem, size = 0x8000, scoped, tag = 'input window, operand 0, single buffered']
    #allocation3 [shape = 's32[1]{0}', space=sflag, size = 0x4, scoped, tag = 'scoped memory for tpu_custom_call.1']
    #allocation4 [shape = 's32[1]{0}', space=sflag, size = 0x4, scoped, tag = 'scoped memory for tpu_custom_call.1']
    #allocation5 [shape = 'u8[32768]{0}', space=vmem, size = 0x8000, scoped, tag = 'output window, operand 0, single buffered']
    %6 = vsyncpa [#allocation3], 0
    %7 = vsyncpa [#allocation4], 0
    // Predicated region
    $region2: #{tpu_custom_call.1} parent=1 // pred_check
      _
    $region3: #{tpu_custom_call.1} parent=1 // pred_check_branch
      %9 = sbr.rel (0) target = $region5
    $region4: #{tpu_custom_call.1} parent=1 // pred_region
      %11 = vsyncadd [#allocation3], 0
      %s12 = sshll.u32 %s0, 4
      %s13 = int_to_ptr.hbm [resolvable:$true] %s12
      %s14 = sshll.u32 [#allocation2], 4
      %s15 = int_to_ptr.vmem [resolvable:$true] %s14
      %20 = dma.hbm_to_vmem [thread:$0]  %s13, 1024, %s15, [#allocation3], 128, 128, 8
    $region5: #{tpu_custom_call.1} parent=1 // pred_fallthru
      _
    // Predicated region
    $region6: #{tpu_custom_call.1} parent=1 // pred_check
      _
    $region7: #{tpu_custom_call.1} parent=1 // pred_check_branch
      %22 = sbr.rel (0) target = $region9
    $region8: #{tpu_custom_call.1} parent=1 // pred_region
      %24 = dma.done [#allocation3], 1024
    $region9: #{tpu_custom_call.1} parent=1 // pred_fallthru
      _
    %v25 = vld [vmem:[#allocation2] sm:$0xff]
    %v26 = vld [vmem:[#allocation2 + $0x8] sm:$0xff]
    %v27 = vld [vmem:[#allocation2 + $0x10] sm:$0xff]
    %v28 = vld [vmem:[#allocation2 + $0x18] sm:$0xff]
    %v29 = vld [vmem:[#allocation2 + $0x20] sm:$0xff]
    %v30 = vld [vmem:[#allocation2 + $0x28] sm:$0xff]
    %v31 = vld [vmem:[#allocation2 + $0x30] sm:$0xff]
    %v32 = vld [vmem:[#allocation2 + $0x38] sm:$0xff]
    %v33 = vrot.slane %v25, 5
    %v34 = vrot.slane %v26, 5
    %v35 = vrot.slane %v27, 5
    %v36 = vrot.slane %v28, 5
    %v37 = vrot.slane %v29, 5
    %v38 = vrot.slane %v30, 5
    %v39 = vrot.slane %v31, 5
    %v40 = vrot.slane %v32, 5
    %v41 = vlaneseq
    %v42 = vshrl.u32 %v41, 7
    %vm43 = vcmp.lt.s32.totalorder %v42, 3
    %v44 = vsel %vm43, %v39, %v40
    %v45 = vsel %vm43, %v38, %v39
    %v46 = vsel %vm43, %v37, %v38
    %v47 = vsel %vm43, %v36, %v37
    %v48 = vsel %vm43, %v35, %v36
    %v49 = vsel %vm43, %v34, %v35
    %v50 = vsel %vm43, %v33, %v34
    %v51 = vsel %vm43, %v40, %v33
    %52 = vst [vmem:[#allocation5] sm:$0xff] %v51
    %53 = vst [vmem:[#allocation5 + $0x8] sm:$0xff] %v50
    %54 = vst [vmem:[#allocation5 + $0x10] sm:$0xff] %v49
    %55 = vst [vmem:[#allocation5 + $0x18] sm:$0xff] %v48
    %56 = vst [vmem:[#allocation5 + $0x20] sm:$0xff] %v47
    %57 = vst [vmem:[#allocation5 + $0x28] sm:$0xff] %v46
    %58 = vst [vmem:[#allocation5 + $0x30] sm:$0xff] %v45
    %59 = vst [vmem:[#allocation5 + $0x38] sm:$0xff] %v44
    // Predicated region
    $region10: #{tpu_custom_call.1} parent=1 // pred_check
      _
    $region11: #{tpu_custom_call.1} parent=1 // pred_check_branch
      %61 = sbr.rel (0) target = $region13
    $region12: #{tpu_custom_call.1} parent=1 // pred_region
      %63 = vsyncadd [#allocation4], 0
      %s64 = sshll.u32 [#allocation5], 4
      %s65 = int_to_ptr.vmem [resolvable:$true] %s64
      %s66 = sshll.u32 %s1, 4
      %s67 = int_to_ptr.hbm [resolvable:$true] %s66
      %72 = dma.vmem_to_hbm [thread:$0]  %s65, 1024, %s67, [#allocation4], 128, 128, 8
    $region13: #{tpu_custom_call.1} parent=1 // pred_fallthru
      _
    // Predicated region
    $region14: #{tpu_custom_call.1} parent=1 // pred_check
      _
    $region15: #{tpu_custom_call.1} parent=1 // pred_check_branch
      %74 = sbr.rel (0) target = $region17
    $region16: #{tpu_custom_call.1} parent=1 // pred_region
      %76 = dma.done [#allocation4], 1024
    $region17: #{tpu_custom_call.1} parent=1 // pred_fallthru
      _
    %77 = vsyncpa [#allocation3], 1
    %78 = vsyncpa [#allocation4], 1

// kernel: tpu_custom_call.1
$region0: #{tpu_custom_call.1}
  #allocation0 [shape = 'u32[]', space=smem, size = 0x4, offset = 0x4, fixed_abs, tag = 'smem constant byte address 0x4 - core index']
  #allocation1 [shape = 'u32[72,128]{1,0:T(1,128)}', space=vmem, size = 0x9000, scoped, tag = 'internal scratch']
  %s0 = inlined_call_operand.hbm [shape: bf16[2,2,2,64,128], index: 0, kind: input, shape index: {}]
  %s1 = inlined_call_operand.vmem [shape: f32[9,64,1], index: 1, kind: input, shape index: {}]
  %s2 = inlined_call_operand.hbm [shape: bf16[128,384], index: 2, kind: input, shape index: {}]
  %s3 = inlined_call_operand.vmem [shape: f32[1,384], index: 3, kind: input, shape index: {}]
  %s4 = inlined_call_operand.vmem [shape: bf16[3,3,128,128], index: 4, kind: input, shape index: {}]
  %s5 = inlined_call_operand.vmem [shape: f32[1,128], index: 5, kind: input, shape index: {}]
  %s6 = inlined_call_operand.hbm [shape: bf16[3,3,128,128], index: 6, kind: input, shape index: {}]
  %s7 = inlined_call_operand.vmem [shape: f32[1,128], index: 7, kind: input, shape index: {}]
  %s8 = inlined_call_operand.hbm [shape: bf16[3,3,128,128], index: 8, kind: input, shape index: {}]
  %s9 = inlined_call_operand.vmem [shape: f32[1,128], index: 9, kind: input, shape index: {}]
  %s10 = inlined_call_operand.hbm [shape: bf16[128,128], index: 10, kind: input, shape index: {}]
  %s11 = inlined_call_operand.hbm [shape: bf16[128,128], index: 11, kind: input, shape index: {}]
  %s12 = inlined_call_operand.hbm [shape: bf16[128,128], index: 12, kind: input, shape index: {}]
  %s13 = inlined_call_operand.vmem [shape: f32[1,128], index: 13, kind: input, shape index: {}]
  %s14 = inlined_call_operand.hbm [shape: f32[2,64,128], index: 14, kind: output, shape index: {}]
  %s15 = sld [smem:[#allocation0]]
  $region117: #{tpu_custom_call.1} parent=0
    _
  %s17 = ssub.s32 1, %s15
  %s18 = scalar_select 0, %s17, %s15
  $region1: #{tpu_custom_call.1} parent=0
    #allocation2 [shape = 'u8[131072]{0}', space=vmem, size = 0x20000, scoped, tag = 'input window, operand 0']
    #allocation3 [shape = 's32[2]{0}', space=sflag, size = 0x8, scoped, tag = 'scoped memory for tpu_custom_call.1']
    #allocation4 [shape = 's32[2]{0}', space=sflag, size = 0x8, scoped, tag = 'scoped memory for tpu_custom_call.1']
    #allocation5 [shape = 'u8[98304]{0}', space=vmem, size = 0x18000, scoped, tag = 'input window, operand 2, single buffered']
    #allocation6 [shape = 's32[1]{0}', space=sflag, size = 0x4, scoped, tag = 'scoped memory for tpu_custom_call.1']
    #allocation7 [shape = 'u8[294912]{0}', space=vmem, size = 0x48000, scoped, tag = 'input window, operand 6, single buffered']
    #allocation8 [shape = 'u8[294912]{0}', space=vmem, size = 0x48000, scoped, tag = 'input window, operand 8, single buffered']
    #allocation9 [shape = 's32[1]{0}', space=sflag, size = 0x4, scoped, tag = 'scoped memory for tpu_custom_call.1']
    #allocation10 [shape = 'u8[32768]{0}', space=vmem, size = 0x8000, scoped, tag = 'input window, operand 10, single buffered']
    #allocation11 [shape = 'u8[32768]{0}', space=vmem, size = 0x8000, scoped, tag = 'input window, operand 11, single buffered']
    #allocation12 [shape = 's32[1]{0}', space=sflag, size = 0x4, scoped, tag = 'scoped memory for tpu_custom_call.1']
    #allocation13 [shape = 'u8[32768]{0}', space=vmem, size = 0x8000, scoped, tag = 'input window, operand 12, single buffered']
    #allocation14 [shape = 'u8[65536]{0}', space=vmem, size = 0x10000, scoped, tag = 'output window, operand 0']
    %19 = vsyncpa [#allocation3], 0
    %s20 = scalar_lea.sflag [#allocation3], 1
    %21 = vsyncpa %s20, 0
    %22 = vsyncpa [#allocation6], 0
    %23 = vsyncpa [#allocation9], 0
    %24 = vsyncpa [#allocation12], 0
    %25 = vsyncpa [#allocation4], 0
    %s26 = scalar_lea.sflag [#allocation4], 1
    %27 = vsyncpa %s26, 0
    loop: start=0, step=1, limit=4
    $region2: #{tpu_custom_call.1} parent=1 // loop_pre_header
      _
    $region3: #{tpu_custom_call.1} parent=1 // loop_header
      %s29 = sphi 0, %s33
      %p30 = scmp.ge.s32.totalorder %s29, 4
      %s39 = sphi 0, %s41
      %s42 = sphi 0, %s39
      %s43 = sphi 0, %s42
      %s59 = sphi 0, %s43
      %s63 = sphi 0, %s63
      %s65 = sphi 0, %s63
      %s66 = sphi 0, %s65
      %s80 = sphi 0, %s66
      %s84 = sphi 0, %s84
      %s86 = sphi 0, %s84
      %s87 = sphi 0, %s86
      %s101 = sphi 0, %s87
      %s105 = sphi 0, %s105
      %s107 = sphi 0, %s105
      %s108 = sphi 0, %s107
      %s122 = sphi 0, %s108
      %s126 = sphi 0, %s126
      %s128 = sphi 0, %s126
      %s129 = sphi 0, %s128
      %s143 = sphi 0, %s129
      %s147 = sphi 0, %s147
      %s149 = sphi 0, %s147
      %s150 = sphi 0, %s149
      %s164 = sphi 0, %s150
      %s168 = sphi 0, %s168
      %s170 = sphi 0, %s168
      %s171 = sphi 0, %s170
      %s185 = sphi 0, %s171
      %s189 = sphi 0, %s189
      %s191 = sphi 0, %s189
      %s192 = sphi 0, %s191
      %s206 = sphi 0, %s192
      %s210 = sphi 0, %s210
      %s212 = sphi 0, %s210
      %s213 = sphi 0, %s212
      %s227 = sphi 0, %s213
      %s231 = sphi 0, %s231
      %s233 = sphi 0, %s231
      %s234 = sphi 0, %s233
      %s248 = sphi 0, %s234
      %s252 = sphi 0, %s252
      %s254 = sphi 0, %s252
      %s255 = sphi 0, %s254
      %s269 = sphi 0, %s255
      %s273 = sphi 0, %s273
      %s275 = sphi 0, %s273
      %s276 = sphi 0, %s275
      %s290 = sphi 0, %s276
      %s294 = sphi 0, %s294
      %s296 = sphi 0, %s294
      %s297 = sphi 0, %s296
      %s311 = sphi 0, %s297
      %s315 = sphi 0, %s315
      %s317 = sphi 0, %s315
      %s318 = sphi 0, %s317
      %s332 = sphi 0, %s318
      %s338 = sphi 0, %s340
      %s341 = sphi 0, %s338
      %s342 = sphi 0, %s341
      %s358 = sphi 0, %s342
    $region4: #{tpu_custom_call.1} parent=1 // loop_header_branch
      %32 = sbr.rel (%p30) target = $region8
    $region5: #{tpu_custom_call.1} parent=1 // loop_body
      %s34 = ssub.s32 %s29, 1
      %s35 = ssub.s32 %s29, 2
      %s36 = sadd.s32 %s29, 1
      %s37 = ssub.s32 %s29, %s36
      %p38 = scmp.eq.s32.totalorder %s37, 0
      %s40 = sadd.s32 %s39, 1
      %s41 = scalar_select %p38, %s39, %s40
      %p44 = pneg %p38
      %p45 = scmp.eq.s32.totalorder %s29, 1
      %p46 = por %p44, %p45
      %p47 = scmp.ne.s32.totalorder %s39, %s42
      %p48 = scmp.eq.s32.totalorder %s29, 0
      %p49 = por %p47, %p48
      %p50 = scmp.ne.s32.totalorder %s39, %s42
      %p51 = scmp.eq.s32.totalorder %s34, 1
      %p52 = por %p50, %p51
      %p53 = scmp.ne.s32.totalorder %s42, %s43
      %p54 = scmp.eq.s32.totalorder %s34, 0
      %p55 = por %p53, %p54
      %p56 = scmp.ne.s32.totalorder %s42, %s43
      %p57 = scmp.eq.s32.totalorder %s35, 1
      %p58 = por %p56, %p57
      %p60 = scmp.ne.s32.totalorder %s43, %s59
      %p61 = scmp.eq.s32.totalorder %s35, 0
      %p62 = por %p60, %p61
      %s64 = sadd.s32 %s63, 1
      %p67 = scmp.eq.s32.totalorder %s29, 1
      %p68 = scmp.ne.s32.totalorder %s63, %s65
      %p69 = scmp.eq.s32.totalorder %s29, 0
      %p70 = por %p68, %p69
      %p71 = scmp.ne.s32.totalorder %s63, %s65
      %p72 = scmp.eq.s32.totalorder %s34, 1
      %p73 = por %p71, %p72
      %p74 = scmp.ne.s32.totalorder %s65, %s66
      %p75 = scmp.eq.s32.totalorder %s34, 0
      %p76 = por %p74, %p75
      %p77 = scmp.ne.s32.totalorder %s65, %s66
      %p78 = scmp.eq.s32.totalorder %s35, 1
      %p79 = por %p77, %p78
      %p81 = scmp.ne.s32.totalorder %s66, %s80
      %p82 = scmp.eq.s32.totalorder %s35, 0
      %p83 = por %p81, %p82
      %s85 = sadd.s32 %s84, 1
      %p88 = scmp.eq.s32.totalorder %s29, 1
      %p89 = scmp.ne.s32.totalorder %s84, %s86
      %p90 = scmp.eq.s32.totalorder %s29, 0
      %p91 = por %p89, %p90
      %p92 = scmp.ne.s32.totalorder %s84, %s86
      %p93 = scmp.eq.s32.totalorder %s34, 1
      %p94 = por %p92, %p93
      %p95 = scmp.ne.s32.totalorder %s86, %s87
      %p96 = scmp.eq.s32.totalorder %s34, 0
      %p97 = por %p95, %p96
      %p98 = scmp.ne.s32.totalorder %s86, %s87
      %p99 = scmp.eq.s32.totalorder %s35, 1
      %p100 = por %p98, %p99
      %p102 = scmp.ne.s32.totalorder %s87, %s101
      %p103 = scmp.eq.s32.totalorder %s35, 0
      %p104 = por %p102, %p103
      %s106 = sadd.s32 %s105, 1
      %p109 = scmp.eq.s32.totalorder %s29, 1
      %p110 = scmp.ne.s32.totalorder %s105, %s107
      %p111 = scmp.eq.s32.totalorder %s29, 0
      %p112 = por %p110, %p111
      %p113 = scmp.ne.s32.totalorder %s105, %s107
      %p114 = scmp.eq.s32.totalorder %s34, 1
      %p115 = por %p113, %p114
      %p116 = scmp.ne.s32.totalorder %s107, %s108
      %p117 = scmp.eq.s32.totalorder %s34, 0
      %p118 = por %p116, %p117
      %p119 = scmp.ne.s32.totalorder %s107, %s108
      %p120 = scmp.eq.s32.totalorder %s35, 1
      %p121 = por %p119, %p120
      %p123 = scmp.ne.s32.totalorder %s108, %s122
      %p124 = scmp.eq.s32.totalorder %s35, 0
      %p125 = por %p123, %p124
      %s127 = sadd.s32 %s126, 1
      %p130 = scmp.eq.s32.totalorder %s29, 1
      %p131 = scmp.ne.s32.totalorder %s126, %s128
      %p132 = scmp.eq.s32.totalorder %s29, 0
      %p133 = por %p131, %p132
      %p134 = scmp.ne.s32.totalorder %s126, %s128
      %p135 = scmp.eq.s32.totalorder %s34, 1
      %p136 = por %p134, %p135
      %p137 = scmp.ne.s32.totalorder %s128, %s129
      %p138 = scmp.eq.s32.totalorder %s34, 0
      %p139 = por %p137, %p138
      %p140 = scmp.ne.s32.totalorder %s128, %s129
      %p141 = scmp.eq.s32.totalorder %s35, 1
      %p142 = por %p140, %p141
      %p144 = scmp.ne.s32.totalorder %s129, %s143
      %p145 = scmp.eq.s32.totalorder %s35, 0
      %p146 = por %p144, %p145
      %s148 = sadd.s32 %s147, 1
      %p151 = scmp.eq.s32.totalorder %s29, 1
      %p152 = scmp.ne.s32.totalorder %s147, %s149
      %p153 = scmp.eq.s32.totalorder %s29, 0
      %p154 = por %p152, %p153
      %p155 = scmp.ne.s32.totalorder %s147, %s149
      %p156 = scmp.eq.s32.totalorder %s34, 1
      %p157 = por %p155, %p156
      %p158 = scmp.ne.s32.totalorder %s149, %s150
      %p159 = scmp.eq.s32.totalorder %s34, 0
      %p160 = por %p158, %p159
      %p161 = scmp.ne.s32.totalorder %s149, %s150
      %p162 = scmp.eq.s32.totalorder %s35, 1
      %p163 = por %p161, %p162
      %p165 = scmp.ne.s32.totalorder %s150, %s164
      %p166 = scmp.eq.s32.totalorder %s35, 0
      %p167 = por %p165, %p166
      %s169 = sadd.s32 %s168, 1
      %p172 = scmp.eq.s32.totalorder %s29, 1
      %p173 = scmp.ne.s32.totalorder %s168, %s170
      %p174 = scmp.eq.s32.totalorder %s29, 0
      %p175 = por %p173, %p174
      %p176 = scmp.ne.s32.totalorder %s168, %s170
      %p177 = scmp.eq.s32.totalorder %s34, 1
      %p178 = por %p176, %p177
      %p179 = scmp.ne.s32.totalorder %s170, %s171
      %p180 = scmp.eq.s32.totalorder %s34, 0
      %p181 = por %p179, %p180
      %p182 = scmp.ne.s32.totalorder %s170, %s171
      %p183 = scmp.eq.s32.totalorder %s35, 1
      %p184 = por %p182, %p183
      %p186 = scmp.ne.s32.totalorder %s171, %s185
      %p187 = scmp.eq.s32.totalorder %s35, 0
      %p188 = por %p186, %p187
      %s190 = sadd.s32 %s189, 1
      %p193 = scmp.eq.s32.totalorder %s29, 1
      %p194 = scmp.ne.s32.totalorder %s189, %s191
      %p195 = scmp.eq.s32.totalorder %s29, 0
      %p196 = por %p194, %p195
      %p197 = scmp.ne.s32.totalorder %s189, %s191
      %p198 = scmp.eq.s32.totalorder %s34, 1
      %p199 = por %p197, %p198
      %p200 = scmp.ne.s32.totalorder %s191, %s192
      %p201 = scmp.eq.s32.totalorder %s34, 0
      %p202 = por %p200, %p201
      %p203 = scmp.ne.s32.totalorder %s191, %s192
      %p204 = scmp.eq.s32.totalorder %s35, 1
      %p205 = por %p203, %p204
      %p207 = scmp.ne.s32.totalorder %s192, %s206
      %p208 = scmp.eq.s32.totalorder %s35, 0
      %p209 = por %p207, %p208
      %s211 = sadd.s32 %s210, 1
      %p214 = scmp.eq.s32.totalorder %s29, 1
      %p215 = scmp.ne.s32.totalorder %s210, %s212
      %p216 = scmp.eq.s32.totalorder %s29, 0
      %p217 = por %p215, %p216
      %p218 = scmp.ne.s32.totalorder %s210, %s212
      %p219 = scmp.eq.s32.totalorder %s34, 1
      %p220 = por %p218, %p219
      %p221 = scmp.ne.s32.totalorder %s212, %s213
      %p222 = scmp.eq.s32.totalorder %s34, 0
      %p223 = por %p221, %p222
      %p224 = scmp.ne.s32.totalorder %s212, %s213
      %p225 = scmp.eq.s32.totalorder %s35, 1
      %p226 = por %p224, %p225
      %p228 = scmp.ne.s32.totalorder %s213, %s227
      %p229 = scmp.eq.s32.totalorder %s35, 0
      %p230 = por %p228, %p229
      %s232 = sadd.s32 %s231, 1
      %p235 = scmp.eq.s32.totalorder %s29, 1
      %p236 = scmp.ne.s32.totalorder %s231, %s233
      %p237 = scmp.eq.s32.totalorder %s29, 0
      %p238 = por %p236, %p237
      %p239 = scmp.ne.s32.totalorder %s231, %s233
      %p240 = scmp.eq.s32.totalorder %s34, 1
      %p241 = por %p239, %p240
      %p242 = scmp.ne.s32.totalorder %s233, %s234
      %p243 = scmp.eq.s32.totalorder %s34, 0
      %p244 = por %p242, %p243
      %p245 = scmp.ne.s32.totalorder %s233, %s234
      %p246 = scmp.eq.s32.totalorder %s35, 1
      %p247 = por %p245, %p246
      %p249 = scmp.ne.s32.totalorder %s234, %s248
      %p250 = scmp.eq.s32.totalorder %s35, 0
      %p251 = por %p249, %p250
      %s253 = sadd.s32 %s252, 1
      %p256 = scmp.eq.s32.totalorder %s29, 1
      %p257 = scmp.ne.s32.totalorder %s252, %s254
      %p258 = scmp.eq.s32.totalorder %s29, 0
      %p259 = por %p257, %p258
      %p260 = scmp.ne.s32.totalorder %s252, %s254
      %p261 = scmp.eq.s32.totalorder %s34, 1
      %p262 = por %p260, %p261
      %p263 = scmp.ne.s32.totalorder %s254, %s255
      %p264 = scmp.eq.s32.totalorder %s34, 0
      %p265 = por %p263, %p264
      %p266 = scmp.ne.s32.totalorder %s254, %s255
      %p267 = scmp.eq.s32.totalorder %s35, 1
      %p268 = por %p266, %p267
      %p270 = scmp.ne.s32.totalorder %s255, %s269
      %p271 = scmp.eq.s32.totalorder %s35, 0
      %p272 = por %p270, %p271
      %s274 = sadd.s32 %s273, 1
      %p277 = scmp.eq.s32.totalorder %s29, 1
      %p278 = scmp.ne.s32.totalorder %s273, %s275
      %p279 = scmp.eq.s32.totalorder %s29, 0
      %p280 = por %p278, %p279
      %p281 = scmp.ne.s32.totalorder %s273, %s275
      %p282 = scmp.eq.s32.totalorder %s34, 1
      %p283 = por %p281, %p282
      %p284 = scmp.ne.s32.totalorder %s275, %s276
      %p285 = scmp.eq.s32.totalorder %s34, 0
      %p286 = por %p284, %p285
      %p287 = scmp.ne.s32.totalorder %s275, %s276
      %p288 = scmp.eq.s32.totalorder %s35, 1
      %p289 = por %p287, %p288
      %p291 = scmp.ne.s32.totalorder %s276, %s290
      %p292 = scmp.eq.s32.totalorder %s35, 0
      %p293 = por %p291, %p292
      %s295 = sadd.s32 %s294, 1
      %p298 = scmp.eq.s32.totalorder %s29, 1
      %p299 = scmp.ne.s32.totalorder %s294, %s296
      %p300 = scmp.eq.s32.totalorder %s29, 0
      %p301 = por %p299, %p300
      %p302 = scmp.ne.s32.totalorder %s294, %s296
      %p303 = scmp.eq.s32.totalorder %s34, 1
      %p304 = por %p302, %p303
      %p305 = scmp.ne.s32.totalorder %s296, %s297
      %p306 = scmp.eq.s32.totalorder %s34, 0
      %p307 = por %p305, %p306
      %p308 = scmp.ne.s32.totalorder %s296, %s297
      %p309 = scmp.eq.s32.totalorder %s35, 1
      %p310 = por %p308, %p309
      %p312 = scmp.ne.s32.totalorder %s297, %s311
      %p313 = scmp.eq.s32.totalorder %s35, 0
      %p314 = por %p312, %p313
      %s316 = sadd.s32 %s315, 1
      %p319 = scmp.eq.s32.totalorder %s29, 1
      %p320 = scmp.ne.s32.totalorder %s315, %s317
      %p321 = scmp.eq.s32.totalorder %s29, 0
      %p322 = por %p320, %p321
      %p323 = scmp.ne.s32.totalorder %s315, %s317
      %p324 = scmp.eq.s32.totalorder %s34, 1
      %p325 = por %p323, %p324
      %p326 = scmp.ne.s32.totalorder %s317, %s318
      %p327 = scmp.eq.s32.totalorder %s34, 0
      %p328 = por %p326, %p327
      %p329 = scmp.ne.s32.totalorder %s317, %s318
      %p330 = scmp.eq.s32.totalorder %s35, 1
      %p331 = por %p329, %p330
      %p333 = scmp.ne.s32.totalorder %s318, %s332
      %p334 = scmp.eq.s32.totalorder %s35, 0
      %p335 = por %p333, %p334
      %s336 = ssub.s32 %s29, %s36
      %p337 = scmp.eq.s32.totalorder %s336, 0
      %s339 = sadd.s32 %s338, 1
      %s340 = scalar_select %p337, %s338, %s339
      %p343 = pneg %p337
      %p344 = scmp.eq.s32.totalorder %s29, 1
      %p345 = por %p343, %p344
      %p346 = scmp.ne.s32.totalorder %s338, %s341
      %p347 = scmp.eq.s32.totalorder %s29, 0
      %p348 = por %p346, %p347
      %p349 = scmp.ne.s32.totalorder %s338, %s341
      %p350 = scmp.eq.s32.totalorder %s34, 1
      %p351 = por %p349, %p350
      %p352 = scmp.ne.s32.totalorder %s341, %s342
      %p353 = scmp.eq.s32.totalorder %s34, 0
      %p354 = por %p352, %p353
      %p355 = scmp.ne.s32.totalorder %s341, %s342
      %p356 = scmp.eq.s32.totalorder %s35, 1
      %p357 = por %p355, %p356
      %p359 = scmp.ne.s32.totalorder %s342, %s358
      %p360 = scmp.eq.s32.totalorder %s35, 0
      %p361 = por %p359, %p360
      %p362 = scmp.le.s32.totalorder 1, %s29
      %p363 = scmp.lt.s32.totalorder %s29, 3
      %p364 = pnand %p362, %p363
      %p365 = pneg %p364
      // Predicated region
      $region9: #{tpu_custom_call.1} parent=5 // pred_check
        _
      $region10: #{tpu_custom_call.1} parent=5 // pred_check_branch
        %367 = sbr.rel (%p364) target = $region12
      $region11: #{tpu_custom_call.1} parent=5 // pred_region
        %s368 = ssub.s32 %s29, 1
        // Predicated region
        $region13: #{tpu_custom_call.1} parent=11 // pred_check
          %p369 = pneg %p76
        $region14: #{tpu_custom_call.1} parent=11 // pred_check_branch
          %371 = sbr.rel (%p369) target = $region16
        $region15: #{tpu_custom_call.1} parent=11 // pred_region
          _
        $region16: #{tpu_custom_call.1} parent=11 // pred_fallthru
          _
        // Predicated region
        $region17: #{tpu_custom_call.1} parent=11 // pred_check
          %p372 = pneg %p97
        $region18: #{tpu_custom_call.1} parent=11 // pred_check_branch
          %374 = sbr.rel (%p372) target = $region20
        $region19: #{tpu_custom_call.1} parent=11 // pred_region
          %376 = vsyncadd [#allocation6], 0
          %s377 = sshll.u32 %s2, 4
          %s378 = int_to_ptr.hbm [resolvable:$true] %s377
          %s379 = sshll.u32 [#allocation5], 4
          %s380 = int_to_ptr.vmem [resolvable:$true] %s379
          %385 = dma.hbm_to_vmem [thread:$0]  %s378, 3072, %s380, [#allocation6], 192, 192, 12
        $region20: #{tpu_custom_call.1} parent=11 // pred_fallthru
          _
        // Predicated region
        $region21: #{tpu_custom_call.1} parent=11 // pred_check
          %p386 = pneg %p118
        $region22: #{tpu_custom_call.1} parent=11 // pred_check_branch
          %388 = sbr.rel (%p386) target = $region24
        $region23: #{tpu_custom_call.1} parent=11 // pred_region
          _
        $region24: #{tpu_custom_call.1} parent=11 // pred_fallthru
          _
        // Predicated region
        $region25: #{tpu_custom_call.1} parent=11 // pred_check
          %p389 = pneg %p139
        $region26: #{tpu_custom_call.1} parent=11 // pred_check_branch
          %391 = sbr.rel (%p389) target = $region28
        $region27: #{tpu_custom_call.1} parent=11 // pred_region
          _
        $region28: #{tpu_custom_call.1} parent=11 // pred_fallthru
          _
        // Predicated region
        $region29: #{tpu_custom_call.1} parent=11 // pred_check
          %p392 = pneg %p160
        $region30: #{tpu_custom_call.1} parent=11 // pred_check_branch
          %394 = sbr.rel (%p392) target = $region32
        $region31: #{tpu_custom_call.1} parent=11 // pred_region
          _
        $region32: #{tpu_custom_call.1} parent=11 // pred_fallthru
          _
        // Predicated region
        $region33: #{tpu_custom_call.1} parent=11 // pred_check
          %p395 = pneg %p181
        $region34: #{tpu_custom_call.1} parent=11 // pred_check_branch
          %397 = sbr.rel (%p395) target = $region36
        $region35: #{tpu_custom_call.1} parent=11 // pred_region
          %399 = vsyncadd [#allocation6], 0
          %s400 = sshll.u32 %s6, 4
          %s401 = int_to_ptr.hbm [resolvable:$true] %s400
          %s402 = sshll.u32 [#allocation7], 4
          %s403 = int_to_ptr.vmem [resolvable:$true] %s402
          %408 = dma.hbm_to_vmem [thread:$0]  %s401, 9216, %s403, [#allocation6], 64, 64, 4
        $region36: #{tpu_custom_call.1} parent=11 // pred_fallthru
          _
        // Predicated region
        $region37: #{tpu_custom_call.1} parent=11 // pred_check
          %p409 = pneg %p202
        $region38: #{tpu_custom_call.1} parent=11 // pred_check_branch
          %411 = sbr.rel (%p409) target = $region40
        $region39: #{tpu_custom_call.1} parent=11 // pred_region
          _
        $region40: #{tpu_custom_call.1} parent=11 // pred_fallthru
          _
        // Predicated region
        $region41: #{tpu_custom_call.1} parent=11 // pred_check
          %p412 = pneg %p223
        $region42: #{tpu_custom_call.1} parent=11 // pred_check_branch
          %414 = sbr.rel (%p412) target = $region44
        $region43: #{tpu_custom_call.1} parent=11 // pred_region
          %416 = vsyncadd [#allocation9], 0
          %s417 = sshll.u32 %s8, 4
          %s418 = int_to_ptr.hbm [resolvable:$true] %s417
          %s419 = sshll.u32 [#allocation8], 4
          %s420 = int_to_ptr.vmem [resolvable:$true] %s419
          %425 = dma.hbm_to_vmem [thread:$0]  %s418, 9216, %s420, [#allocation9], 64, 64, 4
        $region44: #{tpu_custom_call.1} parent=11 // pred_fallthru
          _
        // Predicated region
        $region45: #{tpu_custom_call.1} parent=11 // pred_check
          %p426 = pneg %p244
        $region46: #{tpu_custom_call.1} parent=11 // pred_check_branch
          %428 = sbr.rel (%p426) target = $region48
        $region47: #{tpu_custom_call.1} parent=11 // pred_region
          _
        $region48: #{tpu_custom_call.1} parent=11 // pred_fallthru
          _
        // Predicated region
        $region49: #{tpu_custom_call.1} parent=11 // pred_check
          %p429 = pneg %p265
        $region50: #{tpu_custom_call.1} parent=11 // pred_check_branch
          %431 = sbr.rel (%p429) target = $region52
        $region51: #{tpu_custom_call.1} parent=11 // pred_region
          %433 = vsyncadd [#allocation9], 0
          %s434 = sshll.u32 %s10, 4
          %s435 = int_to_ptr.hbm [resolvable:$true] %s434
          %s436 = sshll.u32 [#allocation10], 4
          %s437 = int_to_ptr.vmem [resolvable:$true] %s436
          %442 = dma.hbm_to_vmem [thread:$0]  %s435, 1024, %s437, [#allocation9], 64, 64, 4
        $region52: #{tpu_custom_call.1} parent=11 // pred_fallthru
          _
        // Predicated region
        $region53: #{tpu_custom_call.1} parent=11 // pred_check
          %p443 = pneg %p286
        $region54: #{tpu_custom_call.1} parent=11 // pred_check_branch
          %445 = sbr.rel (%p443) target = $region56
        $region55: #{tpu_custom_call.1} parent=11 // pred_region
          %447 = vsyncadd [#allocation12], 0
          %s448 = sshll.u32 %s11, 4
          %s449 = int_to_ptr.hbm [resolvable:$true] %s448
          %s450 = sshll.u32 [#allocation11], 4
          %s451 = int_to_ptr.vmem [resolvable:$true] %s450
          %456 = dma.hbm_to_vmem [thread:$0]  %s449, 1024, %s451, [#allocation12], 64, 64, 4
        $region56: #{tpu_custom_call.1} parent=11 // pred_fallthru
          _
        // Predicated region
        $region57: #{tpu_custom_call.1} parent=11 // pred_check
          %p457 = pneg %p307
        $region58: #{tpu_custom_call.1} parent=11 // pred_check_branch
          %459 = sbr.rel (%p457) target = $region60
        $region59: #{tpu_custom_call.1} parent=11 // pred_region
          %461 = vsyncadd [#allocation12], 0
          %s462 = sshll.u32 %s12, 4
          %s463 = int_to_ptr.hbm [resolvable:$true] %s462
          %s464 = sshll.u32 [#allocation13], 4
          %s465 = int_to_ptr.vmem [resolvable:$true] %s464
          %470 = dma.hbm_to_vmem [thread:$0]  %s463, 1024, %s465, [#allocation12], 64, 64, 4
        $region60: #{tpu_custom_call.1} parent=11 // pred_fallthru
          _
        // Predicated region
        $region61: #{tpu_custom_call.1} parent=11 // pred_check
          %p471 = pneg %p328
        $region62: #{tpu_custom_call.1} parent=11 // pred_check_branch
          %473 = sbr.rel (%p471) target = $region64
        $region63: #{tpu_custom_call.1} parent=11 // pred_region
          _
        $region64: #{tpu_custom_call.1} parent=11 // pred_fallthru
          _
      $region12: #{tpu_custom_call.1} parent=5 // pred_fallthru
        _
      %p474 = scmp.lt.s32.totalorder %s29, 2
      // Predicated region
      $region65: #{tpu_custom_call.1} parent=5 // pred_check
        %p475 = pneg %p474
      $region66: #{tpu_custom_call.1} parent=5 // pred_check_branch
        %477 = sbr.rel (%p475) target = $region68
      $region67: #{tpu_custom_call.1} parent=5 // pred_region
        // Predicated region
        $region69: #{tpu_custom_call.1} parent=67 // pred_check
          %p478 = pneg %p49
        $region70: #{tpu_custom_call.1} parent=67 // pred_check_branch
          %480 = sbr.rel (%p478) target = $region72
        $region71: #{tpu_custom_call.1} parent=67 // pred_region
          %s481 = sand.u32 %s39, 1
          %s482 = scalar_lea.sflag [#allocation3], %s481
          %s483 = sand.u32 %s39, 1
          %s484 = smul.addr %s483, 128
          %s485 = scalar_lea.vmem [#allocation2], %s484
          %487 = vsyncadd %s482, 0
          %s488 = smul.addr %s29, 32
          %s489 = smul.addr %s488, 4
          %s490 = scalar_lea.hbm %s0, %s489
          %s491 = sshll.u32 %s490, 4
          %s492 = int_to_ptr.hbm [resolvable:$true] %s491
          %s493 = sshll.u32 %s485, 4
          %s494 = int_to_ptr.vmem [resolvable:$true] %s493
          %499 = dma.hbm_to_vmem [thread:$0]  %s492, 2048, %s494, %s482, 64, 64, 4
        $region72: #{tpu_custom_call.1} parent=67 // pred_fallthru
          _
      $region68: #{tpu_custom_call.1} parent=5 // pred_fallthru
        _
      %p500 = scmp.le.s32.totalorder 1, %s29
      %p501 = scmp.lt.s32.totalorder %s29, 3
      %p502 = pnand %p500, %p501
      %p503 = pneg %p502
      // Predicated region
      $region73: #{tpu_custom_call.1} parent=5 // pred_check
        _
      $region74: #{tpu_custom_call.1} parent=5 // pred_check_branch
        %505 = sbr.rel (%p502) target = $region76
      $region75: #{tpu_custom_call.1} parent=5 // pred_region
        %s506 = ssub.s32 %s29, 1
        %s507 = sand.u32 %s42, 1
        %s508 = scalar_lea.sflag [#allocation3], %s507
        %s509 = sand.u32 %s42, 1
        %s510 = smul.addr %s509, 128
        %s511 = scalar_lea.vmem [#allocation2], %s510
        // Predicated region
        $region77: #{tpu_custom_call.1} parent=75 // pred_check
          %p512 = pneg %p55
        $region78: #{tpu_custom_call.1} parent=75 // pred_check_branch
          %514 = sbr.rel (%p512) target = $region80
        $region79: #{tpu_custom_call.1} parent=75 // pred_region
          %516 = dma.done %s508, 2048
        $region80: #{tpu_custom_call.1} parent=75 // pred_fallthru
          _
        // Predicated region
        $region81: #{tpu_custom_call.1} parent=75 // pred_check
          %p517 = pneg %p97
        $region82: #{tpu_custom_call.1} parent=75 // pred_check_branch
          %519 = sbr.rel (%p517) target = $region84
        $region83: #{tpu_custom_call.1} parent=75 // pred_region
          %521 = dma.done [#allocation6], 3072
        $region84: #{tpu_custom_call.1} parent=75 // pred_fallthru
          _
        // Predicated region
        $region85: #{tpu_custom_call.1} parent=75 // pred_check
          %p522 = pneg %p181
        $region86: #{tpu_custom_call.1} parent=75 // pred_check_branch
          %524 = sbr.rel (%p522) target = $region88
        $region87: #{tpu_custom_call.1} parent=75 // pred_region
          %526 = dma.done [#allocation6], 9216
        $region88: #{tpu_custom_call.1} parent=75 // pred_fallthru
          _
        // Predicated region
        $region89: #{tpu_custom_call.1} parent=75 // pred_check
          %p527 = pneg %p223
        $region90: #{tpu_custom_call.1} parent=75 // pred_check_branch
          %529 = sbr.rel (%p527) target = $region92
        $region91: #{tpu_custom_call.1} parent=75 // pred_region
          %531 = dma.done [#allocation9], 9216
        $region92: #{tpu_custom_call.1} parent=75 // pred_fallthru
          _
        // Predicated region
        $region93: #{tpu_custom_call.1} parent=75 // pred_check
          %p532 = pneg %p265
        $region94: #{tpu_custom_call.1} parent=75 // pred_check_branch
          %534 = sbr.rel (%p532) target = $region96
        $region95: #{tpu_custom_call.1} parent=75 // pred_region
          %536 = dma.done [#allocation9], 1024
        $region96: #{tpu_custom_call.1} parent=75 // pred_fallthru
          _
        // Predicated region
        $region97: #{tpu_custom_call.1} parent=75 // pred_check
          %p537 = pneg %p286
        $region98: #{tpu_custom_call.1} parent=75 // pred_check_branch
          %539 = sbr.rel (%p537) target = $region100
        $region99: #{tpu_custom_call.1} parent=75 // pred_region
          %541 = dma.done [#allocation12], 1024
        $region100: #{tpu_custom_call.1} parent=75 // pred_fallthru
          _
        // Predicated region
        $region101: #{tpu_custom_call.1} parent=75 // pred_check
          %p542 = pneg %p307
        $region102: #{tpu_custom_call.1} parent=75 // pred_check_branch
          %544 = sbr.rel (%p542) target = $region104
        $region103: #{tpu_custom_call.1} parent=75 // pred_region
          %546 = dma.done [#allocation12], 1024
        $region104: #{tpu_custom_call.1} parent=75 // pred_fallthru
          _
        %s547 = sand.u32 %s42, 1
        %s548 = scalar_lea.sflag [#allocation3], %s547
        %s549 = sand.u32 %s42, 1
        %s550 = smul.addr %s549, 128
        %s551 = scalar_lea.vmem [#allocation2], %s550
        %p552 = pneg %p55
        %p553 = pneg %p52
        %p554 = pneg %p76
        %p555 = pneg %p73
        %p556 = pneg %p97
        %p557 = pneg %p94
        %p558 = pneg %p118
        %p559 = pneg %p115
        %p560 = pneg %p139
        %p561 = pneg %p136
        %p562 = pneg %p160
        %p563 = pneg %p157
        %p564 = pneg %p181
        %p565 = pneg %p178
        %p566 = pneg %p202
        %p567 = pneg %p199
        %p568 = pneg %p223
        %p569 = pneg %p220
        %p570 = pneg %p244
        %p571 = pneg %p241
        %p572 = pneg %p265
        %p573 = pneg %p262
        %p574 = pneg %p286
        %p575 = pneg %p283
        %p576 = pneg %p307
        %p577 = pneg %p304
        %p578 = pneg %p328
        %p579 = pneg %p325
        %p580 = pneg %p354
        %p581 = pneg %p351
        %s582 = sand.u32 %s341, 1
        %s583 = scalar_lea.sflag [#allocation4], %s582
        %s584 = sand.u32 %s341, 1
        %s585 = smul.addr %s584, 64
        %s586 = scalar_lea.vmem [#allocation14], %s585
        %v587 = vld [vmem:[%s511] sm:$0xf]
        %v588 = vld [vmem:[%s511 + $0x4] sm:$0xf]
        %v589 = vld [vmem:[%s511 + $0x8] sm:$0xf]
        %v590 = vld [vmem:[%s511 + $0xc] sm:$0xf]
        %v591 = vld [vmem:[%s511 + $0x10] sm:$0xf]
        %v592 = vld [vmem:[%s511 + $0x14] sm:$0xf]
        %v593 = vld [vmem:[%s511 + $0x18] sm:$0xf]
        %v594 = vld [vmem:[%s511 + $0x1c] sm:$0xf]
        %v595 = vld [vmem:[%s511 + $0x20] sm:$0xf]
        %v596 = vld [vmem:[%s511 + $0x24] sm:$0xf]
        %v597 = vld [vmem:[%s511 + $0x28] sm:$0xf]
        %v598 = vld [vmem:[%s511 + $0x2c] sm:$0xf]
        %v599 = vld [vmem:[%s511 + $0x30] sm:$0xf]
        %v600 = vld [vmem:[%s511 + $0x34] sm:$0xf]
        %v601 = vld [vmem:[%s511 + $0x38] sm:$0xf]
        %v602 = vld [vmem:[%s511 + $0x3c] sm:$0xf]
        %v603 = vld [vmem:[%s511 + $0x40] sm:$0xf]
        %v604 = vld [vmem:[%s511 + $0x44] sm:$0xf]
        %v605 = vld [vmem:[%s511 + $0x48] sm:$0xf]
        %v606 = vld [vmem:[%s511 + $0x4c] sm:$0xf]
        %v607 = vld [vmem:[%s511 + $0x50] sm:$0xf]
        %v608 = vld [vmem:[%s511 + $0x54] sm:$0xf]
        %v609 = vld [vmem:[%s511 + $0x58] sm:$0xf]
        %v610 = vld [vmem:[%s511 + $0x5c] sm:$0xf]
        %v611 = vld [vmem:[%s511 + $0x60] sm:$0xf]
        %v612 = vld [vmem:[%s511 + $0x64] sm:$0xf]
        %v613 = vld [vmem:[%s511 + $0x68] sm:$0xf]
        %v614 = vld [vmem:[%s511 + $0x6c] sm:$0xf]
        %v615 = vld [vmem:[%s511 + $0x70] sm:$0xf]
        %v616 = vld [vmem:[%s511 + $0x74] sm:$0xf]
        %v617 = vld [vmem:[%s511 + $0x78] sm:$0xf]
        %v618 = vld [vmem:[%s511 + $0x7c] sm:$0xf]
        %v619 = vunpack.c.l.bf16 %v587
        %v620 = vunpack.c.l.bf16 %v588
        %v621 = vunpack.c.l.bf16 %v589
        %v622 = vunpack.c.l.bf16 %v590
        %v623 = vunpack.c.l.bf16 %v591
        %v624 = vunpack.c.l.bf16 %v592
        %v625 = vunpack.c.l.bf16 %v593
        %v626 = vunpack.c.l.bf16 %v594
        %v627 = vunpack.c.l.bf16 %v595
        %v628 = vunpack.c.l.bf16 %v596
        %v629 = vunpack.c.l.bf16 %v597
        %v630 = vunpack.c.l.bf16 %v598
        %v631 = vunpack.c.l.bf16 %v599
        %v632 = vunpack.c.l.bf16 %v600
        %v633 = vunpack.c.l.bf16 %v601
        %v634 = vunpack.c.l.bf16 %v602
        %v635 = vmax.f32 %v619, %v627
        %v636 = vmax.f32 %v620, %v628
        %v637 = vmax.f32 %v621, %v629
        %v638 = vmax.f32 %v622, %v630
        %v639 = vmax.f32 %v623, %v631
        %v640 = vmax.f32 %v624, %v632
        %v641 = vmax.f32 %v625, %v633
        %v642 = vmax.f32 %v626, %v634
        %v643 = vpack.c.bf16 %v635, %v635
        %v644 = vpack.c.bf16 %v636, %v636
        %v645 = vpack.c.bf16 %v637, %v637
        %v646 = vpack.c.bf16 %v638, %v638
        %v647 = vpack.c.bf16 %v639, %v639
        %v648 = vpack.c.bf16 %v640, %v640
        %v649 = vpack.c.bf16 %v641, %v641
        %v650 = vpack.c.bf16 %v642, %v642
        %v651 = vunpack.c.l.bf16 %v603
        %v652 = vunpack.c.l.bf16 %v604
        %v653 = vunpack.c.l.bf16 %v605
        %v654 = vunpack.c.l.bf16 %v606
        %v655 = vunpack.c.l.bf16 %v607
        %v656 = vunpack.c.l.bf16 %v608
        %v657 = vunpack.c.l.bf16 %v609
        %v658 = vunpack.c.l.bf16 %v610
        %v659 = vunpack.c.l.bf16 %v611
        %v660 = vunpack.c.l.bf16 %v612
        %v661 = vunpack.c.l.bf16 %v613
        %v662 = vunpack.c.l.bf16 %v614
        %v663 = vunpack.c.l.bf16 %v615
        %v664 = vunpack.c.l.bf16 %v616
        %v665 = vunpack.c.l.bf16 %v617
        %v666 = vunpack.c.l.bf16 %v618
        %v667 = vmax.f32 %v651, %v659
        %v668 = vmax.f32 %v652, %v660
        %v669 = vmax.f32 %v653, %v661
        %v670 = vmax.f32 %v654, %v662
        %v671 = vmax.f32 %v655, %v663
        %v672 = vmax.f32 %v656, %v664
        %v673 = vmax.f32 %v657, %v665
        %v674 = vmax.f32 %v658, %v666
        %v675 = vpack.c.bf16 %v667, %v667
        %v676 = vpack.c.bf16 %v668, %v668
        %v677 = vpack.c.bf16 %v669, %v669
        %v678 = vpack.c.bf16 %v670, %v670
        %v679 = vpack.c.bf16 %v671, %v671
        %v680 = vpack.c.bf16 %v672, %v672
        %v681 = vpack.c.bf16 %v673, %v673
        %v682 = vpack.c.bf16 %v674, %v674
        %v683 = vunpack.c.l.bf16 %v643
        %v684 = vunpack.c.l.bf16 %v644
        %v685 = vunpack.c.l.bf16 %v645
        %v686 = vunpack.c.l.bf16 %v646
        %v687 = vunpack.c.l.bf16 %v647
        %v688 = vunpack.c.l.bf16 %v648
        %v689 = vunpack.c.l.bf16 %v649
        %v690 = vunpack.c.l.bf16 %v650
        %v691 = vunpack.c.l.bf16 %v675
        %v692 = vunpack.c.l.bf16 %v676
        %v693 = vunpack.c.l.bf16 %v677
        %v694 = vunpack.c.l.bf16 %v678
        %v695 = vunpack.c.l.bf16 %v679
        %v696 = vunpack.c.l.bf16 %v680
        %v697 = vunpack.c.l.bf16 %v681
        %v698 = vunpack.c.l.bf16 %v682
        %v699 = vmax.f32 %v683, %v691
        %v700 = vmax.f32 %v684, %v692
        %v701 = vmax.f32 %v685, %v693
        %v702 = vmax.f32 %v686, %v694
        %v703 = vmax.f32 %v687, %v695
        %v704 = vmax.f32 %v688, %v696
        %v705 = vmax.f32 %v689, %v697
        %v706 = vmax.f32 %v690, %v698
        %v707 = vpack.c.bf16 %v700, %v699
        %v708 = vpack.c.bf16 %v702, %v701
        %v709 = vpack.c.bf16 %v704, %v703
        %v710 = vpack.c.bf16 %v706, %v705
        %v711 = vld [vmem:[#allocation5] sm:$0xff]
        %v712 = vld [vmem:[#allocation5 + $0x8] sm:$0xf]
        %v713 = vld [vmem:[#allocation5 + $0xc] sm:$0xff]
        %v714 = vld [vmem:[#allocation5 + $0x14] sm:$0xf]
        %v715 = vld [vmem:[#allocation5 + $0x18] sm:$0xff]
        %v716 = vld [vmem:[#allocation5 + $0x20] sm:$0xf]
        %v717 = vld [vmem:[#allocation5 + $0x24] sm:$0xff]
        %v718 = vld [vmem:[#allocation5 + $0x2c] sm:$0xf]
        %v719 = vld [vmem:[#allocation5 + $0x30] sm:$0xff]
        %v720 = vld [vmem:[#allocation5 + $0x38] sm:$0xf]
        %v721 = vld [vmem:[#allocation5 + $0x3c] sm:$0xff]
        %v722 = vld [vmem:[#allocation5 + $0x44] sm:$0xf]
        %v723 = vld [vmem:[#allocation5 + $0x48] sm:$0xff]
        %v724 = vld [vmem:[#allocation5 + $0x50] sm:$0xf]
        %v725 = vld [vmem:[#allocation5 + $0x54] sm:$0xff]
        %v726 = vld [vmem:[#allocation5 + $0x5c] sm:$0xf]
        %v727 = vld [vmem:[#allocation5 + $0x60] sm:$0xff]
        %v728 = vld [vmem:[#allocation5 + $0x68] sm:$0xf]
        %v729 = vld [vmem:[#allocation5 + $0x6c] sm:$0xff]
        %v730 = vld [vmem:[#allocation5 + $0x74] sm:$0xf]
        %v731 = vld [vmem:[#allocation5 + $0x78] sm:$0xff]
        %v732 = vld [vmem:[#allocation5 + $0x80] sm:$0xf]
        %v733 = vld [vmem:[#allocation5 + $0x84] sm:$0xff]
        %v734 = vld [vmem:[#allocation5 + $0x8c] sm:$0xf]
        %v735 = vld [vmem:[#allocation5 + $0x90] sm:$0xff]
        %v736 = vld [vmem:[#allocation5 + $0x98] sm:$0xf]
        %v737 = vld [vmem:[#allocation5 + $0x9c] sm:$0xff]
        %v738 = vld [vmem:[#allocation5 + $0xa4] sm:$0xf]
        %v739 = vld [vmem:[#allocation5 + $0xa8] sm:$0xff]
        %v740 = vld [vmem:[#allocation5 + $0xb0] sm:$0xf]
        %v741 = vld [vmem:[#allocation5 + $0xb4] sm:$0xff]
        %v742 = vld [vmem:[#allocation5 + $0xbc] sm:$0xf]
        %v743 = vld [vmem:[%s3] sm:$0x7]
        %v745 = vperm.slane %v743, 0
        %v746 = vperm.slane %v743, 1
        %v747 = vperm.slane %v743, 2
        %v783 = vunpack.c.l.b16 %v711
        %v784 = vunpack.c.h.b16 %v711
        %v785 = vunpack.c.l.b16 %v712
        %v786 = vunpack.c.l.b16 %v713
        %v787 = vunpack.c.h.b16 %v713
        %v788 = vunpack.c.l.b16 %v714
        %v789 = vunpack.c.l.b16 %v715
        %v790 = vunpack.c.h.b16 %v715
        %v791 = vunpack.c.l.b16 %v716
        %v792 = vunpack.c.l.b16 %v717
        %v793 = vunpack.c.h.b16 %v717
        %v794 = vunpack.c.l.b16 %v718
        %v795 = vunpack.c.l.b16 %v719
        %v796 = vunpack.c.h.b16 %v719
        %v797 = vunpack.c.l.b16 %v720
        %v798 = vunpack.c.l.b16 %v721
        %v799 = vunpack.c.h.b16 %v721
        %v800 = vunpack.c.l.b16 %v722
        %v801 = vunpack.c.l.b16 %v723
        %v802 = vunpack.c.h.b16 %v723
        %v803 = vunpack.c.l.b16 %v724
        %v804 = vunpack.c.l.b16 %v725
        %v805 = vunpack.c.h.b16 %v725
        %v806 = vunpack.c.l.b16 %v726
        %v807 = vunpack.c.l.b16 %v727
        %v808 = vunpack.c.h.b16 %v727
        %v809 = vunpack.c.l.b16 %v728
        %v810 = vunpack.c.l.b16 %v729
        %v811 = vunpack.c.h.b16 %v729
        %v812 = vunpack.c.l.b16 %v730
        %v813 = vunpack.c.l.b16 %v731
        %v814 = vunpack.c.h.b16 %v731
        %v815 = vunpack.c.l.b16 %v732
        %v816 = vunpack.c.l.b16 %v733
        %v817 = vunpack.c.h.b16 %v733
        %v818 = vunpack.c.l.b16 %v734
        %v819 = vunpack.c.l.b16 %v735
        %v820 = vunpack.c.h.b16 %v735
        %v821 = vunpack.c.l.b16 %v736
        %v822 = vunpack.c.l.b16 %v737
        %v823 = vunpack.c.h.b16 %v737
        %v824 = vunpack.c.l.b16 %v738
        %v825 = vunpack.c.l.b16 %v739
        %v826 = vunpack.c.h.b16 %v739
        %v827 = vunpack.c.l.b16 %v740
        %v828 = vunpack.c.l.b16 %v741
        %v829 = vunpack.c.h.b16 %v741
        %v830 = vunpack.c.l.b16 %v742
        %v831 = vpack.c.b16 %v786, %v783
        %v832 = vpack.c.b16 %v787, %v784
        %v833 = vpack.c.b16 %v788, %v785
        %v834 = vpack.c.b16 %v792, %v789
        %v835 = vpack.c.b16 %v793, %v790
        %v836 = vpack.c.b16 %v794, %v791
        %v837 = vpack.c.b16 %v798, %v795
        %v838 = vpack.c.b16 %v799, %v796
        %v839 = vpack.c.b16 %v800, %v797
        %v840 = vpack.c.b16 %v804, %v801
        %v841 = vpack.c.b16 %v805, %v802
        %v842 = vpack.c.b16 %v806, %v803
        %v843 = vpack.c.b16 %v810, %v807
        %v844 = vpack.c.b16 %v811, %v808
        %v845 = vpack.c.b16 %v812, %v809
        %v846 = vpack.c.b16 %v816, %v813
        %v847 = vpack.c.b16 %v817, %v814
        %v848 = vpack.c.b16 %v818, %v815
        %v849 = vpack.c.b16 %v822, %v819
        %v850 = vpack.c.b16 %v823, %v820
        %v851 = vpack.c.b16 %v824, %v821
        %v852 = vpack.c.b16 %v828, %v825
        %v853 = vpack.c.b16 %v829, %v826
        %v854 = vpack.c.b16 %v830, %v827
        %879 = vmatpush.bf16.msra.mxu0 %v852
        %880 = vmatpush.bf16.msra.mxu0 %v849
        %881 = vmatpush.bf16.msra.mxu0 %v846
        %882 = vmatpush.bf16.msra.mxu0 %v843
        %883 = vmatpush.bf16.msra.mxu0 %v840
        %884 = vmatpush.bf16.msra.mxu0 %v837
        %885 = vmatpush.bf16.msra.mxu0 %v834
        %886 = vmatpush.bf16.msra.mxu0 %v831
        %887 = vmatmul.bf16.gmra.mxu0 %v707
        %v888 = vpop.f32.mrf.mxu0
        %v889 = vadd.f32 %v745, %v888
        %v890 = vpop.f32.mrf.mxu0
        %v891 = vadd.f32 %v745, %v890
        %892 = vmatmul.bf16.gmra.mxu0 %v708
        %v893 = vpop.f32.mrf.mxu0
        %v894 = vadd.f32 %v745, %v893
        %v895 = vpop.f32.mrf.mxu0
        %v896 = vadd.f32 %v745, %v895
        %897 = vmatmul.bf16.gmra.mxu0 %v709
        %v898 = vpop.f32.mrf.mxu0
        %v899 = vadd.f32 %v745, %v898
        %v900 = vpop.f32.mrf.mxu0
        %v901 = vadd.f32 %v745, %v900
        %902 = vmatmul.bf16.gmra.mxu0 %v710
        %v903 = vpop.f32.mrf.mxu0
        %v904 = vadd.f32 %v745, %v903
        %v905 = vpop.f32.mrf.mxu0
        %v906 = vadd.f32 %v745, %v905
        %907 = vdwg.mxu0
        %908 = vmatpush.bf16.msra.mxu0 %v853
        %909 = vmatpush.bf16.msra.mxu0 %v850
        %910 = vmatpush.bf16.msra.mxu0 %v847
        %911 = vmatpush.bf16.msra.mxu0 %v844
        %912 = vmatpush.bf16.msra.mxu0 %v841
        %913 = vmatpush.bf16.msra.mxu0 %v838
        %914 = vmatpush.bf16.msra.mxu0 %v835
        %915 = vmatpush.bf16.msra.mxu0 %v832
        %916 = vmatmul.bf16.gmra.mxu0 %v707
        %v917 = vpop.f32.mrf.mxu0
        %v918 = vadd.f32 %v746, %v917
        %v919 = vpop.f32.mrf.mxu0
        %v920 = vadd.f32 %v746, %v919
        %921 = vmatmul.bf16.gmra.mxu0 %v708
        %v922 = vpop.f32.mrf.mxu0
        %v923 = vadd.f32 %v746, %v922
        %v924 = vpop.f32.mrf.mxu0
        %v925 = vadd.f32 %v746, %v924
        %926 = vmatmul.bf16.gmra.mxu0 %v709
        %v927 = vpop.f32.mrf.mxu0
        %v928 = vadd.f32 %v746, %v927
        %v929 = vpop.f32.mrf.mxu0
        %v930 = vadd.f32 %v746, %v929
        %931 = vmatmul.bf16.gmra.mxu0 %v710
        %v932 = vpop.f32.mrf.mxu0
        %v933 = vadd.f32 %v746, %v932
        %v934 = vpop.f32.mrf.mxu0
        %v935 = vadd.f32 %v746, %v934
        %936 = vdwg.mxu0
        %937 = vmatpush.bf16.msra.mxu0 %v854
        %938 = vmatpush.bf16.msra.mxu0 %v851
        %939 = vmatpush.bf16.msra.mxu0 %v848
        %940 = vmatpush.bf16.msra.mxu0 %v845
        %941 = vmatpush.bf16.msra.mxu0 %v842
        %942 = vmatpush.bf16.msra.mxu0 %v839
        %943 = vmatpush.bf16.msra.mxu0 %v836
        %944 = vmatpush.bf16.msra.mxu0 %v833
        %945 = vmatmul.bf16.gmra.mxu0 %v707
        %v946 = vpop.f32.mrf.mxu0
        %v947 = vadd.f32 %v747, %v946
        %v948 = vpop.f32.mrf.mxu0
        %v949 = vadd.f32 %v747, %v948
        %950 = vmatmul.bf16.gmra.mxu0 %v708
        %v951 = vpop.f32.mrf.mxu0
        %v952 = vadd.f32 %v747, %v951
        %v953 = vpop.f32.mrf.mxu0
        %v954 = vadd.f32 %v747, %v953
        %955 = vmatmul.bf16.gmra.mxu0 %v709
        %v956 = vpop.f32.mrf.mxu0
        %v957 = vadd.f32 %v747, %v956
        %v958 = vpop.f32.mrf.mxu0
        %v959 = vadd.f32 %v747, %v958
        %960 = vmatmul.bf16.gmra.mxu0 %v710
        %v961 = vpop.f32.mrf.mxu0
        %v962 = vadd.f32 %v747, %v961
        %v963 = vpop.f32.mrf.mxu0
        %v964 = vadd.f32 %v747, %v963
        %965 = vdwg.mxu0
        %v966 = vmax.f32 %v889, 0.0
        %v967 = vmax.f32 %v918, 0.0
        %v968 = vmax.f32 %v947, 0.0
        %v969 = vmax.f32 %v891, 0.0
        %v970 = vmax.f32 %v920, 0.0
        %v971 = vmax.f32 %v949, 0.0
        %v972 = vmax.f32 %v894, 0.0
        %v973 = vmax.f32 %v923, 0.0
        %v974 = vmax.f32 %v952, 0.0
        %v975 = vmax.f32 %v896, 0.0
        %v976 = vmax.f32 %v925, 0.0
        %v977 = vmax.f32 %v954, 0.0
        %v978 = vmax.f32 %v899, 0.0
        %v979 = vmax.f32 %v928, 0.0
        %v980 = vmax.f32 %v957, 0.0
        %v981 = vmax.f32 %v901, 0.0
        %v982 = vmax.f32 %v930, 0.0
        %v983 = vmax.f32 %v959, 0.0
        %v984 = vmax.f32 %v904, 0.0
        %v985 = vmax.f32 %v933, 0.0
        %v986 = vmax.f32 %v962, 0.0
        %v987 = vmax.f32 %v906, 0.0
        %v988 = vmax.f32 %v935, 0.0
        %v989 = vmax.f32 %v964, 0.0
        %vm992 = vcmask 1040384
        %v993 = vrot.slane %v985, 7
        %v994 = vrot.slane %v988, 7
        %v995 = vsel %vm992, %v993, %v994
        %v1004 = vrot.slane %v967, 7
        %v1005 = vrot.slane %v970, 7
        %v1006 = vsel %vm992, %v1004, %v1005
        %v1007 = vrot.slane %v973, 7
        %v1008 = vsel %vm992, %v1005, %v1007
        %v1009 = vrot.slane %v976, 7
        %v1010 = vsel %vm992, %v1007, %v1009
        %v1011 = vrot.slane %v979, 7
        %v1012 = vsel %vm992, %v1009, %v1011
        %v1013 = vrot.slane %v982, 7
        %v1014 = vsel %vm992, %v1011, %v1013
        %v1015 = vsel %vm992, %v1013, %v993
        %v1023 = vsel %vm992, %v994, %v1004
        %v1024 = vld [vmem:[%s1] sm:$0xff]
        %v1025 = vld [vmem:[%s1 + $0x8] sm:$0xff]
        %v1026 = vld [vmem:[%s1 + $0x10] sm:$0xff]
        %v1027 = vld [vmem:[%s1 + $0x18] sm:$0xff]
        %v1028 = vld [vmem:[%s1 + $0x20] sm:$0xff]
        %v1029 = vld [vmem:[%s1 + $0x28] sm:$0xff]
        %v1030 = vld [vmem:[%s1 + $0x30] sm:$0xff]
        %v1031 = vld [vmem:[%s1 + $0x38] sm:$0xff]
        %1033 = vset.pattern.permute.xlu0 0
        %1034 = vperm.xlu0 %1033, %v1024
        %v1035 = vpop.permute.xlu0 %1034
        %1038 = vset.pattern.permute.xlu0 0
        %1039 = vperm.xlu0 %1038, %v1025
        %v1040 = vpop.permute.xlu0 %1039
        %1043 = vset.pattern.permute.xlu0 0
        %1044 = vperm.xlu0 %1043, %v1026
        %v1045 = vpop.permute.xlu0 %1044
        %1048 = vset.pattern.permute.xlu0 0
        %1049 = vperm.xlu0 %1048, %v1027
        %v1050 = vpop.permute.xlu0 %1049
        %1053 = vset.pattern.permute.xlu0 0
        %1054 = vperm.xlu0 %1053, %v1028
        %v1055 = vpop.permute.xlu0 %1054
        %1058 = vset.pattern.permute.xlu0 0
        %1059 = vperm.xlu0 %1058, %v1029
        %v1060 = vpop.permute.xlu0 %1059
        %1063 = vset.pattern.permute.xlu0 0
        %1064 = vperm.xlu0 %1063, %v1030
        %v1065 = vpop.permute.xlu0 %1064
        %1068 = vset.pattern.permute.xlu0 0
        %1069 = vperm.xlu0 %1068, %v1031
        %v1070 = vpop.permute.xlu0 %1069
        %v1072 = vmul.f32 %v995, %v1035
        %v1073 = vmul.f32 %v1023, %v1040
        %v1074 = vmul.f32 %v1006, %v1045
        %v1075 = vmul.f32 %v1008, %v1050
        %v1076 = vmul.f32 %v1010, %v1055
        %v1077 = vmul.f32 %v1012, %v1060
        %v1078 = vmul.f32 %v1014, %v1065
        %v1079 = vmul.f32 %v1015, %v1070
        %v1080 = vpack.c.bf16 %v1073, %v1072
        %v1081 = vpack.c.bf16 %v1075, %v1074
        %v1082 = vpack.c.bf16 %v1077, %v1076
        %v1083 = vpack.c.bf16 %v1079, %v1078
        %v1084 = vld [vmem:[%s4] sm:$0xf]
        %v1085 = vld [vmem:[%s4 + $0x4] sm:$0xf]
        %v1086 = vld [vmem:[%s4 + $0x8] sm:$0xf]
        %v1087 = vld [vmem:[%s4 + $0xc] sm:$0xf]
        %v1088 = vld [vmem:[%s4 + $0x10] sm:$0xf]
        %v1089 = vld [vmem:[%s4 + $0x14] sm:$0xf]
        %v1090 = vld [vmem:[%s4 + $0x18] sm:$0xf]
        %v1091 = vld [vmem:[%s4 + $0x1c] sm:$0xf]
        %v1092 = vld [vmem:[%s4 + $0x20] sm:$0xf]
        %v1093 = vld [vmem:[%s4 + $0x24] sm:$0xf]
        %v1094 = vld [vmem:[%s4 + $0x28] sm:$0xf]
        %v1095 = vld [vmem:[%s4 + $0x2c] sm:$0xf]
        %v1096 = vld [vmem:[%s4 + $0x30] sm:$0xf]
        %v1097 = vld [vmem:[%s4 + $0x34] sm:$0xf]
        %v1098 = vld [vmem:[%s4 + $0x38] sm:$0xf]
        %v1099 = vld [vmem:[%s4 + $0x3c] sm:$0xf]
        %s1100 = scalar_lea.vmem %s1, 64
        %v1101 = vld [vmem:[%s1100] sm:$0xff]
        %v1102 = vld [vmem:[%s1100 + $0x8] sm:$0xff]
        %v1103 = vld [vmem:[%s1100 + $0x10] sm:$0xff]
        %v1104 = vld [vmem:[%s1100 + $0x18] sm:$0xff]
        %v1105 = vld [vmem:[%s1100 + $0x20] sm:$0xff]
        %v1106 = vld [vmem:[%s1100 + $0x28] sm:$0xff]
        %v1107 = vld [vmem:[%s1100 + $0x30] sm:$0xff]
        %v1108 = vld [vmem:[%s1100 + $0x38] sm:$0xff]
        %1110 = vset.pattern.permute.xlu0 0
        %1111 = vperm.xlu0 %1110, %v1101
        %v1112 = vpop.permute.xlu0 %1111
        %1115 = vset.pattern.permute.xlu0 0
        %1116 = vperm.xlu0 %1115, %v1102
        %v1117 = vpop.permute.xlu0 %1116
        %1120 = vset.pattern.permute.xlu0 0
        %1121 = vperm.xlu0 %1120, %v1103
        %v1122 = vpop.permute.xlu0 %1121
        %1125 = vset.pattern.permute.xlu0 0
        %1126 = vperm.xlu0 %1125, %v1104
        %v1127 = vpop.permute.xlu0 %1126
        %1130 = vset.pattern.permute.xlu0 0
        %1131 = vperm.xlu0 %1130, %v1105
        %v1132 = vpop.permute.xlu0 %1131
        %1135 = vset.pattern.permute.xlu0 0
        %1136 = vperm.xlu0 %1135, %v1106
        %v1137 = vpop.permute.xlu0 %1136
        %1140 = vset.pattern.permute.xlu0 0
        %1141 = vperm.xlu0 %1140, %v1107
        %v1142 = vpop.permute.xlu0 %1141
        %1145 = vset.pattern.permute.xlu0 0
        %1146 = vperm.xlu0 %1145, %v1108
        %v1147 = vpop.permute.xlu0 %1146
        %v1149 = vmul.f32 %v988, %v1112
        %v1150 = vmul.f32 %v967, %v1117
        %v1151 = vmul.f32 %v970, %v1122
        %v1152 = vmul.f32 %v973, %v1127
        %v1153 = vmul.f32 %v976, %v1132
        %v1154 = vmul.f32 %v979, %v1137
        %v1155 = vmul.f32 %v982, %v1142
        %v1156 = vmul.f32 %v985, %v1147
        %v1157 = vpack.c.bf16 %v1150, %v1149
        %v1158 = vpack.c.bf16 %v1152, %v1151
        %v1159 = vpack.c.bf16 %v1154, %v1153
        %v1160 = vpack.c.bf16 %v1156, %v1155
        %s1161 = scalar_lea.vmem %s4, 64
        %v1162 = vld [vmem:[%s1161] sm:$0xf]
        %v1163 = vld [vmem:[%s1161 + $0x4] sm:$0xf]
        %v1164 = vld [vmem:[%s1161 + $0x8] sm:$0xf]
        %v1165 = vld [vmem:[%s1161 + $0xc] sm:$0xf]
        %v1166 = vld [vmem:[%s1161 + $0x10] sm:$0xf]
        %v1167 = vld [vmem:[%s1161 + $0x14] sm:$0xf]
        %v1168 = vld [vmem:[%s1161 + $0x18] sm:$0xf]
        %v1169 = vld [vmem:[%s1161 + $0x1c] sm:$0xf]
        %v1170 = vld [vmem:[%s1161 + $0x20] sm:$0xf]
        %v1171 = vld [vmem:[%s1161 + $0x24] sm:$0xf]
        %v1172 = vld [vmem:[%s1161 + $0x28] sm:$0xf]
        %v1173 = vld [vmem:[%s1161 + $0x2c] sm:$0xf]
        %v1174 = vld [vmem:[%s1161 + $0x30] sm:$0xf]
        %v1175 = vld [vmem:[%s1161 + $0x34] sm:$0xf]
        %v1176 = vld [vmem:[%s1161 + $0x38] sm:$0xf]
        %v1177 = vld [vmem:[%s1161 + $0x3c] sm:$0xf]
        %v1194 = vunpack.c.l.b16 %v1162
        %v1195 = vunpack.c.l.b16 %v1163
        %v1196 = vunpack.c.l.b16 %v1164
        %v1197 = vunpack.c.l.b16 %v1165
        %v1198 = vunpack.c.l.b16 %v1166
        %v1199 = vunpack.c.l.b16 %v1167
        %v1200 = vunpack.c.l.b16 %v1168
        %v1201 = vunpack.c.l.b16 %v1169
        %v1202 = vunpack.c.l.b16 %v1170
        %v1203 = vunpack.c.l.b16 %v1171
        %v1204 = vunpack.c.l.b16 %v1172
        %v1205 = vunpack.c.l.b16 %v1173
        %v1206 = vunpack.c.l.b16 %v1174
        %v1207 = vunpack.c.l.b16 %v1175
        %v1208 = vunpack.c.l.b16 %v1176
        %v1209 = vunpack.c.l.b16 %v1177
        %v1210 = vpack.c.b16 %v1195, %v1194
        %v1211 = vpack.c.b16 %v1197, %v1196
        %v1212 = vpack.c.b16 %v1199, %v1198
        %v1213 = vpack.c.b16 %v1201, %v1200
        %v1214 = vpack.c.b16 %v1203, %v1202
        %v1215 = vpack.c.b16 %v1205, %v1204
        %v1216 = vpack.c.b16 %v1207, %v1206
        %v1217 = vpack.c.b16 %v1209, %v1208
        %1226 = vmatpush.bf16.msra.mxu0 %v1217
        %1227 = vmatpush.bf16.msra.mxu0 %v1216
        %1228 = vmatpush.bf16.msra.mxu0 %v1215
        %1229 = vmatpush.bf16.msra.mxu0 %v1214
        %1230 = vmatpush.bf16.msra.mxu0 %v1213
        %1231 = vmatpush.bf16.msra.mxu0 %v1212
        %1232 = vmatpush.bf16.msra.mxu0 %v1211
        %1233 = vmatpush.bf16.msra.mxu0 %v1210
        %1234 = vmatmul.bf16.gmra.mxu0 %v1157
        %v1235 = vpop.f32.mrf.mxu0
        %v1236 = vadd.f32 0.0, %v1235
        %v1237 = vpop.f32.mrf.mxu0
        %v1238 = vadd.f32 0.0, %v1237
        %1239 = vmatmul.bf16.gmra.mxu0 %v1158
        %v1240 = vpop.f32.mrf.mxu0
        %v1241 = vadd.f32 0.0, %v1240
        %v1242 = vpop.f32.mrf.mxu0
        %v1243 = vadd.f32 0.0, %v1242
        %1244 = vmatmul.bf16.gmra.mxu0 %v1159
        %v1245 = vpop.f32.mrf.mxu0
        %v1246 = vadd.f32 0.0, %v1245
        %v1247 = vpop.f32.mrf.mxu0
        %v1248 = vadd.f32 0.0, %v1247
        %1249 = vmatmul.bf16.gmra.mxu0 %v1160
        %v1250 = vpop.f32.mrf.mxu0
        %v1251 = vadd.f32 0.0, %v1250
        %v1252 = vpop.f32.mrf.mxu0
        %v1253 = vadd.f32 0.0, %v1252
        %1254 = vdwg.mxu0
        %v1271 = vunpack.c.l.b16 %v1084
        %v1272 = vunpack.c.l.b16 %v1085
        %v1273 = vunpack.c.l.b16 %v1086
        %v1274 = vunpack.c.l.b16 %v1087
        %v1275 = vunpack.c.l.b16 %v1088
        %v1276 = vunpack.c.l.b16 %v1089
        %v1277 = vunpack.c.l.b16 %v1090
        %v1278 = vunpack.c.l.b16 %v1091
        %v1279 = vunpack.c.l.b16 %v1092
        %v1280 = vunpack.c.l.b16 %v1093
        %v1281 = vunpack.c.l.b16 %v1094
        %v1282 = vunpack.c.l.b16 %v1095
        %v1283 = vunpack.c.l.b16 %v1096
        %v1284 = vunpack.c.l.b16 %v1097
        %v1285 = vunpack.c.l.b16 %v1098
        %v1286 = vunpack.c.l.b16 %v1099
        %v1287 = vpack.c.b16 %v1272, %v1271
        %v1288 = vpack.c.b16 %v1274, %v1273
        %v1289 = vpack.c.b16 %v1276, %v1275
        %v1290 = vpack.c.b16 %v1278, %v1277
        %v1291 = vpack.c.b16 %v1280, %v1279
        %v1292 = vpack.c.b16 %v1282, %v1281
        %v1293 = vpack.c.b16 %v1284, %v1283
        %v1294 = vpack.c.b16 %v1286, %v1285
        %1303 = vmatpush.bf16.msra.mxu0 %v1294
        %1304 = vmatpush.bf16.msra.mxu0 %v1293
        %1305 = vmatpush.bf16.msra.mxu0 %v1292
        %1306 = vmatpush.bf16.msra.mxu0 %v1291
        %1307 = vmatpush.bf16.msra.mxu0 %v1290
        %1308 = vmatpush.bf16.msra.mxu0 %v1289
        %1309 = vmatpush.bf16.msra.mxu0 %v1288
        %1310 = vmatpush.bf16.msra.mxu0 %v1287
        %1311 = vmatmul.bf16.gmra.mxu0 %v1080
        %v1312 = vpop.f32.mrf.mxu0
        %v1313 = vadd.f32 %v1236, %v1312
        %v1314 = vpop.f32.mrf.mxu0
        %v1315 = vadd.f32 %v1238, %v1314
        %1316 = vmatmul.bf16.gmra.mxu0 %v1081
        %v1317 = vpop.f32.mrf.mxu0
        %v1318 = vadd.f32 %v1241, %v1317
        %v1319 = vpop.f32.mrf.mxu0
        %v1320 = vadd.f32 %v1243, %v1319
        %1321 = vmatmul.bf16.gmra.mxu0 %v1082
        %v1322 = vpop.f32.mrf.mxu0
        %v1323 = vadd.f32 %v1246, %v1322
        %v1324 = vpop.f32.mrf.mxu0
        %v1325 = vadd.f32 %v1248, %v1324
        %1326 = vmatmul.bf16.gmra.mxu0 %v1083
        %v1327 = vpop.f32.mrf.mxu0
        %v1328 = vadd.f32 %v1251, %v1327
        %v1329 = vpop.f32.mrf.mxu0
        %v1330 = vadd.f32 %v1253, %v1329
        %1331 = vdwg.mxu0
        %v1332 = vrot.slane %v988, 1
        %vm1334 = vcmask 1046528
        %v1335 = vrot.slane %v967, 1
        %v1336 = vrot.slane %v970, 1
        %v1337 = vsel %vm1334, %v1335, %v1336
        %v1338 = vrot.slane %v973, 1
        %v1339 = vsel %vm1334, %v1336, %v1338
        %v1340 = vrot.slane %v976, 1
        %v1341 = vsel %vm1334, %v1338, %v1340
        %v1342 = vrot.slane %v979, 1
        %v1343 = vsel %vm1334, %v1340, %v1342
        %v1344 = vrot.slane %v982, 1
        %v1345 = vsel %vm1334, %v1342, %v1344
        %v1346 = vrot.slane %v985, 1
        %v1347 = vsel %vm1334, %v1344, %v1346
        %v1348 = vsel %vm1334, %v1346, %v1332
        %v1357 = vsel %vm1334, %v1332, %v1335
        %s1358 = scalar_lea.vmem %s1, 128
        %v1359 = vld [vmem:[%s1358] sm:$0xff]
        %v1360 = vld [vmem:[%s1358 + $0x8] sm:$0xff]
        %v1361 = vld [vmem:[%s1358 + $0x10] sm:$0xff]
        %v1362 = vld [vmem:[%s1358 + $0x18] sm:$0xff]
        %v1363 = vld [vmem:[%s1358 + $0x20] sm:$0xff]
        %v1364 = vld [vmem:[%s1358 + $0x28] sm:$0xff]
        %v1365 = vld [vmem:[%s1358 + $0x30] sm:$0xff]
        %v1366 = vld [vmem:[%s1358 + $0x38] sm:$0xff]
        %1368 = vset.pattern.permute.xlu0 0
        %1369 = vperm.xlu0 %1368, %v1359
        %v1370 = vpop.permute.xlu0 %1369
        %1373 = vset.pattern.permute.xlu0 0
        %1374 = vperm.xlu0 %1373, %v1360
        %v1375 = vpop.permute.xlu0 %1374
        %1378 = vset.pattern.permute.xlu0 0
        %1379 = vperm.xlu0 %1378, %v1361
        %v1380 = vpop.permute.xlu0 %1379
        %1383 = vset.pattern.permute.xlu0 0
        %1384 = vperm.xlu0 %1383, %v1362
        %v1385 = vpop.permute.xlu0 %1384
        %1388 = vset.pattern.permute.xlu0 0
        %1389 = vperm.xlu0 %1388, %v1363
        %v1390 = vpop.permute.xlu0 %1389
        %1393 = vset.pattern.permute.xlu0 0
        %1394 = vperm.xlu0 %1393, %v1364
        %v1395 = vpop.permute.xlu0 %1394
        %1398 = vset.pattern.permute.xlu0 0
        %1399 = vperm.xlu0 %1398, %v1365
        %v1400 = vpop.permute.xlu0 %1399
        %1403 = vset.pattern.permute.xlu0 0
        %1404 = vperm.xlu0 %1403, %v1366
        %v1405 = vpop.permute.xlu0 %1404
        %v1407 = vmul.f32 %v1357, %v1370
        %v1408 = vmul.f32 %v1337, %v1375
        %v1409 = vmul.f32 %v1339, %v1380
        %v1410 = vmul.f32 %v1341, %v1385
        %v1411 = vmul.f32 %v1343, %v1390
        %v1412 = vmul.f32 %v1345, %v1395
        %v1413 = vmul.f32 %v1347, %v1400
        %v1414 = vmul.f32 %v1348, %v1405
        %v1415 = vpack.c.bf16 %v1408, %v1407
        %v1416 = vpack.c.bf16 %v1410, %v1409
        %v1417 = vpack.c.bf16 %v1412, %v1411
        %v1418 = vpack.c.bf16 %v1414, %v1413
        %s1419 = scalar_lea.vmem %s4, 128
        %v1420 = vld [vmem:[%s1419] sm:$0xf]
        %v1421 = vld [vmem:[%s1419 + $0x4] sm:$0xf]
        %v1422 = vld [vmem:[%s1419 + $0x8] sm:$0xf]
        %v1423 = vld [vmem:[%s1419 + $0xc] sm:$0xf]
        %v1424 = vld [vmem:[%s1419 + $0x10] sm:$0xf]
        %v1425 = vld [vmem:[%s1419 + $0x14] sm:$0xf]
        %v1426 = vld [vmem:[%s1419 + $0x18] sm:$0xf]
        %v1427 = vld [vmem:[%s1419 + $0x1c] sm:$0xf]
        %v1428 = vld [vmem:[%s1419 + $0x20] sm:$0xf]
        %v1429 = vld [vmem:[%s1419 + $0x24] sm:$0xf]
        %v1430 = vld [vmem:[%s1419 + $0x28] sm:$0xf]
        %v1431 = vld [vmem:[%s1419 + $0x2c] sm:$0xf]
        %v1432 = vld [vmem:[%s1419 + $0x30] sm:$0xf]
        %v1433 = vld [vmem:[%s1419 + $0x34] sm:$0xf]
        %v1434 = vld [vmem:[%s1419 + $0x38] sm:$0xf]
        %v1435 = vld [vmem:[%s1419 + $0x3c] sm:$0xf]
        %v1452 = vunpack.c.l.b16 %v1420
        %v1453 = vunpack.c.l.b16 %v1421
        %v1454 = vunpack.c.l.b16 %v1422
        %v1455 = vunpack.c.l.b16 %v1423
        %v1456 = vunpack.c.l.b16 %v1424
        %v1457 = vunpack.c.l.b16 %v1425
        %v1458 = vunpack.c.l.b16 %v1426
        %v1459 = vunpack.c.l.b16 %v1427
        %v1460 = vunpack.c.l.b16 %v1428
        %v1461 = vunpack.c.l.b16 %v1429
        %v1462 = vunpack.c.l.b16 %v1430
        %v1463 = vunpack.c.l.b16 %v1431
        %v1464 = vunpack.c.l.b16 %v1432
        %v1465 = vunpack.c.l.b16 %v1433
        %v1466 = vunpack.c.l.b16 %v1434
        %v1467 = vunpack.c.l.b16 %v1435
        %v1468 = vpack.c.b16 %v1453, %v1452
        %v1469 = vpack.c.b16 %v1455, %v1454
        %v1470 = vpack.c.b16 %v1457, %v1456
        %v1471 = vpack.c.b16 %v1459, %v1458
        %v1472 = vpack.c.b16 %v1461, %v1460
        %v1473 = vpack.c.b16 %v1463, %v1462
        %v1474 = vpack.c.b16 %v1465, %v1464
        %v1475 = vpack.c.b16 %v1467, %v1466
        %1484 = vmatpush.bf16.msra.mxu0 %v1475
        %1485 = vmatpush.bf16.msra.mxu0 %v1474
        %1486 = vmatpush.bf16.msra.mxu0 %v1473
        %1487 = vmatpush.bf16.msra.mxu0 %v1472
        %1488 = vmatpush.bf16.msra.mxu0 %v1471
        %1489 = vmatpush.bf16.msra.mxu0 %v1470
        %1490 = vmatpush.bf16.msra.mxu0 %v1469
        %1491 = vmatpush.bf16.msra.mxu0 %v1468
        %1492 = vmatmul.bf16.gmra.mxu0 %v1415
        %v1493 = vpop.f32.mrf.mxu0
        %v1494 = vadd.f32 0.0, %v1493
        %v1495 = vpop.f32.mrf.mxu0
        %v1496 = vadd.f32 0.0, %v1495
        %1497 = vmatmul.bf16.gmra.mxu0 %v1416
        %v1498 = vpop.f32.mrf.mxu0
        %v1499 = vadd.f32 0.0, %v1498
        %v1500 = vpop.f32.mrf.mxu0
        %v1501 = vadd.f32 0.0, %v1500
        %1502 = vmatmul.bf16.gmra.mxu0 %v1417
        %v1503 = vpop.f32.mrf.mxu0
        %v1504 = vadd.f32 0.0, %v1503
        %v1505 = vpop.f32.mrf.mxu0
        %v1506 = vadd.f32 0.0, %v1505
        %1507 = vmatmul.bf16.gmra.mxu0 %v1418
        %v1508 = vpop.f32.mrf.mxu0
        %v1509 = vadd.f32 0.0, %v1508
        %v1510 = vpop.f32.mrf.mxu0
        %v1511 = vadd.f32 0.0, %v1510
        %1512 = vdwg.mxu0
        %v1513 = vadd.f32 %v1313, %v1494
        %v1514 = vadd.f32 %v1315, %v1496
        %v1515 = vadd.f32 %v1318, %v1499
        %v1516 = vadd.f32 %v1320, %v1501
        %v1517 = vadd.f32 %v1323, %v1504
        %v1518 = vadd.f32 %v1325, %v1506
        %v1519 = vadd.f32 %v1328, %v1509
        %v1520 = vadd.f32 %v1330, %v1511
        %s1521 = scalar_lea.vmem %s1, 192
        %v1522 = vld [vmem:[%s1521] sm:$0xff]
        %v1523 = vld [vmem:[%s1521 + $0x8] sm:$0xff]
        %v1524 = vld [vmem:[%s1521 + $0x10] sm:$0xff]
        %v1525 = vld [vmem:[%s1521 + $0x18] sm:$0xff]
        %v1526 = vld [vmem:[%s1521 + $0x20] sm:$0xff]
        %v1527 = vld [vmem:[%s1521 + $0x28] sm:$0xff]
        %v1528 = vld [vmem:[%s1521 + $0x30] sm:$0xff]
        %v1529 = vld [vmem:[%s1521 + $0x38] sm:$0xff]
        %1531 = vset.pattern.permute.xlu0 0
        %1532 = vperm.xlu0 %1531, %v1522
        %v1533 = vpop.permute.xlu0 %1532
        %1536 = vset.pattern.permute.xlu0 0
        %1537 = vperm.xlu0 %1536, %v1523
        %v1538 = vpop.permute.xlu0 %1537
        %1541 = vset.pattern.permute.xlu0 0
        %1542 = vperm.xlu0 %1541, %v1524
        %v1543 = vpop.permute.xlu0 %1542
        %1546 = vset.pattern.permute.xlu0 0
        %1547 = vperm.xlu0 %1546, %v1525
        %v1548 = vpop.permute.xlu0 %1547
        %1551 = vset.pattern.permute.xlu0 0
        %1552 = vperm.xlu0 %1551, %v1526
        %v1553 = vpop.permute.xlu0 %1552
        %1556 = vset.pattern.permute.xlu0 0
        %1557 = vperm.xlu0 %1556, %v1527
        %v1558 = vpop.permute.xlu0 %1557
        %1561 = vset.pattern.permute.xlu0 0
        %1562 = vperm.xlu0 %1561, %v1528
        %v1563 = vpop.permute.xlu0 %1562
        %1566 = vset.pattern.permute.xlu0 0
        %1567 = vperm.xlu0 %1566, %v1529
        %v1568 = vpop.permute.xlu0 %1567
        %v1570 = vmul.f32 %v1023, %v1533
        %v1571 = vmul.f32 %v1006, %v1538
        %v1572 = vmul.f32 %v1008, %v1543
        %v1573 = vmul.f32 %v1010, %v1548
        %v1574 = vmul.f32 %v1012, %v1553
        %v1575 = vmul.f32 %v1014, %v1558
        %v1576 = vmul.f32 %v1015, %v1563
        %v1577 = vmul.f32 %v995, %v1568
        %v1578 = vpack.c.bf16 %v1571, %v1570
        %v1579 = vpack.c.bf16 %v1573, %v1572
        %v1580 = vpack.c.bf16 %v1575, %v1574
        %v1581 = vpack.c.bf16 %v1577, %v1576
        %s1582 = scalar_lea.vmem %s4, 192
        %v1583 = vld [vmem:[%s1582] sm:$0xf]
        %v1584 = vld [vmem:[%s1582 + $0x4] sm:$0xf]
        %v1585 = vld [vmem:[%s1582 + $0x8] sm:$0xf]
        %v1586 = vld [vmem:[%s1582 + $0xc] sm:$0xf]
        %v1587 = vld [vmem:[%s1582 + $0x10] sm:$0xf]
        %v1588 = vld [vmem:[%s1582 + $0x14] sm:$0xf]
        %v1589 = vld [vmem:[%s1582 + $0x18] sm:$0xf]
        %v1590 = vld [vmem:[%s1582 + $0x1c] sm:$0xf]
        %v1591 = vld [vmem:[%s1582 + $0x20] sm:$0xf]
        %v1592 = vld [vmem:[%s1582 + $0x24] sm:$0xf]
        %v1593 = vld [vmem:[%s1582 + $0x28] sm:$0xf]
        %v1594 = vld [vmem:[%s1582 + $0x2c] sm:$0xf]
        %v1595 = vld [vmem:[%s1582 + $0x30] sm:$0xf]
        %v1596 = vld [vmem:[%s1582 + $0x34] sm:$0xf]
        %v1597 = vld [vmem:[%s1582 + $0x38] sm:$0xf]
        %v1598 = vld [vmem:[%s1582 + $0x3c] sm:$0xf]
        %v1615 = vunpack.c.l.b16 %v1583
        %v1616 = vunpack.c.l.b16 %v1584
        %v1617 = vunpack.c.l.b16 %v1585
        %v1618 = vunpack.c.l.b16 %v1586
        %v1619 = vunpack.c.l.b16 %v1587
        %v1620 = vunpack.c.l.b16 %v1588
        %v1621 = vunpack.c.l.b16 %v1589
        %v1622 = vunpack.c.l.b16 %v1590
        %v1623 = vunpack.c.l.b16 %v1591
        %v1624 = vunpack.c.l.b16 %v1592
        %v1625 = vunpack.c.l.b16 %v1593
        %v1626 = vunpack.c.l.b16 %v1594
        %v1627 = vunpack.c.l.b16 %v1595
        %v1628 = vunpack.c.l.b16 %v1596
        %v1629 = vunpack.c.l.b16 %v1597
        %v1630 = vunpack.c.l.b16 %v1598
        %v1631 = vpack.c.b16 %v1616, %v1615
        %v1632 = vpack.c.b16 %v1618, %v1617
        %v1633 = vpack.c.b16 %v1620, %v1619
        %v1634 = vpack.c.b16 %v1622, %v1621
        %v1635 = vpack.c.b16 %v1624, %v1623
        %v1636 = vpack.c.b16 %v1626, %v1625
        %v1637 = vpack.c.b16 %v1628, %v1627
        %v1638 = vpack.c.b16 %v1630, %v1629
        %1647 = vmatpush.bf16.msra.mxu0 %v1638
        %1648 = vmatpush.bf16.msra.mxu0 %v1637
        %1649 = vmatpush.bf16.msra.mxu0 %v1636
        %1650 = vmatpush.bf16.msra.mxu0 %v1635
        %1651 = vmatpush.bf16.msra.mxu0 %v1634
        %1652 = vmatpush.bf16.msra.mxu0 %v1633
        %1653 = vmatpush.bf16.msra.mxu0 %v1632
        %1654 = vmatpush.bf16.msra.mxu0 %v1631
        %1655 = vmatmul.bf16.gmra.mxu0 %v1578
        %v1656 = vpop.f32.mrf.mxu0
        %v1657 = vadd.f32 0.0, %v1656
        %v1658 = vpop.f32.mrf.mxu0
        %v1659 = vadd.f32 0.0, %v1658
        %1660 = vmatmul.bf16.gmra.mxu0 %v1579
        %v1661 = vpop.f32.mrf.mxu0
        %v1662 = vadd.f32 0.0, %v1661
        %v1663 = vpop.f32.mrf.mxu0
        %v1664 = vadd.f32 0.0, %v1663
        %1665 = vmatmul.bf16.gmra.mxu0 %v1580
        %v1666 = vpop.f32.mrf.mxu0
        %v1667 = vadd.f32 0.0, %v1666
        %v1668 = vpop.f32.mrf.mxu0
        %v1669 = vadd.f32 0.0, %v1668
        %1670 = vmatmul.bf16.gmra.mxu0 %v1581
        %v1671 = vpop.f32.mrf.mxu0
        %v1672 = vadd.f32 0.0, %v1671
        %v1673 = vpop.f32.mrf.mxu0
        %v1674 = vadd.f32 0.0, %v1673
        %1675 = vdwg.mxu0
        %v1676 = vadd.f32 %v1513, %v1657
        %v1677 = vadd.f32 %v1514, %v1659
        %v1678 = vadd.f32 %v1515, %v1662
        %v1679 = vadd.f32 %v1516, %v1664
        %v1680 = vadd.f32 %v1517, %v1667
        %v1681 = vadd.f32 %v1518, %v1669
        %v1682 = vadd.f32 %v1519, %v1672
        %v1683 = vadd.f32 %v1520, %v1674
        %v1684 = vpack.c.bf16 %v970, %v967
        %v1685 = vpack.c.bf16 %v976, %v973
        %v1686 = vpack.c.bf16 %v982, %v979
        %v1687 = vpack.c.bf16 %v988, %v985
        %s1688 = scalar_lea.vmem %s4, 256
        %v1689 = vld [vmem:[%s1688] sm:$0xf]
        %v1690 = vld [vmem:[%s1688 + $0x4] sm:$0xf]
        %v1691 = vld [vmem:[%s1688 + $0x8] sm:$0xf]
        %v1692 = vld [vmem:[%s1688 + $0xc] sm:$0xf]
        %v1693 = vld [vmem:[%s1688 + $0x10] sm:$0xf]
        %v1694 = vld [vmem:[%s1688 + $0x14] sm:$0xf]
        %v1695 = vld [vmem:[%s1688 + $0x18] sm:$0xf]
        %v1696 = vld [vmem:[%s1688 + $0x1c] sm:$0xf]
        %v1697 = vld [vmem:[%s1688 + $0x20] sm:$0xf]
        %v1698 = vld [vmem:[%s1688 + $0x24] sm:$0xf]
        %v1699 = vld [vmem:[%s1688 + $0x28] sm:$0xf]
        %v1700 = vld [vmem:[%s1688 + $0x2c] sm:$0xf]
        %v1701 = vld [vmem:[%s1688 + $0x30] sm:$0xf]
        %v1702 = vld [vmem:[%s1688 + $0x34] sm:$0xf]
        %v1703 = vld [vmem:[%s1688 + $0x38] sm:$0xf]
        %v1704 = vld [vmem:[%s1688 + $0x3c] sm:$0xf]
        %v1721 = vunpack.c.l.b16 %v1689
        %v1722 = vunpack.c.l.b16 %v1690
        %v1723 = vunpack.c.l.b16 %v1691
        %v1724 = vunpack.c.l.b16 %v1692
        %v1725 = vunpack.c.l.b16 %v1693
        %v1726 = vunpack.c.l.b16 %v1694
        %v1727 = vunpack.c.l.b16 %v1695
        %v1728 = vunpack.c.l.b16 %v1696
        %v1729 = vunpack.c.l.b16 %v1697
        %v1730 = vunpack.c.l.b16 %v1698
        %v1731 = vunpack.c.l.b16 %v1699
        %v1732 = vunpack.c.l.b16 %v1700
        %v1733 = vunpack.c.l.b16 %v1701
        %v1734 = vunpack.c.l.b16 %v1702
        %v1735 = vunpack.c.l.b16 %v1703
        %v1736 = vunpack.c.l.b16 %v1704
        %v1737 = vpack.c.b16 %v1722, %v1721
        %v1738 = vpack.c.b16 %v1724, %v1723
        %v1739 = vpack.c.b16 %v1726, %v1725
        %v1740 = vpack.c.b16 %v1728, %v1727
        %v1741 = vpack.c.b16 %v1730, %v1729
        %v1742 = vpack.c.b16 %v1732, %v1731
        %v1743 = vpack.c.b16 %v1734, %v1733
        %v1744 = vpack.c.b16 %v1736, %v1735
        %1753 = vmatpush.bf16.msra.mxu0 %v1744
        %1754 = vmatpush.bf16.msra.mxu0 %v1743
        %1755 = vmatpush.bf16.msra.mxu0 %v1742
        %1756 = vmatpush.bf16.msra.mxu0 %v1741
        %1757 = vmatpush.bf16.msra.mxu0 %v1740
        %1758 = vmatpush.bf16.msra.mxu0 %v1739
        %1759 = vmatpush.bf16.msra.mxu0 %v1738
        %1760 = vmatpush.bf16.msra.mxu0 %v1737
        %1761 = vmatmul.bf16.gmra.mxu0 %v1684
        %v1762 = vpop.f32.mrf.mxu0
        %v1763 = vadd.f32 0.0, %v1762
        %v1764 = vpop.f32.mrf.mxu0
        %v1765 = vadd.f32 0.0, %v1764
        %1766 = vmatmul.bf16.gmra.mxu0 %v1685
        %v1767 = vpop.f32.mrf.mxu0
        %v1768 = vadd.f32 0.0, %v1767
        %v1769 = vpop.f32.mrf.mxu0
        %v1770 = vadd.f32 0.0, %v1769
        %1771 = vmatmul.bf16.gmra.mxu0 %v1686
        %v1772 = vpop.f32.mrf.mxu0
        %v1773 = vadd.f32 0.0, %v1772
        %v1774 = vpop.f32.mrf.mxu0
        %v1775 = vadd.f32 0.0, %v1774
        %1776 = vmatmul.bf16.gmra.mxu0 %v1687
        %v1777 = vpop.f32.mrf.mxu0
        %v1778 = vadd.f32 0.0, %v1777
        %v1779 = vpop.f32.mrf.mxu0
        %v1780 = vadd.f32 0.0, %v1779
        %1781 = vdwg.mxu0
        %v1782 = vadd.f32 %v1676, %v1763
        %v1783 = vadd.f32 %v1677, %v1765
        %v1784 = vadd.f32 %v1678, %v1768
        %v1785 = vadd.f32 %v1679, %v1770
        %v1786 = vadd.f32 %v1680, %v1773
        %v1787 = vadd.f32 %v1681, %v1775
        %v1788 = vadd.f32 %v1682, %v1778
        %v1789 = vadd.f32 %v1683, %v1780
        %s1790 = scalar_lea.vmem %s1, 320
        %v1791 = vld [vmem:[%s1790] sm:$0xff]
        %v1792 = vld [vmem:[%s1790 + $0x8] sm:$0xff]
        %v1793 = vld [vmem:[%s1790 + $0x10] sm:$0xff]
        %v1794 = vld [vmem:[%s1790 + $0x18] sm:$0xff]
        %v1795 = vld [vmem:[%s1790 + $0x20] sm:$0xff]
        %v1796 = vld [vmem:[%s1790 + $0x28] sm:$0xff]
        %v1797 = vld [vmem:[%s1790 + $0x30] sm:$0xff]
        %v1798 = vld [vmem:[%s1790 + $0x38] sm:$0xff]
        %1800 = vset.pattern.permute.xlu0 0
        %1801 = vperm.xlu0 %1800, %v1791
        %v1802 = vpop.permute.xlu0 %1801
        %1805 = vset.pattern.permute.xlu0 0
        %1806 = vperm.xlu0 %1805, %v1792
        %v1807 = vpop.permute.xlu0 %1806
        %1810 = vset.pattern.permute.xlu0 0
        %1811 = vperm.xlu0 %1810, %v1793
        %v1812 = vpop.permute.xlu0 %1811
        %1815 = vset.pattern.permute.xlu0 0
        %1816 = vperm.xlu0 %1815, %v1794
        %v1817 = vpop.permute.xlu0 %1816
        %1820 = vset.pattern.permute.xlu0 0
        %1821 = vperm.xlu0 %1820, %v1795
        %v1822 = vpop.permute.xlu0 %1821
        %1825 = vset.pattern.permute.xlu0 0
        %1826 = vperm.xlu0 %1825, %v1796
        %v1827 = vpop.permute.xlu0 %1826
        %1830 = vset.pattern.permute.xlu0 0
        %1831 = vperm.xlu0 %1830, %v1797
        %v1832 = vpop.permute.xlu0 %1831
        %1835 = vset.pattern.permute.xlu0 0
        %1836 = vperm.xlu0 %1835, %v1798
        %v1837 = vpop.permute.xlu0 %1836
        %v1839 = vmul.f32 %v1337, %v1802
        %v1840 = vmul.f32 %v1339, %v1807
        %v1841 = vmul.f32 %v1341, %v1812
        %v1842 = vmul.f32 %v1343, %v1817
        %v1843 = vmul.f32 %v1345, %v1822
        %v1844 = vmul.f32 %v1347, %v1827
        %v1845 = vmul.f32 %v1348, %v1832
        %v1846 = vmul.f32 %v1357, %v1837
        %v1847 = vpack.c.bf16 %v1840, %v1839
        %v1848 = vpack.c.bf16 %v1842, %v1841
        %v1849 = vpack.c.bf16 %v1844, %v1843
        %v1850 = vpack.c.bf16 %v1846, %v1845
        %s1851 = scalar_lea.vmem %s4, 320
        %v1852 = vld [vmem:[%s1851] sm:$0xf]
        %v1853 = vld [vmem:[%s1851 + $0x4] sm:$0xf]
        %v1854 = vld [vmem:[%s1851 + $0x8] sm:$0xf]
        %v1855 = vld [vmem:[%s1851 + $0xc] sm:$0xf]
        %v1856 = vld [vmem:[%s1851 + $0x10] sm:$0xf]
        %v1857 = vld [vmem:[%s1851 + $0x14] sm:$0xf]
        %v1858 = vld [vmem:[%s1851 + $0x18] sm:$0xf]
        %v1859 = vld [vmem:[%s1851 + $0x1c] sm:$0xf]
        %v1860 = vld [vmem:[%s1851 + $0x20] sm:$0xf]
        %v1861 = vld [vmem:[%s1851 + $0x24] sm:$0xf]
        %v1862 = vld [vmem:[%s1851 + $0x28] sm:$0xf]
        %v1863 = vld [vmem:[%s1851 + $0x2c] sm:$0xf]
        %v1864 = vld [vmem:[%s1851 + $0x30] sm:$0xf]
        %v1865 = vld [vmem:[%s1851 + $0x34] sm:$0xf]
        %v1866 = vld [vmem:[%s1851 + $0x38] sm:$0xf]
        %v1867 = vld [vmem:[%s1851 + $0x3c] sm:$0xf]
        %v1884 = vunpack.c.l.b16 %v1852
        %v1885 = vunpack.c.l.b16 %v1853
        %v1886 = vunpack.c.l.b16 %v1854
        %v1887 = vunpack.c.l.b16 %v1855
        %v1888 = vunpack.c.l.b16 %v1856
        %v1889 = vunpack.c.l.b16 %v1857
        %v1890 = vunpack.c.l.b16 %v1858
        %v1891 = vunpack.c.l.b16 %v1859
        %v1892 = vunpack.c.l.b16 %v1860
        %v1893 = vunpack.c.l.b16 %v1861
        %v1894 = vunpack.c.l.b16 %v1862
        %v1895 = vunpack.c.l.b16 %v1863
        %v1896 = vunpack.c.l.b16 %v1864
        %v1897 = vunpack.c.l.b16 %v1865
        %v1898 = vunpack.c.l.b16 %v1866
        %v1899 = vunpack.c.l.b16 %v1867
        %v1900 = vpack.c.b16 %v1885, %v1884
        %v1901 = vpack.c.b16 %v1887, %v1886
        %v1902 = vpack.c.b16 %v1889, %v1888
        %v1903 = vpack.c.b16 %v1891, %v1890
        %v1904 = vpack.c.b16 %v1893, %v1892
        %v1905 = vpack.c.b16 %v1895, %v1894
        %v1906 = vpack.c.b16 %v1897, %v1896
        %v1907 = vpack.c.b16 %v1899, %v1898
        %1916 = vmatpush.bf16.msra.mxu0 %v1907
        %1917 = vmatpush.bf16.msra.mxu0 %v1906
        %1918 = vmatpush.bf16.msra.mxu0 %v1905
        %1919 = vmatpush.bf16.msra.mxu0 %v1904
        %1920 = vmatpush.bf16.msra.mxu0 %v1903
        %1921 = vmatpush.bf16.msra.mxu0 %v1902
        %1922 = vmatpush.bf16.msra.mxu0 %v1901
        %1923 = vmatpush.bf16.msra.mxu0 %v1900
        %1924 = vmatmul.bf16.gmra.mxu0 %v1847
        %v1925 = vpop.f32.mrf.mxu0
        %v1926 = vadd.f32 0.0, %v1925
        %v1927 = vpop.f32.mrf.mxu0
        %v1928 = vadd.f32 0.0, %v1927
        %1929 = vmatmul.bf16.gmra.mxu0 %v1848
        %v1930 = vpop.f32.mrf.mxu0
        %v1931 = vadd.f32 0.0, %v1930
        %v1932 = vpop.f32.mrf.mxu0
        %v1933 = vadd.f32 0.0, %v1932
        %1934 = vmatmul.bf16.gmra.mxu0 %v1849
        %v1935 = vpop.f32.mrf.mxu0
        %v1936 = vadd.f32 0.0, %v1935
        %v1937 = vpop.f32.mrf.mxu0
        %v1938 = vadd.f32 0.0, %v1937
        %1939 = vmatmul.bf16.gmra.mxu0 %v1850
        %v1940 = vpop.f32.mrf.mxu0
        %v1941 = vadd.f32 0.0, %v1940
        %v1942 = vpop.f32.mrf.mxu0
        %v1943 = vadd.f32 0.0, %v1942
        %1944 = vdwg.mxu0
        %v1945 = vadd.f32 %v1782, %v1926
        %v1946 = vadd.f32 %v1783, %v1928
        %v1947 = vadd.f32 %v1784, %v1931
        %v1948 = vadd.f32 %v1785, %v1933
        %v1949 = vadd.f32 %v1786, %v1936
        %v1950 = vadd.f32 %v1787, %v1938
        %v1951 = vadd.f32 %v1788, %v1941
        %v1952 = vadd.f32 %v1789, %v1943
        %s1953 = scalar_lea.vmem %s1, 384
        %v1954 = vld [vmem:[%s1953] sm:$0xff]
        %v1955 = vld [vmem:[%s1953 + $0x8] sm:$0xff]
        %v1956 = vld [vmem:[%s1953 + $0x10] sm:$0xff]
        %v1957 = vld [vmem:[%s1953 + $0x18] sm:$0xff]
        %v1958 = vld [vmem:[%s1953 + $0x20] sm:$0xff]
        %v1959 = vld [vmem:[%s1953 + $0x28] sm:$0xff]
        %v1960 = vld [vmem:[%s1953 + $0x30] sm:$0xff]
        %v1961 = vld [vmem:[%s1953 + $0x38] sm:$0xff]
        %1963 = vset.pattern.permute.xlu0 0
        %1964 = vperm.xlu0 %1963, %v1954
        %v1965 = vpop.permute.xlu0 %1964
        %1968 = vset.pattern.permute.xlu0 0
        %1969 = vperm.xlu0 %1968, %v1955
        %v1970 = vpop.permute.xlu0 %1969
        %1973 = vset.pattern.permute.xlu0 0
        %1974 = vperm.xlu0 %1973, %v1956
        %v1975 = vpop.permute.xlu0 %1974
        %1978 = vset.pattern.permute.xlu0 0
        %1979 = vperm.xlu0 %1978, %v1957
        %v1980 = vpop.permute.xlu0 %1979
        %1983 = vset.pattern.permute.xlu0 0
        %1984 = vperm.xlu0 %1983, %v1958
        %v1985 = vpop.permute.xlu0 %1984
        %1988 = vset.pattern.permute.xlu0 0
        %1989 = vperm.xlu0 %1988, %v1959
        %v1990 = vpop.permute.xlu0 %1989
        %1993 = vset.pattern.permute.xlu0 0
        %1994 = vperm.xlu0 %1993, %v1960
        %v1995 = vpop.permute.xlu0 %1994
        %1998 = vset.pattern.permute.xlu0 0
        %1999 = vperm.xlu0 %1998, %v1961
        %v2000 = vpop.permute.xlu0 %1999
        %v2002 = vmul.f32 %v1006, %v1965
        %v2003 = vmul.f32 %v1008, %v1970
        %v2004 = vmul.f32 %v1010, %v1975
        %v2005 = vmul.f32 %v1012, %v1980
        %v2006 = vmul.f32 %v1014, %v1985
        %v2007 = vmul.f32 %v1015, %v1990
        %v2008 = vmul.f32 %v995, %v1995
        %v2009 = vmul.f32 %v1023, %v2000
        %v2010 = vpack.c.bf16 %v2003, %v2002
        %v2011 = vpack.c.bf16 %v2005, %v2004
        %v2012 = vpack.c.bf16 %v2007, %v2006
        %v2013 = vpack.c.bf16 %v2009, %v2008
        %s2014 = scalar_lea.vmem %s4, 384
        %v2015 = vld [vmem:[%s2014] sm:$0xf]
        %v2016 = vld [vmem:[%s2014 + $0x4] sm:$0xf]
        %v2017 = vld [vmem:[%s2014 + $0x8] sm:$0xf]
        %v2018 = vld [vmem:[%s2014 + $0xc] sm:$0xf]
        %v2019 = vld [vmem:[%s2014 + $0x10] sm:$0xf]
        %v2020 = vld [vmem:[%s2014 + $0x14] sm:$0xf]
        %v2021 = vld [vmem:[%s2014 + $0x18] sm:$0xf]
        %v2022 = vld [vmem:[%s2014 + $0x1c] sm:$0xf]
        %v2023 = vld [vmem:[%s2014 + $0x20] sm:$0xf]
        %v2024 = vld [vmem:[%s2014 + $0x24] sm:$0xf]
        %v2025 = vld [vmem:[%s2014 + $0x28] sm:$0xf]
        %v2026 = vld [vmem:[%s2014 + $0x2c] sm:$0xf]
        %v2027 = vld [vmem:[%s2014 + $0x30] sm:$0xf]
        %v2028 = vld [vmem:[%s2014 + $0x34] sm:$0xf]
        %v2029 = vld [vmem:[%s2014 + $0x38] sm:$0xf]
        %v2030 = vld [vmem:[%s2014 + $0x3c] sm:$0xf]
        %v2047 = vunpack.c.l.b16 %v2015
        %v2048 = vunpack.c.l.b16 %v2016
        %v2049 = vunpack.c.l.b16 %v2017
        %v2050 = vunpack.c.l.b16 %v2018
        %v2051 = vunpack.c.l.b16 %v2019
        %v2052 = vunpack.c.l.b16 %v2020
        %v2053 = vunpack.c.l.b16 %v2021
        %v2054 = vunpack.c.l.b16 %v2022
        %v2055 = vunpack.c.l.b16 %v2023
        %v2056 = vunpack.c.l.b16 %v2024
        %v2057 = vunpack.c.l.b16 %v2025
        %v2058 = vunpack.c.l.b16 %v2026
        %v2059 = vunpack.c.l.b16 %v2027
        %v2060 = vunpack.c.l.b16 %v2028
        %v2061 = vunpack.c.l.b16 %v2029
        %v2062 = vunpack.c.l.b16 %v2030
        %v2063 = vpack.c.b16 %v2048, %v2047
        %v2064 = vpack.c.b16 %v2050, %v2049
        %v2065 = vpack.c.b16 %v2052, %v2051
        %v2066 = vpack.c.b16 %v2054, %v2053
        %v2067 = vpack.c.b16 %v2056, %v2055
        %v2068 = vpack.c.b16 %v2058, %v2057
        %v2069 = vpack.c.b16 %v2060, %v2059
        %v2070 = vpack.c.b16 %v2062, %v2061
        %2079 = vmatpush.bf16.msra.mxu0 %v2070
        %2080 = vmatpush.bf16.msra.mxu0 %v2069
        %2081 = vmatpush.bf16.msra.mxu0 %v2068
        %2082 = vmatpush.bf16.msra.mxu0 %v2067
        %2083 = vmatpush.bf16.msra.mxu0 %v2066
        %2084 = vmatpush.bf16.msra.mxu0 %v2065
        %2085 = vmatpush.bf16.msra.mxu0 %v2064
        %2086 = vmatpush.bf16.msra.mxu0 %v2063
        %2087 = vmatmul.bf16.gmra.mxu0 %v2010
        %v2088 = vpop.f32.mrf.mxu0
        %v2089 = vadd.f32 0.0, %v2088
        %v2090 = vpop.f32.mrf.mxu0
        %v2091 = vadd.f32 0.0, %v2090
        %2092 = vmatmul.bf16.gmra.mxu0 %v2011
        %v2093 = vpop.f32.mrf.mxu0
        %v2094 = vadd.f32 0.0, %v2093
        %v2095 = vpop.f32.mrf.mxu0
        %v2096 = vadd.f32 0.0, %v2095
        %2097 = vmatmul.bf16.gmra.mxu0 %v2012
        %v2098 = vpop.f32.mrf.mxu0
        %v2099 = vadd.f32 0.0, %v2098
        %v2100 = vpop.f32.mrf.mxu0
        %v2101 = vadd.f32 0.0, %v2100
        %2102 = vmatmul.bf16.gmra.mxu0 %v2013
        %v2103 = vpop.f32.mrf.mxu0
        %v2104 = vadd.f32 0.0, %v2103
        %v2105 = vpop.f32.mrf.mxu0
        %v2106 = vadd.f32 0.0, %v2105
        %2107 = vdwg.mxu0
        %v2108 = vadd.f32 %v1945, %v2089
        %v2109 = vadd.f32 %v1946, %v2091
        %v2110 = vadd.f32 %v1947, %v2094
        %v2111 = vadd.f32 %v1948, %v2096
        %v2112 = vadd.f32 %v1949, %v2099
        %v2113 = vadd.f32 %v1950, %v2101
        %v2114 = vadd.f32 %v1951, %v2104
        %v2115 = vadd.f32 %v1952, %v2106
        %s2116 = scalar_lea.vmem %s1, 448
        %v2117 = vld [vmem:[%s2116] sm:$0xff]
        %v2118 = vld [vmem:[%s2116 + $0x8] sm:$0xff]
        %v2119 = vld [vmem:[%s2116 + $0x10] sm:$0xff]
        %v2120 = vld [vmem:[%s2116 + $0x18] sm:$0xff]
        %v2121 = vld [vmem:[%s2116 + $0x20] sm:$0xff]
        %v2122 = vld [vmem:[%s2116 + $0x28] sm:$0xff]
        %v2123 = vld [vmem:[%s2116 + $0x30] sm:$0xff]
        %v2124 = vld [vmem:[%s2116 + $0x38] sm:$0xff]
        %2126 = vset.pattern.permute.xlu0 0
        %2127 = vperm.xlu0 %2126, %v2117
        %v2128 = vpop.permute.xlu0 %2127
        %2131 = vset.pattern.permute.xlu0 0
        %2132 = vperm.xlu0 %2131, %v2118
        %v2133 = vpop.permute.xlu0 %2132
        %2136 = vset.pattern.permute.xlu0 0
        %2137 = vperm.xlu0 %2136, %v2119
        %v2138 = vpop.permute.xlu0 %2137
        %2141 = vset.pattern.permute.xlu0 0
        %2142 = vperm.xlu0 %2141, %v2120
        %v2143 = vpop.permute.xlu0 %2142
        %2146 = vset.pattern.permute.xlu0 0
        %2147 = vperm.xlu0 %2146, %v2121
        %v2148 = vpop.permute.xlu0 %2147
        %2151 = vset.pattern.permute.xlu0 0
        %2152 = vperm.xlu0 %2151, %v2122
        %v2153 = vpop.permute.xlu0 %2152
        %2156 = vset.pattern.permute.xlu0 0
        %2157 = vperm.xlu0 %2156, %v2123
        %v2158 = vpop.permute.xlu0 %2157
        %2161 = vset.pattern.permute.xlu0 0
        %2162 = vperm.xlu0 %2161, %v2124
        %v2163 = vpop.permute.xlu0 %2162
        %v2165 = vmul.f32 %v970, %v2128
        %v2166 = vmul.f32 %v973, %v2133
        %v2167 = vmul.f32 %v976, %v2138
        %v2168 = vmul.f32 %v979, %v2143
        %v2169 = vmul.f32 %v982, %v2148
        %v2170 = vmul.f32 %v985, %v2153
        %v2171 = vmul.f32 %v988, %v2158
        %v2172 = vmul.f32 %v967, %v2163
        %v2173 = vpack.c.bf16 %v2166, %v2165
        %v2174 = vpack.c.bf16 %v2168, %v2167
        %v2175 = vpack.c.bf16 %v2170, %v2169
        %v2176 = vpack.c.bf16 %v2172, %v2171
        %s2177 = scalar_lea.vmem %s4, 448
        %v2178 = vld [vmem:[%s2177] sm:$0xf]
        %v2179 = vld [vmem:[%s2177 + $0x4] sm:$0xf]
        %v2180 = vld [vmem:[%s2177 + $0x8] sm:$0xf]
        %v2181 = vld [vmem:[%s2177 + $0xc] sm:$0xf]
        %v2182 = vld [vmem:[%s2177 + $0x10] sm:$0xf]
        %v2183 = vld [vmem:[%s2177 + $0x14] sm:$0xf]
        %v2184 = vld [vmem:[%s2177 + $0x18] sm:$0xf]
        %v2185 = vld [vmem:[%s2177 + $0x1c] sm:$0xf]
        %v2186 = vld [vmem:[%s2177 + $0x20] sm:$0xf]
        %v2187 = vld [vmem:[%s2177 + $0x24] sm:$0xf]
        %v2188 = vld [vmem:[%s2177 + $0x28] sm:$0xf]
        %v2189 = vld [vmem:[%s2177 + $0x2c] sm:$0xf]
        %v2190 = vld [vmem:[%s2177 + $0x30] sm:$0xf]
        %v2191 = vld [vmem:[%s2177 + $0x34] sm:$0xf]
        %v2192 = vld [vmem:[%s2177 + $0x38] sm:$0xf]
        %v2193 = vld [vmem:[%s2177 + $0x3c] sm:$0xf]
        %v2210 = vunpack.c.l.b16 %v2178
        %v2211 = vunpack.c.l.b16 %v2179
        %v2212 = vunpack.c.l.b16 %v2180
        %v2213 = vunpack.c.l.b16 %v2181
        %v2214 = vunpack.c.l.b16 %v2182
        %v2215 = vunpack.c.l.b16 %v2183
        %v2216 = vunpack.c.l.b16 %v2184
        %v2217 = vunpack.c.l.b16 %v2185
        %v2218 = vunpack.c.l.b16 %v2186
        %v2219 = vunpack.c.l.b16 %v2187
        %v2220 = vunpack.c.l.b16 %v2188
        %v2221 = vunpack.c.l.b16 %v2189
        %v2222 = vunpack.c.l.b16 %v2190
        %v2223 = vunpack.c.l.b16 %v2191
        %v2224 = vunpack.c.l.b16 %v2192
        %v2225 = vunpack.c.l.b16 %v2193
        %v2226 = vpack.c.b16 %v2211, %v2210
        %v2227 = vpack.c.b16 %v2213, %v2212
        %v2228 = vpack.c.b16 %v2215, %v2214
        %v2229 = vpack.c.b16 %v2217, %v2216
        %v2230 = vpack.c.b16 %v2219, %v2218
        %v2231 = vpack.c.b16 %v2221, %v2220
        %v2232 = vpack.c.b16 %v2223, %v2222
        %v2233 = vpack.c.b16 %v2225, %v2224
        %2242 = vmatpush.bf16.msra.mxu0 %v2233
        %2243 = vmatpush.bf16.msra.mxu0 %v2232
        %2244 = vmatpush.bf16.msra.mxu0 %v2231
        %2245 = vmatpush.bf16.msra.mxu0 %v2230
        %2246 = vmatpush.bf16.msra.mxu0 %v2229
        %2247 = vmatpush.bf16.msra.mxu0 %v2228
        %2248 = vmatpush.bf16.msra.mxu0 %v2227
        %2249 = vmatpush.bf16.msra.mxu0 %v2226
        %2250 = vmatmul.bf16.gmra.mxu0 %v2173
        %v2251 = vpop.f32.mrf.mxu0
        %v2252 = vadd.f32 0.0, %v2251
        %v2253 = vpop.f32.mrf.mxu0
        %v2254 = vadd.f32 0.0, %v2253
        %2255 = vmatmul.bf16.gmra.mxu0 %v2174
        %v2256 = vpop.f32.mrf.mxu0
        %v2257 = vadd.f32 0.0, %v2256
        %v2258 = vpop.f32.mrf.mxu0
        %v2259 = vadd.f32 0.0, %v2258
        %2260 = vmatmul.bf16.gmra.mxu0 %v2175
        %v2261 = vpop.f32.mrf.mxu0
        %v2262 = vadd.f32 0.0, %v2261
        %v2263 = vpop.f32.mrf.mxu0
        %v2264 = vadd.f32 0.0, %v2263
        %2265 = vmatmul.bf16.gmra.mxu0 %v2176
        %v2266 = vpop.f32.mrf.mxu0
        %v2267 = vadd.f32 0.0, %v2266
        %v2268 = vpop.f32.mrf.mxu0
        %v2269 = vadd.f32 0.0, %v2268
        %2270 = vdwg.mxu0
        %v2271 = vadd.f32 %v2108, %v2252
        %v2272 = vadd.f32 %v2109, %v2254
        %v2273 = vadd.f32 %v2110, %v2257
        %v2274 = vadd.f32 %v2111, %v2259
        %v2275 = vadd.f32 %v2112, %v2262
        %v2276 = vadd.f32 %v2113, %v2264
        %v2277 = vadd.f32 %v2114, %v2267
        %v2278 = vadd.f32 %v2115, %v2269
        %s2279 = scalar_lea.vmem %s1, 512
        %v2280 = vld [vmem:[%s2279] sm:$0xff]
        %v2281 = vld [vmem:[%s2279 + $0x8] sm:$0xff]
        %v2282 = vld [vmem:[%s2279 + $0x10] sm:$0xff]
        %v2283 = vld [vmem:[%s2279 + $0x18] sm:$0xff]
        %v2284 = vld [vmem:[%s2279 + $0x20] sm:$0xff]
        %v2285 = vld [vmem:[%s2279 + $0x28] sm:$0xff]
        %v2286 = vld [vmem:[%s2279 + $0x30] sm:$0xff]
        %v2287 = vld [vmem:[%s2279 + $0x38] sm:$0xff]
        %2289 = vset.pattern.permute.xlu0 0
        %2290 = vperm.xlu0 %2289, %v2280
        %v2291 = vpop.permute.xlu0 %2290
        %2294 = vset.pattern.permute.xlu0 0
        %2295 = vperm.xlu0 %2294, %v2281
        %v2296 = vpop.permute.xlu0 %2295
        %2299 = vset.pattern.permute.xlu0 0
        %2300 = vperm.xlu0 %2299, %v2282
        %v2301 = vpop.permute.xlu0 %2300
        %2304 = vset.pattern.permute.xlu0 0
        %2305 = vperm.xlu0 %2304, %v2283
        %v2306 = vpop.permute.xlu0 %2305
        %2309 = vset.pattern.permute.xlu0 0
        %2310 = vperm.xlu0 %2309, %v2284
        %v2311 = vpop.permute.xlu0 %2310
        %2314 = vset.pattern.permute.xlu0 0
        %2315 = vperm.xlu0 %2314, %v2285
        %v2316 = vpop.permute.xlu0 %2315
        %2319 = vset.pattern.permute.xlu0 0
        %2320 = vperm.xlu0 %2319, %v2286
        %v2321 = vpop.permute.xlu0 %2320
        %2324 = vset.pattern.permute.xlu0 0
        %2325 = vperm.xlu0 %2324, %v2287
        %v2326 = vpop.permute.xlu0 %2325
        %v2328 = vmul.f32 %v1339, %v2291
        %v2329 = vmul.f32 %v1341, %v2296
        %v2330 = vmul.f32 %v1343, %v2301
        %v2331 = vmul.f32 %v1345, %v2306
        %v2332 = vmul.f32 %v1347, %v2311
        %v2333 = vmul.f32 %v1348, %v2316
        %v2334 = vmul.f32 %v1357, %v2321
        %v2335 = vmul.f32 %v1337, %v2326
        %v2336 = vpack.c.bf16 %v2329, %v2328
        %v2337 = vpack.c.bf16 %v2331, %v2330
        %v2338 = vpack.c.bf16 %v2333, %v2332
        %v2339 = vpack.c.bf16 %v2335, %v2334
        %s2340 = scalar_lea.vmem %s4, 512
        %v2341 = vld [vmem:[%s2340] sm:$0xf]
        %v2342 = vld [vmem:[%s2340 + $0x4] sm:$0xf]
        %v2343 = vld [vmem:[%s2340 + $0x8] sm:$0xf]
        %v2344 = vld [vmem:[%s2340 + $0xc] sm:$0xf]
        %v2345 = vld [vmem:[%s2340 + $0x10] sm:$0xf]
        %v2346 = vld [vmem:[%s2340 + $0x14] sm:$0xf]
        %v2347 = vld [vmem:[%s2340 + $0x18] sm:$0xf]
        %v2348 = vld [vmem:[%s2340 + $0x1c] sm:$0xf]
        %v2349 = vld [vmem:[%s2340 + $0x20] sm:$0xf]
        %v2350 = vld [vmem:[%s2340 + $0x24] sm:$0xf]
        %v2351 = vld [vmem:[%s2340 + $0x28] sm:$0xf]
        %v2352 = vld [vmem:[%s2340 + $0x2c] sm:$0xf]
        %v2353 = vld [vmem:[%s2340 + $0x30] sm:$0xf]
        %v2354 = vld [vmem:[%s2340 + $0x34] sm:$0xf]
        %v2355 = vld [vmem:[%s2340 + $0x38] sm:$0xf]
        %v2356 = vld [vmem:[%s2340 + $0x3c] sm:$0xf]
        %v2373 = vunpack.c.l.b16 %v2341
        %v2374 = vunpack.c.l.b16 %v2342
        %v2375 = vunpack.c.l.b16 %v2343
        %v2376 = vunpack.c.l.b16 %v2344
        %v2377 = vunpack.c.l.b16 %v2345
        %v2378 = vunpack.c.l.b16 %v2346
        %v2379 = vunpack.c.l.b16 %v2347
        %v2380 = vunpack.c.l.b16 %v2348
        %v2381 = vunpack.c.l.b16 %v2349
        %v2382 = vunpack.c.l.b16 %v2350
        %v2383 = vunpack.c.l.b16 %v2351
        %v2384 = vunpack.c.l.b16 %v2352
        %v2385 = vunpack.c.l.b16 %v2353
        %v2386 = vunpack.c.l.b16 %v2354
        %v2387 = vunpack.c.l.b16 %v2355
        %v2388 = vunpack.c.l.b16 %v2356
        %v2389 = vpack.c.b16 %v2374, %v2373
        %v2390 = vpack.c.b16 %v2376, %v2375
        %v2391 = vpack.c.b16 %v2378, %v2377
        %v2392 = vpack.c.b16 %v2380, %v2379
        %v2393 = vpack.c.b16 %v2382, %v2381
        %v2394 = vpack.c.b16 %v2384, %v2383
        %v2395 = vpack.c.b16 %v2386, %v2385
        %v2396 = vpack.c.b16 %v2388, %v2387
        %2405 = vmatpush.bf16.msra.mxu0 %v2396
        %2406 = vmatpush.bf16.msra.mxu0 %v2395
        %2407 = vmatpush.bf16.msra.mxu0 %v2394
        %2408 = vmatpush.bf16.msra.mxu0 %v2393
        %2409 = vmatpush.bf16.msra.mxu0 %v2392
        %2410 = vmatpush.bf16.msra.mxu0 %v2391
        %2411 = vmatpush.bf16.msra.mxu0 %v2390
        %2412 = vmatpush.bf16.msra.mxu0 %v2389
        %2413 = vmatmul.bf16.gmra.mxu0 %v2336
        %v2414 = vpop.f32.mrf.mxu0
        %v2415 = vadd.f32 0.0, %v2414
        %v2416 = vpop.f32.mrf.mxu0
        %v2417 = vadd.f32 0.0, %v2416
        %2418 = vmatmul.bf16.gmra.mxu0 %v2337
        %v2419 = vpop.f32.mrf.mxu0
        %v2420 = vadd.f32 0.0, %v2419
        %v2421 = vpop.f32.mrf.mxu0
        %v2422 = vadd.f32 0.0, %v2421
        %2423 = vmatmul.bf16.gmra.mxu0 %v2338
        %v2424 = vpop.f32.mrf.mxu0
        %v2425 = vadd.f32 0.0, %v2424
        %v2426 = vpop.f32.mrf.mxu0
        %v2427 = vadd.f32 0.0, %v2426
        %2428 = vmatmul.bf16.gmra.mxu0 %v2339
        %v2429 = vpop.f32.mrf.mxu0
        %v2430 = vadd.f32 0.0, %v2429
        %v2431 = vpop.f32.mrf.mxu0
        %v2432 = vadd.f32 0.0, %v2431
        %2433 = vdwg.mxu0
        %v2434 = vadd.f32 %v2271, %v2415
        %v2435 = vadd.f32 %v2272, %v2417
        %v2436 = vadd.f32 %v2273, %v2420
        %v2437 = vadd.f32 %v2274, %v2422
        %v2438 = vadd.f32 %v2275, %v2425
        %v2439 = vadd.f32 %v2276, %v2427
        %v2440 = vadd.f32 %v2277, %v2430
        %v2441 = vadd.f32 %v2278, %v2432
        %v2442 = vld [vmem:[%s5] sm:$0x1]
        %v2444 = vperm.slane %v2442, 0
        %v2446 = vadd.f32 %v2434, %v2444
        %v2447 = vadd.f32 %v2435, %v2444
        %v2448 = vadd.f32 %v2436, %v2444
        %v2449 = vadd.f32 %v2437, %v2444
        %v2450 = vadd.f32 %v2438, %v2444
        %v2451 = vadd.f32 %v2439, %v2444
        %v2452 = vadd.f32 %v2440, %v2444
        %v2453 = vadd.f32 %v2441, %v2444
        %v2454 = vmax.f32 %v2446, 0.0
        %v2455 = vmax.f32 %v2447, 0.0
        %v2456 = vmax.f32 %v2448, 0.0
        %v2457 = vmax.f32 %v2449, 0.0
        %v2458 = vmax.f32 %v2450, 0.0
        %v2459 = vmax.f32 %v2451, 0.0
        %v2460 = vmax.f32 %v2452, 0.0
        %v2461 = vmax.f32 %v2453, 0.0
        %v2464 = vrot.slane %v986, 7
        %v2465 = vrot.slane %v989, 7
        %v2466 = vsel %vm992, %v2464, %v2465
        %v2475 = vrot.slane %v968, 7
        %v2476 = vrot.slane %v971, 7
        %v2477 = vsel %vm992, %v2475, %v2476
        %v2478 = vrot.slane %v974, 7
        %v2479 = vsel %vm992, %v2476, %v2478
        %v2480 = vrot.slane %v977, 7
        %v2481 = vsel %vm992, %v2478, %v2480
        %v2482 = vrot.slane %v980, 7
        %v2483 = vsel %vm992, %v2480, %v2482
        %v2484 = vrot.slane %v983, 7
        %v2485 = vsel %vm992, %v2482, %v2484
        %v2486 = vsel %vm992, %v2484, %v2464
        %v2494 = vsel %vm992, %v2465, %v2475
        %v2495 = vmul.f32 %v2466, %v1035
        %v2496 = vmul.f32 %v2494, %v1040
        %v2497 = vmul.f32 %v2477, %v1045
        %v2498 = vmul.f32 %v2479, %v1050
        %v2499 = vmul.f32 %v2481, %v1055
        %v2500 = vmul.f32 %v2483, %v1060
        %v2501 = vmul.f32 %v2485, %v1065
        %v2502 = vmul.f32 %v2486, %v1070
        %v2503 = vpack.c.bf16 %v2496, %v2495
        %v2504 = vpack.c.bf16 %v2498, %v2497
        %v2505 = vpack.c.bf16 %v2500, %v2499
        %v2506 = vpack.c.bf16 %v2502, %v2501
        %v2507 = vld [vmem:[#allocation7] sm:$0xf]
        %v2508 = vld [vmem:[#allocation7 + $0x4] sm:$0xf]
        %v2509 = vld [vmem:[#allocation7 + $0x8] sm:$0xf]
        %v2510 = vld [vmem:[#allocation7 + $0xc] sm:$0xf]
        %v2511 = vld [vmem:[#allocation7 + $0x10] sm:$0xf]
        %v2512 = vld [vmem:[#allocation7 + $0x14] sm:$0xf]
        %v2513 = vld [vmem:[#allocation7 + $0x18] sm:$0xf]
        %v2514 = vld [vmem:[#allocation7 + $0x1c] sm:$0xf]
        %v2515 = vld [vmem:[#allocation7 + $0x20] sm:$0xf]
        %v2516 = vld [vmem:[#allocation7 + $0x24] sm:$0xf]
        %v2517 = vld [vmem:[#allocation7 + $0x28] sm:$0xf]
        %v2518 = vld [vmem:[#allocation7 + $0x2c] sm:$0xf]
        %v2519 = vld [vmem:[#allocation7 + $0x30] sm:$0xf]
        %v2520 = vld [vmem:[#allocation7 + $0x34] sm:$0xf]
        %v2521 = vld [vmem:[#allocation7 + $0x38] sm:$0xf]
        %v2522 = vld [vmem:[#allocation7 + $0x3c] sm:$0xf]
        %v2523 = vmul.f32 %v989, %v1112
        %v2524 = vmul.f32 %v968, %v1117
        %v2525 = vmul.f32 %v971, %v1122
        %v2526 = vmul.f32 %v974, %v1127
        %v2527 = vmul.f32 %v977, %v1132
        %v2528 = vmul.f32 %v980, %v1137
        %v2529 = vmul.f32 %v983, %v1142
        %v2530 = vmul.f32 %v986, %v1147
        %v2531 = vpack.c.bf16 %v2524, %v2523
        %v2532 = vpack.c.bf16 %v2526, %v2525
        %v2533 = vpack.c.bf16 %v2528, %v2527
        %v2534 = vpack.c.bf16 %v2530, %v2529
        %s2535 = scalar_lea.vmem [#allocation7], 64
        %v2536 = vld [vmem:[%s2535] sm:$0xf]
        %v2537 = vld [vmem:[%s2535 + $0x4] sm:$0xf]
        %v2538 = vld [vmem:[%s2535 + $0x8] sm:$0xf]
        %v2539 = vld [vmem:[%s2535 + $0xc] sm:$0xf]
        %v2540 = vld [vmem:[%s2535 + $0x10] sm:$0xf]
        %v2541 = vld [vmem:[%s2535 + $0x14] sm:$0xf]
        %v2542 = vld [vmem:[%s2535 + $0x18] sm:$0xf]
        %v2543 = vld [vmem:[%s2535 + $0x1c] sm:$0xf]
        %v2544 = vld [vmem:[%s2535 + $0x20] sm:$0xf]
        %v2545 = vld [vmem:[%s2535 + $0x24] sm:$0xf]
        %v2546 = vld [vmem:[%s2535 + $0x28] sm:$0xf]
        %v2547 = vld [vmem:[%s2535 + $0x2c] sm:$0xf]
        %v2548 = vld [vmem:[%s2535 + $0x30] sm:$0xf]
        %v2549 = vld [vmem:[%s2535 + $0x34] sm:$0xf]
        %v2550 = vld [vmem:[%s2535 + $0x38] sm:$0xf]
        %v2551 = vld [vmem:[%s2535 + $0x3c] sm:$0xf]
        %v2568 = vunpack.c.l.b16 %v2536
        %v2569 = vunpack.c.l.b16 %v2537
        %v2570 = vunpack.c.l.b16 %v2538
        %v2571 = vunpack.c.l.b16 %v2539
        %v2572 = vunpack.c.l.b16 %v2540
        %v2573 = vunpack.c.l.b16 %v2541
        %v2574 = vunpack.c.l.b16 %v2542
        %v2575 = vunpack.c.l.b16 %v2543
        %v2576 = vunpack.c.l.b16 %v2544
        %v2577 = vunpack.c.l.b16 %v2545
        %v2578 = vunpack.c.l.b16 %v2546
        %v2579 = vunpack.c.l.b16 %v2547
        %v2580 = vunpack.c.l.b16 %v2548
        %v2581 = vunpack.c.l.b16 %v2549
        %v2582 = vunpack.c.l.b16 %v2550
        %v2583 = vunpack.c.l.b16 %v2551
        %v2584 = vpack.c.b16 %v2569, %v2568
        %v2585 = vpack.c.b16 %v2571, %v2570
        %v2586 = vpack.c.b16 %v2573, %v2572
        %v2587 = vpack.c.b16 %v2575, %v2574
        %v2588 = vpack.c.b16 %v2577, %v2576
        %v2589 = vpack.c.b16 %v2579, %v2578
        %v2590 = vpack.c.b16 %v2581, %v2580
        %v2591 = vpack.c.b16 %v2583, %v2582
        %2600 = vmatpush.bf16.msra.mxu0 %v2591
        %2601 = vmatpush.bf16.msra.mxu0 %v2590
        %2602 = vmatpush.bf16.msra.mxu0 %v2589
        %2603 = vmatpush.bf16.msra.mxu0 %v2588
        %2604 = vmatpush.bf16.msra.mxu0 %v2587
        %2605 = vmatpush.bf16.msra.mxu0 %v2586
        %2606 = vmatpush.bf16.msra.mxu0 %v2585
        %2607 = vmatpush.bf16.msra.mxu0 %v2584
        %2608 = vmatmul.bf16.gmra.mxu0 %v2531
        %v2609 = vpop.f32.mrf.mxu0
        %v2610 = vadd.f32 0.0, %v2609
        %v2611 = vpop.f32.mrf.mxu0
        %v2612 = vadd.f32 0.0, %v2611
        %2613 = vmatmul.bf16.gmra.mxu0 %v2532
        %v2614 = vpop.f32.mrf.mxu0
        %v2615 = vadd.f32 0.0, %v2614
        %v2616 = vpop.f32.mrf.mxu0
        %v2617 = vadd.f32 0.0, %v2616
        %2618 = vmatmul.bf16.gmra.mxu0 %v2533
        %v2619 = vpop.f32.mrf.mxu0
        %v2620 = vadd.f32 0.0, %v2619
        %v2621 = vpop.f32.mrf.mxu0
        %v2622 = vadd.f32 0.0, %v2621
        %2623 = vmatmul.bf16.gmra.mxu0 %v2534
        %v2624 = vpop.f32.mrf.mxu0
        %v2625 = vadd.f32 0.0, %v2624
        %v2626 = vpop.f32.mrf.mxu0
        %v2627 = vadd.f32 0.0, %v2626
        %2628 = vdwg.mxu0
        %v2645 = vunpack.c.l.b16 %v2507
        %v2646 = vunpack.c.l.b16 %v2508
        %v2647 = vunpack.c.l.b16 %v2509
        %v2648 = vunpack.c.l.b16 %v2510
        %v2649 = vunpack.c.l.b16 %v2511
        %v2650 = vunpack.c.l.b16 %v2512
        %v2651 = vunpack.c.l.b16 %v2513
        %v2652 = vunpack.c.l.b16 %v2514
        %v2653 = vunpack.c.l.b16 %v2515
        %v2654 = vunpack.c.l.b16 %v2516
        %v2655 = vunpack.c.l.b16 %v2517
        %v2656 = vunpack.c.l.b16 %v2518
        %v2657 = vunpack.c.l.b16 %v2519
        %v2658 = vunpack.c.l.b16 %v2520
        %v2659 = vunpack.c.l.b16 %v2521
        %v2660 = vunpack.c.l.b16 %v2522
        %v2661 = vpack.c.b16 %v2646, %v2645
        %v2662 = vpack.c.b16 %v2648, %v2647
        %v2663 = vpack.c.b16 %v2650, %v2649
        %v2664 = vpack.c.b16 %v2652, %v2651
        %v2665 = vpack.c.b16 %v2654, %v2653
        %v2666 = vpack.c.b16 %v2656, %v2655
        %v2667 = vpack.c.b16 %v2658, %v2657
        %v2668 = vpack.c.b16 %v2660, %v2659
        %2677 = vmatpush.bf16.msra.mxu0 %v2668
        %2678 = vmatpush.bf16.msra.mxu0 %v2667
        %2679 = vmatpush.bf16.msra.mxu0 %v2666
        %2680 = vmatpush.bf16.msra.mxu0 %v2665
        %2681 = vmatpush.bf16.msra.mxu0 %v2664
        %2682 = vmatpush.bf16.msra.mxu0 %v2663
        %2683 = vmatpush.bf16.msra.mxu0 %v2662
        %2684 = vmatpush.bf16.msra.mxu0 %v2661
        %2685 = vmatmul.bf16.gmra.mxu0 %v2503
        %v2686 = vpop.f32.mrf.mxu0
        %v2687 = vadd.f32 %v2610, %v2686
        %v2688 = vpop.f32.mrf.mxu0
        %v2689 = vadd.f32 %v2612, %v2688
        %2690 = vmatmul.bf16.gmra.mxu0 %v2504
        %v2691 = vpop.f32.mrf.mxu0
        %v2692 = vadd.f32 %v2615, %v2691
        %v2693 = vpop.f32.mrf.mxu0
        %v2694 = vadd.f32 %v2617, %v2693
        %2695 = vmatmul.bf16.gmra.mxu0 %v2505
        %v2696 = vpop.f32.mrf.mxu0
        %v2697 = vadd.f32 %v2620, %v2696
        %v2698 = vpop.f32.mrf.mxu0
        %v2699 = vadd.f32 %v2622, %v2698
        %2700 = vmatmul.bf16.gmra.mxu0 %v2506
        %v2701 = vpop.f32.mrf.mxu0
        %v2702 = vadd.f32 %v2625, %v2701
        %v2703 = vpop.f32.mrf.mxu0
        %v2704 = vadd.f32 %v2627, %v2703
        %2705 = vdwg.mxu0
        %v2706 = vrot.slane %v989, 1
        %v2708 = vrot.slane %v968, 1
        %v2709 = vrot.slane %v971, 1
        %v2710 = vsel %vm1334, %v2708, %v2709
        %v2711 = vrot.slane %v974, 1
        %v2712 = vsel %vm1334, %v2709, %v2711
        %v2713 = vrot.slane %v977, 1
        %v2714 = vsel %vm1334, %v2711, %v2713
        %v2715 = vrot.slane %v980, 1
        %v2716 = vsel %vm1334, %v2713, %v2715
        %v2717 = vrot.slane %v983, 1
        %v2718 = vsel %vm1334, %v2715, %v2717
        %v2719 = vrot.slane %v986, 1
        %v2720 = vsel %vm1334, %v2717, %v2719
        %v2721 = vsel %vm1334, %v2719, %v2706
        %v2730 = vsel %vm1334, %v2706, %v2708
        %v2731 = vmul.f32 %v2730, %v1370
        %v2732 = vmul.f32 %v2710, %v1375
        %v2733 = vmul.f32 %v2712, %v1380
        %v2734 = vmul.f32 %v2714, %v1385
        %v2735 = vmul.f32 %v2716, %v1390
        %v2736 = vmul.f32 %v2718, %v1395
        %v2737 = vmul.f32 %v2720, %v1400
        %v2738 = vmul.f32 %v2721, %v1405
        %v2739 = vpack.c.bf16 %v2732, %v2731
        %v2740 = vpack.c.bf16 %v2734, %v2733
        %v2741 = vpack.c.bf16 %v2736, %v2735
        %v2742 = vpack.c.bf16 %v2738, %v2737
        %s2743 = scalar_lea.vmem [#allocation7], 128
        %v2744 = vld [vmem:[%s2743] sm:$0xf]
        %v2745 = vld [vmem:[%s2743 + $0x4] sm:$0xf]
        %v2746 = vld [vmem:[%s2743 + $0x8] sm:$0xf]
        %v2747 = vld [vmem:[%s2743 + $0xc] sm:$0xf]
        %v2748 = vld [vmem:[%s2743 + $0x10] sm:$0xf]
        %v2749 = vld [vmem:[%s2743 + $0x14] sm:$0xf]
        %v2750 = vld [vmem:[%s2743 + $0x18] sm:$0xf]
        %v2751 = vld [vmem:[%s2743 + $0x1c] sm:$0xf]
        %v2752 = vld [vmem:[%s2743 + $0x20] sm:$0xf]
        %v2753 = vld [vmem:[%s2743 + $0x24] sm:$0xf]
        %v2754 = vld [vmem:[%s2743 + $0x28] sm:$0xf]
        %v2755 = vld [vmem:[%s2743 + $0x2c] sm:$0xf]
        %v2756 = vld [vmem:[%s2743 + $0x30] sm:$0xf]
        %v2757 = vld [vmem:[%s2743 + $0x34] sm:$0xf]
        %v2758 = vld [vmem:[%s2743 + $0x38] sm:$0xf]
        %v2759 = vld [vmem:[%s2743 + $0x3c] sm:$0xf]
        %v2776 = vunpack.c.l.b16 %v2744
        %v2777 = vunpack.c.l.b16 %v2745
        %v2778 = vunpack.c.l.b16 %v2746
        %v2779 = vunpack.c.l.b16 %v2747
        %v2780 = vunpack.c.l.b16 %v2748
        %v2781 = vunpack.c.l.b16 %v2749
        %v2782 = vunpack.c.l.b16 %v2750
        %v2783 = vunpack.c.l.b16 %v2751
        %v2784 = vunpack.c.l.b16 %v2752
        %v2785 = vunpack.c.l.b16 %v2753
        %v2786 = vunpack.c.l.b16 %v2754
        %v2787 = vunpack.c.l.b16 %v2755
        %v2788 = vunpack.c.l.b16 %v2756
        %v2789 = vunpack.c.l.b16 %v2757
        %v2790 = vunpack.c.l.b16 %v2758
        %v2791 = vunpack.c.l.b16 %v2759
        %v2792 = vpack.c.b16 %v2777, %v2776
        %v2793 = vpack.c.b16 %v2779, %v2778
        %v2794 = vpack.c.b16 %v2781, %v2780
        %v2795 = vpack.c.b16 %v2783, %v2782
        %v2796 = vpack.c.b16 %v2785, %v2784
        %v2797 = vpack.c.b16 %v2787, %v2786
        %v2798 = vpack.c.b16 %v2789, %v2788
        %v2799 = vpack.c.b16 %v2791, %v2790
        %2808 = vmatpush.bf16.msra.mxu0 %v2799
        %2809 = vmatpush.bf16.msra.mxu0 %v2798
        %2810 = vmatpush.bf16.msra.mxu0 %v2797
        %2811 = vmatpush.bf16.msra.mxu0 %v2796
        %2812 = vmatpush.bf16.msra.mxu0 %v2795
        %2813 = vmatpush.bf16.msra.mxu0 %v2794
        %2814 = vmatpush.bf16.msra.mxu0 %v2793
        %2815 = vmatpush.bf16.msra.mxu0 %v2792
        %2816 = vmatmul.bf16.gmra.mxu0 %v2739
        %v2817 = vpop.f32.mrf.mxu0
        %v2818 = vadd.f32 0.0, %v2817
        %v2819 = vpop.f32.mrf.mxu0
        %v2820 = vadd.f32 0.0, %v2819
        %2821 = vmatmul.bf16.gmra.mxu0 %v2740
        %v2822 = vpop.f32.mrf.mxu0
        %v2823 = vadd.f32 0.0, %v2822
        %v2824 = vpop.f32.mrf.mxu0
        %v2825 = vadd.f32 0.0, %v2824
        %2826 = vmatmul.bf16.gmra.mxu0 %v2741
        %v2827 = vpop.f32.mrf.mxu0
        %v2828 = vadd.f32 0.0, %v2827
        %v2829 = vpop.f32.mrf.mxu0
        %v2830 = vadd.f32 0.0, %v2829
        %2831 = vmatmul.bf16.gmra.mxu0 %v2742
        %v2832 = vpop.f32.mrf.mxu0
        %v2833 = vadd.f32 0.0, %v2832
        %v2834 = vpop.f32.mrf.mxu0
        %v2835 = vadd.f32 0.0, %v2834
        %2836 = vdwg.mxu0
        %v2837 = vadd.f32 %v2687, %v2818
        %v2838 = vadd.f32 %v2689, %v2820
        %v2839 = vadd.f32 %v2692, %v2823
        %v2840 = vadd.f32 %v2694, %v2825
        %v2841 = vadd.f32 %v2697, %v2828
        %v2842 = vadd.f32 %v2699, %v2830
        %v2843 = vadd.f32 %v2702, %v2833
        %v2844 = vadd.f32 %v2704, %v2835
        %v2845 = vmul.f32 %v2494, %v1533
        %v2846 = vmul.f32 %v2477, %v1538
        %v2847 = vmul.f32 %v2479, %v1543
        %v2848 = vmul.f32 %v2481, %v1548
        %v2849 = vmul.f32 %v2483, %v1553
        %v2850 = vmul.f32 %v2485, %v1558
        %v2851 = vmul.f32 %v2486, %v1563
        %v2852 = vmul.f32 %v2466, %v1568
        %v2853 = vpack.c.bf16 %v2846, %v2845
        %v2854 = vpack.c.bf16 %v2848, %v2847
        %v2855 = vpack.c.bf16 %v2850, %v2849
        %v2856 = vpack.c.bf16 %v2852, %v2851
        %s2857 = scalar_lea.vmem [#allocation7], 192
        %v2858 = vld [vmem:[%s2857] sm:$0xf]
        %v2859 = vld [vmem:[%s2857 + $0x4] sm:$0xf]
        %v2860 = vld [vmem:[%s2857 + $0x8] sm:$0xf]
        %v2861 = vld [vmem:[%s2857 + $0xc] sm:$0xf]
        %v2862 = vld [vmem:[%s2857 + $0x10] sm:$0xf]
        %v2863 = vld [vmem:[%s2857 + $0x14] sm:$0xf]
        %v2864 = vld [vmem:[%s2857 + $0x18] sm:$0xf]
        %v2865 = vld [vmem:[%s2857 + $0x1c] sm:$0xf]
        %v2866 = vld [vmem:[%s2857 + $0x20] sm:$0xf]
        %v2867 = vld [vmem:[%s2857 + $0x24] sm:$0xf]
        %v2868 = vld [vmem:[%s2857 + $0x28] sm:$0xf]
        %v2869 = vld [vmem:[%s2857 + $0x2c] sm:$0xf]
        %v2870 = vld [vmem:[%s2857 + $0x30] sm:$0xf]
        %v2871 = vld [vmem:[%s2857 + $0x34] sm:$0xf]
        %v2872 = vld [vmem:[%s2857 + $0x38] sm:$0xf]
        %v2873 = vld [vmem:[%s2857 + $0x3c] sm:$0xf]
        %v2890 = vunpack.c.l.b16 %v2858
        %v2891 = vunpack.c.l.b16 %v2859
        %v2892 = vunpack.c.l.b16 %v2860
        %v2893 = vunpack.c.l.b16 %v2861
        %v2894 = vunpack.c.l.b16 %v2862
        %v2895 = vunpack.c.l.b16 %v2863
        %v2896 = vunpack.c.l.b16 %v2864
        %v2897 = vunpack.c.l.b16 %v2865
        %v2898 = vunpack.c.l.b16 %v2866
        %v2899 = vunpack.c.l.b16 %v2867
        %v2900 = vunpack.c.l.b16 %v2868
        %v2901 = vunpack.c.l.b16 %v2869
        %v2902 = vunpack.c.l.b16 %v2870
        %v2903 = vunpack.c.l.b16 %v2871
        %v2904 = vunpack.c.l.b16 %v2872
        %v2905 = vunpack.c.l.b16 %v2873
        %v2906 = vpack.c.b16 %v2891, %v2890
        %v2907 = vpack.c.b16 %v2893, %v2892
        %v2908 = vpack.c.b16 %v2895, %v2894
        %v2909 = vpack.c.b16 %v2897, %v2896
        %v2910 = vpack.c.b16 %v2899, %v2898
        %v2911 = vpack.c.b16 %v2901, %v2900
        %v2912 = vpack.c.b16 %v2903, %v2902
        %v2913 = vpack.c.b16 %v2905, %v2904
        %2922 = vmatpush.bf16.msra.mxu0 %v2913
        %2923 = vmatpush.bf16.msra.mxu0 %v2912
        %2924 = vmatpush.bf16.msra.mxu0 %v2911
        %2925 = vmatpush.bf16.msra.mxu0 %v2910
        %2926 = vmatpush.bf16.msra.mxu0 %v2909
        %2927 = vmatpush.bf16.msra.mxu0 %v2908
        %2928 = vmatpush.bf16.msra.mxu0 %v2907
        %2929 = vmatpush.bf16.msra.mxu0 %v2906
        %2930 = vmatmul.bf16.gmra.mxu0 %v2853
        %v2931 = vpop.f32.mrf.mxu0
        %v2932 = vadd.f32 0.0, %v2931
        %v2933 = vpop.f32.mrf.mxu0
        %v2934 = vadd.f32 0.0, %v2933
        %2935 = vmatmul.bf16.gmra.mxu0 %v2854
        %v2936 = vpop.f32.mrf.mxu0
        %v2937 = vadd.f32 0.0, %v2936
        %v2938 = vpop.f32.mrf.mxu0
        %v2939 = vadd.f32 0.0, %v2938
        %2940 = vmatmul.bf16.gmra.mxu0 %v2855
        %v2941 = vpop.f32.mrf.mxu0
        %v2942 = vadd.f32 0.0, %v2941
        %v2943 = vpop.f32.mrf.mxu0
        %v2944 = vadd.f32 0.0, %v2943
        %2945 = vmatmul.bf16.gmra.mxu0 %v2856
        %v2946 = vpop.f32.mrf.mxu0
        %v2947 = vadd.f32 0.0, %v2946
        %v2948 = vpop.f32.mrf.mxu0
        %v2949 = vadd.f32 0.0, %v2948
        %2950 = vdwg.mxu0
        %v2951 = vadd.f32 %v2837, %v2932
        %v2952 = vadd.f32 %v2838, %v2934
        %v2953 = vadd.f32 %v2839, %v2937
        %v2954 = vadd.f32 %v2840, %v2939
        %v2955 = vadd.f32 %v2841, %v2942
        %v2956 = vadd.f32 %v2842, %v2944
        %v2957 = vadd.f32 %v2843, %v2947
        %v2958 = vadd.f32 %v2844, %v2949
        %v2959 = vpack.c.bf16 %v971, %v968
        %v2960 = vpack.c.bf16 %v977, %v974
        %v2961 = vpack.c.bf16 %v983, %v980
        %v2962 = vpack.c.bf16 %v989, %v986
        %s2963 = scalar_lea.vmem [#allocation7], 256
        %v2964 = vld [vmem:[%s2963] sm:$0xf]
        %v2965 = vld [vmem:[%s2963 + $0x4] sm:$0xf]
        %v2966 = vld [vmem:[%s2963 + $0x8] sm:$0xf]
        %v2967 = vld [vmem:[%s2963 + $0xc] sm:$0xf]
        %v2968 = vld [vmem:[%s2963 + $0x10] sm:$0xf]
        %v2969 = vld [vmem:[%s2963 + $0x14] sm:$0xf]
        %v2970 = vld [vmem:[%s2963 + $0x18] sm:$0xf]
        %v2971 = vld [vmem:[%s2963 + $0x1c] sm:$0xf]
        %v2972 = vld [vmem:[%s2963 + $0x20] sm:$0xf]
        %v2973 = vld [vmem:[%s2963 + $0x24] sm:$0xf]
        %v2974 = vld [vmem:[%s2963 + $0x28] sm:$0xf]
        %v2975 = vld [vmem:[%s2963 + $0x2c] sm:$0xf]
        %v2976 = vld [vmem:[%s2963 + $0x30] sm:$0xf]
        %v2977 = vld [vmem:[%s2963 + $0x34] sm:$0xf]
        %v2978 = vld [vmem:[%s2963 + $0x38] sm:$0xf]
        %v2979 = vld [vmem:[%s2963 + $0x3c] sm:$0xf]
        %v2996 = vunpack.c.l.b16 %v2964
        %v2997 = vunpack.c.l.b16 %v2965
        %v2998 = vunpack.c.l.b16 %v2966
        %v2999 = vunpack.c.l.b16 %v2967
        %v3000 = vunpack.c.l.b16 %v2968
        %v3001 = vunpack.c.l.b16 %v2969
        %v3002 = vunpack.c.l.b16 %v2970
        %v3003 = vunpack.c.l.b16 %v2971
        %v3004 = vunpack.c.l.b16 %v2972
        %v3005 = vunpack.c.l.b16 %v2973
        %v3006 = vunpack.c.l.b16 %v2974
        %v3007 = vunpack.c.l.b16 %v2975
        %v3008 = vunpack.c.l.b16 %v2976
        %v3009 = vunpack.c.l.b16 %v2977
        %v3010 = vunpack.c.l.b16 %v2978
        %v3011 = vunpack.c.l.b16 %v2979
        %v3012 = vpack.c.b16 %v2997, %v2996
        %v3013 = vpack.c.b16 %v2999, %v2998
        %v3014 = vpack.c.b16 %v3001, %v3000
        %v3015 = vpack.c.b16 %v3003, %v3002
        %v3016 = vpack.c.b16 %v3005, %v3004
        %v3017 = vpack.c.b16 %v3007, %v3006
        %v3018 = vpack.c.b16 %v3009, %v3008
        %v3019 = vpack.c.b16 %v3011, %v3010
        %3028 = vmatpush.bf16.msra.mxu0 %v3019
        %3029 = vmatpush.bf16.msra.mxu0 %v3018
        %3030 = vmatpush.bf16.msra.mxu0 %v3017
        %3031 = vmatpush.bf16.msra.mxu0 %v3016
        %3032 = vmatpush.bf16.msra.mxu0 %v3015
        %3033 = vmatpush.bf16.msra.mxu0 %v3014
        %3034 = vmatpush.bf16.msra.mxu0 %v3013
        %3035 = vmatpush.bf16.msra.mxu0 %v3012
        %3036 = vmatmul.bf16.gmra.mxu0 %v2959
        %v3037 = vpop.f32.mrf.mxu0
        %v3038 = vadd.f32 0.0, %v3037
        %v3039 = vpop.f32.mrf.mxu0
        %v3040 = vadd.f32 0.0, %v3039
        %3041 = vmatmul.bf16.gmra.mxu0 %v2960
        %v3042 = vpop.f32.mrf.mxu0
        %v3043 = vadd.f32 0.0, %v3042
        %v3044 = vpop.f32.mrf.mxu0
        %v3045 = vadd.f32 0.0, %v3044
        %3046 = vmatmul.bf16.gmra.mxu0 %v2961
        %v3047 = vpop.f32.mrf.mxu0
        %v3048 = vadd.f32 0.0, %v3047
        %v3049 = vpop.f32.mrf.mxu0
        %v3050 = vadd.f32 0.0, %v3049
        %3051 = vmatmul.bf16.gmra.mxu0 %v2962
        %v3052 = vpop.f32.mrf.mxu0
        %v3053 = vadd.f32 0.0, %v3052
        %v3054 = vpop.f32.mrf.mxu0
        %v3055 = vadd.f32 0.0, %v3054
        %3056 = vdwg.mxu0
        %v3057 = vadd.f32 %v2951, %v3038
        %v3058 = vadd.f32 %v2952, %v3040
        %v3059 = vadd.f32 %v2953, %v3043
        %v3060 = vadd.f32 %v2954, %v3045
        %v3061 = vadd.f32 %v2955, %v3048
        %v3062 = vadd.f32 %v2956, %v3050
        %v3063 = vadd.f32 %v2957, %v3053
        %v3064 = vadd.f32 %v2958, %v3055
        %v3065 = vmul.f32 %v2710, %v1802
        %v3066 = vmul.f32 %v2712, %v1807
        %v3067 = vmul.f32 %v2714, %v1812
        %v3068 = vmul.f32 %v2716, %v1817
        %v3069 = vmul.f32 %v2718, %v1822
        %v3070 = vmul.f32 %v2720, %v1827
        %v3071 = vmul.f32 %v2721, %v1832
        %v3072 = vmul.f32 %v2730, %v1837
        %v3073 = vpack.c.bf16 %v3066, %v3065
        %v3074 = vpack.c.bf16 %v3068, %v3067
        %v3075 = vpack.c.bf16 %v3070, %v3069
        %v3076 = vpack.c.bf16 %v3072, %v3071
        %s3077 = scalar_lea.vmem [#allocation7], 320
        %v3078 = vld [vmem:[%s3077] sm:$0xf]
        %v3079 = vld [vmem:[%s3077 + $0x4] sm:$0xf]
        %v3080 = vld [vmem:[%s3077 + $0x8] sm:$0xf]
        %v3081 = vld [vmem:[%s3077 + $0xc] sm:$0xf]
        %v3082 = vld [vmem:[%s3077 + $0x10] sm:$0xf]
        %v3083 = vld [vmem:[%s3077 + $0x14] sm:$0xf]
        %v3084 = vld [vmem:[%s3077 + $0x18] sm:$0xf]
        %v3085 = vld [vmem:[%s3077 + $0x1c] sm:$0xf]
        %v3086 = vld [vmem:[%s3077 + $0x20] sm:$0xf]
        %v3087 = vld [vmem:[%s3077 + $0x24] sm:$0xf]
        %v3088 = vld [vmem:[%s3077 + $0x28] sm:$0xf]
        %v3089 = vld [vmem:[%s3077 + $0x2c] sm:$0xf]
        %v3090 = vld [vmem:[%s3077 + $0x30] sm:$0xf]
        %v3091 = vld [vmem:[%s3077 + $0x34] sm:$0xf]
        %v3092 = vld [vmem:[%s3077 + $0x38] sm:$0xf]
        %v3093 = vld [vmem:[%s3077 + $0x3c] sm:$0xf]
        %v3110 = vunpack.c.l.b16 %v3078
        %v3111 = vunpack.c.l.b16 %v3079
        %v3112 = vunpack.c.l.b16 %v3080
        %v3113 = vunpack.c.l.b16 %v3081
        %v3114 = vunpack.c.l.b16 %v3082
        %v3115 = vunpack.c.l.b16 %v3083
        %v3116 = vunpack.c.l.b16 %v3084
        %v3117 = vunpack.c.l.b16 %v3085
        %v3118 = vunpack.c.l.b16 %v3086
        %v3119 = vunpack.c.l.b16 %v3087
        %v3120 = vunpack.c.l.b16 %v3088
        %v3121 = vunpack.c.l.b16 %v3089
        %v3122 = vunpack.c.l.b16 %v3090
        %v3123 = vunpack.c.l.b16 %v3091
        %v3124 = vunpack.c.l.b16 %v3092
        %v3125 = vunpack.c.l.b16 %v3093
        %v3126 = vpack.c.b16 %v3111, %v3110
        %v3127 = vpack.c.b16 %v3113, %v3112
        %v3128 = vpack.c.b16 %v3115, %v3114
        %v3129 = vpack.c.b16 %v3117, %v3116
        %v3130 = vpack.c.b16 %v3119, %v3118
        %v3131 = vpack.c.b16 %v3121, %v3120
        %v3132 = vpack.c.b16 %v3123, %v3122
        %v3133 = vpack.c.b16 %v3125, %v3124
        %3142 = vmatpush.bf16.msra.mxu0 %v3133
        %3143 = vmatpush.bf16.msra.mxu0 %v3132
        %3144 = vmatpush.bf16.msra.mxu0 %v3131
        %3145 = vmatpush.bf16.msra.mxu0 %v3130
        %3146 = vmatpush.bf16.msra.mxu0 %v3129
        %3147 = vmatpush.bf16.msra.mxu0 %v3128
        %3148 = vmatpush.bf16.msra.mxu0 %v3127
        %3149 = vmatpush.bf16.msra.mxu0 %v3126
        %3150 = vmatmul.bf16.gmra.mxu0 %v3073
        %v3151 = vpop.f32.mrf.mxu0
        %v3152 = vadd.f32 0.0, %v3151
        %v3153 = vpop.f32.mrf.mxu0
        %v3154 = vadd.f32 0.0, %v3153
        %3155 = vmatmul.bf16.gmra.mxu0 %v3074
        %v3156 = vpop.f32.mrf.mxu0
        %v3157 = vadd.f32 0.0, %v3156
        %v3158 = vpop.f32.mrf.mxu0
        %v3159 = vadd.f32 0.0, %v3158
        %3160 = vmatmul.bf16.gmra.mxu0 %v3075
        %v3161 = vpop.f32.mrf.mxu0
        %v3162 = vadd.f32 0.0, %v3161
        %v3163 = vpop.f32.mrf.mxu0
        %v3164 = vadd.f32 0.0, %v3163
        %3165 = vmatmul.bf16.gmra.mxu0 %v3076
        %v3166 = vpop.f32.mrf.mxu0
        %v3167 = vadd.f32 0.0, %v3166
        %v3168 = vpop.f32.mrf.mxu0
        %v3169 = vadd.f32 0.0, %v3168
        %3170 = vdwg.mxu0
        %v3171 = vadd.f32 %v3057, %v3152
        %v3172 = vadd.f32 %v3058, %v3154
        %v3173 = vadd.f32 %v3059, %v3157
        %v3174 = vadd.f32 %v3060, %v3159
        %v3175 = vadd.f32 %v3061, %v3162
        %v3176 = vadd.f32 %v3062, %v3164
        %v3177 = vadd.f32 %v3063, %v3167
        %v3178 = vadd.f32 %v3064, %v3169
        %v3179 = vmul.f32 %v2477, %v1965
        %v3180 = vmul.f32 %v2479, %v1970
        %v3181 = vmul.f32 %v2481, %v1975
        %v3182 = vmul.f32 %v2483, %v1980
        %v3183 = vmul.f32 %v2485, %v1985
        %v3184 = vmul.f32 %v2486, %v1990
        %v3185 = vmul.f32 %v2466, %v1995
        %v3186 = vmul.f32 %v2494, %v2000
        %v3187 = vpack.c.bf16 %v3180, %v3179
        %v3188 = vpack.c.bf16 %v3182, %v3181
        %v3189 = vpack.c.bf16 %v3184, %v3183
        %v3190 = vpack.c.bf16 %v3186, %v3185
        %s3191 = scalar_lea.vmem [#allocation7], 384
        %v3192 = vld [vmem:[%s3191] sm:$0xf]
        %v3193 = vld [vmem:[%s3191 + $0x4] sm:$0xf]
        %v3194 = vld [vmem:[%s3191 + $0x8] sm:$0xf]
        %v3195 = vld [vmem:[%s3191 + $0xc] sm:$0xf]
        %v3196 = vld [vmem:[%s3191 + $0x10] sm:$0xf]
        %v3197 = vld [vmem:[%s3191 + $0x14] sm:$0xf]
        %v3198 = vld [vmem:[%s3191 + $0x18] sm:$0xf]
        %v3199 = vld [vmem:[%s3191 + $0x1c] sm:$0xf]
        %v3200 = vld [vmem:[%s3191 + $0x20] sm:$0xf]
        %v3201 = vld [vmem:[%s3191 + $0x24] sm:$0xf]
        %v3202 = vld [vmem:[%s3191 + $0x28] sm:$0xf]
        %v3203 = vld [vmem:[%s3191 + $0x2c] sm:$0xf]
        %v3204 = vld [vmem:[%s3191 + $0x30] sm:$0xf]
        %v3205 = vld [vmem:[%s3191 + $0x34] sm:$0xf]
        %v3206 = vld [vmem:[%s3191 + $0x38] sm:$0xf]
        %v3207 = vld [vmem:[%s3191 + $0x3c] sm:$0xf]
        %v3224 = vunpack.c.l.b16 %v3192
        %v3225 = vunpack.c.l.b16 %v3193
        %v3226 = vunpack.c.l.b16 %v3194
        %v3227 = vunpack.c.l.b16 %v3195
        %v3228 = vunpack.c.l.b16 %v3196
        %v3229 = vunpack.c.l.b16 %v3197
        %v3230 = vunpack.c.l.b16 %v3198
        %v3231 = vunpack.c.l.b16 %v3199
        %v3232 = vunpack.c.l.b16 %v3200
        %v3233 = vunpack.c.l.b16 %v3201
        %v3234 = vunpack.c.l.b16 %v3202
        %v3235 = vunpack.c.l.b16 %v3203
        %v3236 = vunpack.c.l.b16 %v3204
        %v3237 = vunpack.c.l.b16 %v3205
        %v3238 = vunpack.c.l.b16 %v3206
        %v3239 = vunpack.c.l.b16 %v3207
        %v3240 = vpack.c.b16 %v3225, %v3224
        %v3241 = vpack.c.b16 %v3227, %v3226
        %v3242 = vpack.c.b16 %v3229, %v3228
        %v3243 = vpack.c.b16 %v3231, %v3230
        %v3244 = vpack.c.b16 %v3233, %v3232
        %v3245 = vpack.c.b16 %v3235, %v3234
        %v3246 = vpack.c.b16 %v3237, %v3236
        %v3247 = vpack.c.b16 %v3239, %v3238
        %3256 = vmatpush.bf16.msra.mxu0 %v3247
        %3257 = vmatpush.bf16.msra.mxu0 %v3246
        %3258 = vmatpush.bf16.msra.mxu0 %v3245
        %3259 = vmatpush.bf16.msra.mxu0 %v3244
        %3260 = vmatpush.bf16.msra.mxu0 %v3243
        %3261 = vmatpush.bf16.msra.mxu0 %v3242
        %3262 = vmatpush.bf16.msra.mxu0 %v3241
        %3263 = vmatpush.bf16.msra.mxu0 %v3240
        %3264 = vmatmul.bf16.gmra.mxu0 %v3187
        %v3265 = vpop.f32.mrf.mxu0
        %v3266 = vadd.f32 0.0, %v3265
        %v3267 = vpop.f32.mrf.mxu0
        %v3268 = vadd.f32 0.0, %v3267
        %3269 = vmatmul.bf16.gmra.mxu0 %v3188
        %v3270 = vpop.f32.mrf.mxu0
        %v3271 = vadd.f32 0.0, %v3270
        %v3272 = vpop.f32.mrf.mxu0
        %v3273 = vadd.f32 0.0, %v3272
        %3274 = vmatmul.bf16.gmra.mxu0 %v3189
        %v3275 = vpop.f32.mrf.mxu0
        %v3276 = vadd.f32 0.0, %v3275
        %v3277 = vpop.f32.mrf.mxu0
        %v3278 = vadd.f32 0.0, %v3277
        %3279 = vmatmul.bf16.gmra.mxu0 %v3190
        %v3280 = vpop.f32.mrf.mxu0
        %v3281 = vadd.f32 0.0, %v3280
        %v3282 = vpop.f32.mrf.mxu0
        %v3283 = vadd.f32 0.0, %v3282
        %3284 = vdwg.mxu0
        %v3285 = vadd.f32 %v3171, %v3266
        %v3286 = vadd.f32 %v3172, %v3268
        %v3287 = vadd.f32 %v3173, %v3271
        %v3288 = vadd.f32 %v3174, %v3273
        %v3289 = vadd.f32 %v3175, %v3276
        %v3290 = vadd.f32 %v3176, %v3278
        %v3291 = vadd.f32 %v3177, %v3281
        %v3292 = vadd.f32 %v3178, %v3283
        %v3293 = vmul.f32 %v971, %v2128
        %v3294 = vmul.f32 %v974, %v2133
        %v3295 = vmul.f32 %v977, %v2138
        %v3296 = vmul.f32 %v980, %v2143
        %v3297 = vmul.f32 %v983, %v2148
        %v3298 = vmul.f32 %v986, %v2153
        %v3299 = vmul.f32 %v989, %v2158
        %v3300 = vmul.f32 %v968, %v2163
        %v3301 = vpack.c.bf16 %v3294, %v3293
        %v3302 = vpack.c.bf16 %v3296, %v3295
        %v3303 = vpack.c.bf16 %v3298, %v3297
        %v3304 = vpack.c.bf16 %v3300, %v3299
        %s3305 = scalar_lea.vmem [#allocation7], 448
        %v3306 = vld [vmem:[%s3305] sm:$0xf]
        %v3307 = vld [vmem:[%s3305 + $0x4] sm:$0xf]
        %v3308 = vld [vmem:[%s3305 + $0x8] sm:$0xf]
        %v3309 = vld [vmem:[%s3305 + $0xc] sm:$0xf]
        %v3310 = vld [vmem:[%s3305 + $0x10] sm:$0xf]
        %v3311 = vld [vmem:[%s3305 + $0x14] sm:$0xf]
        %v3312 = vld [vmem:[%s3305 + $0x18] sm:$0xf]
        %v3313 = vld [vmem:[%s3305 + $0x1c] sm:$0xf]
        %v3314 = vld [vmem:[%s3305 + $0x20] sm:$0xf]
        %v3315 = vld [vmem:[%s3305 + $0x24] sm:$0xf]
        %v3316 = vld [vmem:[%s3305 + $0x28] sm:$0xf]
        %v3317 = vld [vmem:[%s3305 + $0x2c] sm:$0xf]
        %v3318 = vld [vmem:[%s3305 + $0x30] sm:$0xf]
        %v3319 = vld [vmem:[%s3305 + $0x34] sm:$0xf]
        %v3320 = vld [vmem:[%s3305 + $0x38] sm:$0xf]
        %v3321 = vld [vmem:[%s3305 + $0x3c] sm:$0xf]
        %v3338 = vunpack.c.l.b16 %v3306
        %v3339 = vunpack.c.l.b16 %v3307
        %v3340 = vunpack.c.l.b16 %v3308
        %v3341 = vunpack.c.l.b16 %v3309
        %v3342 = vunpack.c.l.b16 %v3310
        %v3343 = vunpack.c.l.b16 %v3311
        %v3344 = vunpack.c.l.b16 %v3312
        %v3345 = vunpack.c.l.b16 %v3313
        %v3346 = vunpack.c.l.b16 %v3314
        %v3347 = vunpack.c.l.b16 %v3315
        %v3348 = vunpack.c.l.b16 %v3316
        %v3349 = vunpack.c.l.b16 %v3317
        %v3350 = vunpack.c.l.b16 %v3318
        %v3351 = vunpack.c.l.b16 %v3319
        %v3352 = vunpack.c.l.b16 %v3320
        %v3353 = vunpack.c.l.b16 %v3321
        %v3354 = vpack.c.b16 %v3339, %v3338
        %v3355 = vpack.c.b16 %v3341, %v3340
        %v3356 = vpack.c.b16 %v3343, %v3342
        %v3357 = vpack.c.b16 %v3345, %v3344
        %v3358 = vpack.c.b16 %v3347, %v3346
        %v3359 = vpack.c.b16 %v3349, %v3348
        %v3360 = vpack.c.b16 %v3351, %v3350
        %v3361 = vpack.c.b16 %v3353, %v3352
        %3370 = vmatpush.bf16.msra.mxu0 %v3361
        %3371 = vmatpush.bf16.msra.mxu0 %v3360
        %3372 = vmatpush.bf16.msra.mxu0 %v3359
        %3373 = vmatpush.bf16.msra.mxu0 %v3358
        %3374 = vmatpush.bf16.msra.mxu0 %v3357
        %3375 = vmatpush.bf16.msra.mxu0 %v3356
        %3376 = vmatpush.bf16.msra.mxu0 %v3355
        %3377 = vmatpush.bf16.msra.mxu0 %v3354
        %3378 = vmatmul.bf16.gmra.mxu0 %v3301
        %v3379 = vpop.f32.mrf.mxu0
        %v3380 = vadd.f32 0.0, %v3379
        %v3381 = vpop.f32.mrf.mxu0
        %v3382 = vadd.f32 0.0, %v3381
        %3383 = vmatmul.bf16.gmra.mxu0 %v3302
        %v3384 = vpop.f32.mrf.mxu0
        %v3385 = vadd.f32 0.0, %v3384
        %v3386 = vpop.f32.mrf.mxu0
        %v3387 = vadd.f32 0.0, %v3386
        %3388 = vmatmul.bf16.gmra.mxu0 %v3303
        %v3389 = vpop.f32.mrf.mxu0
        %v3390 = vadd.f32 0.0, %v3389
        %v3391 = vpop.f32.mrf.mxu0
        %v3392 = vadd.f32 0.0, %v3391
        %3393 = vmatmul.bf16.gmra.mxu0 %v3304
        %v3394 = vpop.f32.mrf.mxu0
        %v3395 = vadd.f32 0.0, %v3394
        %v3396 = vpop.f32.mrf.mxu0
        %v3397 = vadd.f32 0.0, %v3396
        %3398 = vdwg.mxu0
        %v3399 = vadd.f32 %v3285, %v3380
        %v3400 = vadd.f32 %v3286, %v3382
        %v3401 = vadd.f32 %v3287, %v3385
        %v3402 = vadd.f32 %v3288, %v3387
        %v3403 = vadd.f32 %v3289, %v3390
        %v3404 = vadd.f32 %v3290, %v3392
        %v3405 = vadd.f32 %v3291, %v3395
        %v3406 = vadd.f32 %v3292, %v3397
        %v3407 = vmul.f32 %v2712, %v2291
        %v3408 = vmul.f32 %v2714, %v2296
        %v3409 = vmul.f32 %v2716, %v2301
        %v3410 = vmul.f32 %v2718, %v2306
        %v3411 = vmul.f32 %v2720, %v2311
        %v3412 = vmul.f32 %v2721, %v2316
        %v3413 = vmul.f32 %v2730, %v2321
        %v3414 = vmul.f32 %v2710, %v2326
        %v3415 = vpack.c.bf16 %v3408, %v3407
        %v3416 = vpack.c.bf16 %v3410, %v3409
        %v3417 = vpack.c.bf16 %v3412, %v3411
        %v3418 = vpack.c.bf16 %v3414, %v3413
        %s3419 = scalar_lea.vmem [#allocation7], 512
        %v3420 = vld [vmem:[%s3419] sm:$0xf]
        %v3421 = vld [vmem:[%s3419 + $0x4] sm:$0xf]
        %v3422 = vld [vmem:[%s3419 + $0x8] sm:$0xf]
        %v3423 = vld [vmem:[%s3419 + $0xc] sm:$0xf]
        %v3424 = vld [vmem:[%s3419 + $0x10] sm:$0xf]
        %v3425 = vld [vmem:[%s3419 + $0x14] sm:$0xf]
        %v3426 = vld [vmem:[%s3419 + $0x18] sm:$0xf]
        %v3427 = vld [vmem:[%s3419 + $0x1c] sm:$0xf]
        %v3428 = vld [vmem:[%s3419 + $0x20] sm:$0xf]
        %v3429 = vld [vmem:[%s3419 + $0x24] sm:$0xf]
        %v3430 = vld [vmem:[%s3419 + $0x28] sm:$0xf]
        %v3431 = vld [vmem:[%s3419 + $0x2c] sm:$0xf]
        %v3432 = vld [vmem:[%s3419 + $0x30] sm:$0xf]
        %v3433 = vld [vmem:[%s3419 + $0x34] sm:$0xf]
        %v3434 = vld [vmem:[%s3419 + $0x38] sm:$0xf]
        %v3435 = vld [vmem:[%s3419 + $0x3c] sm:$0xf]
        %v3452 = vunpack.c.l.b16 %v3420
        %v3453 = vunpack.c.l.b16 %v3421
        %v3454 = vunpack.c.l.b16 %v3422
        %v3455 = vunpack.c.l.b16 %v3423
        %v3456 = vunpack.c.l.b16 %v3424
        %v3457 = vunpack.c.l.b16 %v3425
        %v3458 = vunpack.c.l.b16 %v3426
        %v3459 = vunpack.c.l.b16 %v3427
        %v3460 = vunpack.c.l.b16 %v3428
        %v3461 = vunpack.c.l.b16 %v3429
        %v3462 = vunpack.c.l.b16 %v3430
        %v3463 = vunpack.c.l.b16 %v3431
        %v3464 = vunpack.c.l.b16 %v3432
        %v3465 = vunpack.c.l.b16 %v3433
        %v3466 = vunpack.c.l.b16 %v3434
        %v3467 = vunpack.c.l.b16 %v3435
        %v3468 = vpack.c.b16 %v3453, %v3452
        %v3469 = vpack.c.b16 %v3455, %v3454
        %v3470 = vpack.c.b16 %v3457, %v3456
        %v3471 = vpack.c.b16 %v3459, %v3458
        %v3472 = vpack.c.b16 %v3461, %v3460
        %v3473 = vpack.c.b16 %v3463, %v3462
        %v3474 = vpack.c.b16 %v3465, %v3464
        %v3475 = vpack.c.b16 %v3467, %v3466
        %3484 = vmatpush.bf16.msra.mxu0 %v3475
        %3485 = vmatpush.bf16.msra.mxu0 %v3474
        %3486 = vmatpush.bf16.msra.mxu0 %v3473
        %3487 = vmatpush.bf16.msra.mxu0 %v3472
        %3488 = vmatpush.bf16.msra.mxu0 %v3471
        %3489 = vmatpush.bf16.msra.mxu0 %v3470
        %3490 = vmatpush.bf16.msra.mxu0 %v3469
        %3491 = vmatpush.bf16.msra.mxu0 %v3468
        %3492 = vmatmul.bf16.gmra.mxu0 %v3415
        %v3493 = vpop.f32.mrf.mxu0
        %v3494 = vadd.f32 0.0, %v3493
        %v3495 = vpop.f32.mrf.mxu0
        %v3496 = vadd.f32 0.0, %v3495
        %3497 = vmatmul.bf16.gmra.mxu0 %v3416
        %v3498 = vpop.f32.mrf.mxu0
        %v3499 = vadd.f32 0.0, %v3498
        %v3500 = vpop.f32.mrf.mxu0
        %v3501 = vadd.f32 0.0, %v3500
        %3502 = vmatmul.bf16.gmra.mxu0 %v3417
        %v3503 = vpop.f32.mrf.mxu0
        %v3504 = vadd.f32 0.0, %v3503
        %v3505 = vpop.f32.mrf.mxu0
        %v3506 = vadd.f32 0.0, %v3505
        %3507 = vmatmul.bf16.gmra.mxu0 %v3418
        %v3508 = vpop.f32.mrf.mxu0
        %v3509 = vadd.f32 0.0, %v3508
        %v3510 = vpop.f32.mrf.mxu0
        %v3511 = vadd.f32 0.0, %v3510
        %3512 = vdwg.mxu0
        %v3513 = vadd.f32 %v3399, %v3494
        %v3514 = vadd.f32 %v3400, %v3496
        %v3515 = vadd.f32 %v3401, %v3499
        %v3516 = vadd.f32 %v3402, %v3501
        %v3517 = vadd.f32 %v3403, %v3504
        %v3518 = vadd.f32 %v3404, %v3506
        %v3519 = vadd.f32 %v3405, %v3509
        %v3520 = vadd.f32 %v3406, %v3511
        %v3521 = vld [vmem:[%s7] sm:$0x1]
        %v3523 = vperm.slane %v3521, 0
        %v3525 = vadd.f32 %v3513, %v3523
        %v3526 = vadd.f32 %v3514, %v3523
        %v3527 = vadd.f32 %v3515, %v3523
        %v3528 = vadd.f32 %v3516, %v3523
        %v3529 = vadd.f32 %v3517, %v3523
        %v3530 = vadd.f32 %v3518, %v3523
        %v3531 = vadd.f32 %v3519, %v3523
        %v3532 = vadd.f32 %v3520, %v3523
        %v3533 = vmax.f32 %v3525, 0.0
        %v3534 = vmax.f32 %v3526, 0.0
        %v3535 = vmax.f32 %v3527, 0.0
        %v3536 = vmax.f32 %v3528, 0.0
        %v3537 = vmax.f32 %v3529, 0.0
        %v3538 = vmax.f32 %v3530, 0.0
        %v3539 = vmax.f32 %v3531, 0.0
        %v3540 = vmax.f32 %v3532, 0.0
        %v3543 = vrot.slane %v3539, 7
        %v3544 = vrot.slane %v3540, 7
        %v3545 = vsel %vm992, %v3543, %v3544
        %v3554 = vrot.slane %v3533, 7
        %v3555 = vrot.slane %v3534, 7
        %v3556 = vsel %vm992, %v3554, %v3555
        %v3557 = vrot.slane %v3535, 7
        %v3558 = vsel %vm992, %v3555, %v3557
        %v3559 = vrot.slane %v3536, 7
        %v3560 = vsel %vm992, %v3557, %v3559
        %v3561 = vrot.slane %v3537, 7
        %v3562 = vsel %vm992, %v3559, %v3561
        %v3563 = vrot.slane %v3538, 7
        %v3564 = vsel %vm992, %v3561, %v3563
        %v3565 = vsel %vm992, %v3563, %v3543
        %v3573 = vsel %vm992, %v3544, %v3554
        %v3574 = vmul.f32 %v3545, %v1035
        %v3575 = vmul.f32 %v3573, %v1040
        %v3576 = vmul.f32 %v3556, %v1045
        %v3577 = vmul.f32 %v3558, %v1050
        %v3578 = vmul.f32 %v3560, %v1055
        %v3579 = vmul.f32 %v3562, %v1060
        %v3580 = vmul.f32 %v3564, %v1065
        %v3581 = vmul.f32 %v3565, %v1070
        %v3582 = vpack.c.bf16 %v3575, %v3574
        %v3583 = vpack.c.bf16 %v3577, %v3576
        %v3584 = vpack.c.bf16 %v3579, %v3578
        %v3585 = vpack.c.bf16 %v3581, %v3580
        %v3586 = vld [vmem:[#allocation8] sm:$0xf]
        %v3587 = vld [vmem:[#allocation8 + $0x4] sm:$0xf]
        %v3588 = vld [vmem:[#allocation8 + $0x8] sm:$0xf]
        %v3589 = vld [vmem:[#allocation8 + $0xc] sm:$0xf]
        %v3590 = vld [vmem:[#allocation8 + $0x10] sm:$0xf]
        %v3591 = vld [vmem:[#allocation8 + $0x14] sm:$0xf]
        %v3592 = vld [vmem:[#allocation8 + $0x18] sm:$0xf]
        %v3593 = vld [vmem:[#allocation8 + $0x1c] sm:$0xf]
        %v3594 = vld [vmem:[#allocation8 + $0x20] sm:$0xf]
        %v3595 = vld [vmem:[#allocation8 + $0x24] sm:$0xf]
        %v3596 = vld [vmem:[#allocation8 + $0x28] sm:$0xf]
        %v3597 = vld [vmem:[#allocation8 + $0x2c] sm:$0xf]
        %v3598 = vld [vmem:[#allocation8 + $0x30] sm:$0xf]
        %v3599 = vld [vmem:[#allocation8 + $0x34] sm:$0xf]
        %v3600 = vld [vmem:[#allocation8 + $0x38] sm:$0xf]
        %v3601 = vld [vmem:[#allocation8 + $0x3c] sm:$0xf]
        %v3602 = vmul.f32 %v3540, %v1112
        %v3603 = vmul.f32 %v3533, %v1117
        %v3604 = vmul.f32 %v3534, %v1122
        %v3605 = vmul.f32 %v3535, %v1127
        %v3606 = vmul.f32 %v3536, %v1132
        %v3607 = vmul.f32 %v3537, %v1137
        %v3608 = vmul.f32 %v3538, %v1142
        %v3609 = vmul.f32 %v3539, %v1147
        %v3610 = vpack.c.bf16 %v3603, %v3602
        %v3611 = vpack.c.bf16 %v3605, %v3604
        %v3612 = vpack.c.bf16 %v3607, %v3606
        %v3613 = vpack.c.bf16 %v3609, %v3608
        %s3614 = scalar_lea.vmem [#allocation8], 64
        %v3615 = vld [vmem:[%s3614] sm:$0xf]
        %v3616 = vld [vmem:[%s3614 + $0x4] sm:$0xf]
        %v3617 = vld [vmem:[%s3614 + $0x8] sm:$0xf]
        %v3618 = vld [vmem:[%s3614 + $0xc] sm:$0xf]
        %v3619 = vld [vmem:[%s3614 + $0x10] sm:$0xf]
        %v3620 = vld [vmem:[%s3614 + $0x14] sm:$0xf]
        %v3621 = vld [vmem:[%s3614 + $0x18] sm:$0xf]
        %v3622 = vld [vmem:[%s3614 + $0x1c] sm:$0xf]
        %v3623 = vld [vmem:[%s3614 + $0x20] sm:$0xf]
        %v3624 = vld [vmem:[%s3614 + $0x24] sm:$0xf]
        %v3625 = vld [vmem:[%s3614 + $0x28] sm:$0xf]
        %v3626 = vld [vmem:[%s3614 + $0x2c] sm:$0xf]
        %v3627 = vld [vmem:[%s3614 + $0x30] sm:$0xf]
        %v3628 = vld [vmem:[%s3614 + $0x34] sm:$0xf]
        %v3629 = vld [vmem:[%s3614 + $0x38] sm:$0xf]
        %v3630 = vld [vmem:[%s3614 + $0x3c] sm:$0xf]
        %v3647 = vunpack.c.l.b16 %v3615
        %v3648 = vunpack.c.l.b16 %v3616
        %v3649 = vunpack.c.l.b16 %v3617
        %v3650 = vunpack.c.l.b16 %v3618
        %v3651 = vunpack.c.l.b16 %v3619
        %v3652 = vunpack.c.l.b16 %v3620
        %v3653 = vunpack.c.l.b16 %v3621
        %v3654 = vunpack.c.l.b16 %v3622
        %v3655 = vunpack.c.l.b16 %v3623
        %v3656 = vunpack.c.l.b16 %v3624
        %v3657 = vunpack.c.l.b16 %v3625
        %v3658 = vunpack.c.l.b16 %v3626
        %v3659 = vunpack.c.l.b16 %v3627
        %v3660 = vunpack.c.l.b16 %v3628
        %v3661 = vunpack.c.l.b16 %v3629
        %v3662 = vunpack.c.l.b16 %v3630
        %v3663 = vpack.c.b16 %v3648, %v3647
        %v3664 = vpack.c.b16 %v3650, %v3649
        %v3665 = vpack.c.b16 %v3652, %v3651
        %v3666 = vpack.c.b16 %v3654, %v3653
        %v3667 = vpack.c.b16 %v3656, %v3655
        %v3668 = vpack.c.b16 %v3658, %v3657
        %v3669 = vpack.c.b16 %v3660, %v3659
        %v3670 = vpack.c.b16 %v3662, %v3661
        %3679 = vmatpush.bf16.msra.mxu0 %v3670
        %3680 = vmatpush.bf16.msra.mxu0 %v3669
        %3681 = vmatpush.bf16.msra.mxu0 %v3668
        %3682 = vmatpush.bf16.msra.mxu0 %v3667
        %3683 = vmatpush.bf16.msra.mxu0 %v3666
        %3684 = vmatpush.bf16.msra.mxu0 %v3665
        %3685 = vmatpush.bf16.msra.mxu0 %v3664
        %3686 = vmatpush.bf16.msra.mxu0 %v3663
        %3687 = vmatmul.bf16.gmra.mxu0 %v3610
        %v3688 = vpop.f32.mrf.mxu0
        %v3689 = vadd.f32 0.0, %v3688
        %v3690 = vpop.f32.mrf.mxu0
        %v3691 = vadd.f32 0.0, %v3690
        %3692 = vmatmul.bf16.gmra.mxu0 %v3611
        %v3693 = vpop.f32.mrf.mxu0
        %v3694 = vadd.f32 0.0, %v3693
        %v3695 = vpop.f32.mrf.mxu0
        %v3696 = vadd.f32 0.0, %v3695
        %3697 = vmatmul.bf16.gmra.mxu0 %v3612
        %v3698 = vpop.f32.mrf.mxu0
        %v3699 = vadd.f32 0.0, %v3698
        %v3700 = vpop.f32.mrf.mxu0
        %v3701 = vadd.f32 0.0, %v3700
        %3702 = vmatmul.bf16.gmra.mxu0 %v3613
        %v3703 = vpop.f32.mrf.mxu0
        %v3704 = vadd.f32 0.0, %v3703
        %v3705 = vpop.f32.mrf.mxu0
        %v3706 = vadd.f32 0.0, %v3705
        %3707 = vdwg.mxu0
        %v3724 = vunpack.c.l.b16 %v3586
        %v3725 = vunpack.c.l.b16 %v3587
        %v3726 = vunpack.c.l.b16 %v3588
        %v3727 = vunpack.c.l.b16 %v3589
        %v3728 = vunpack.c.l.b16 %v3590
        %v3729 = vunpack.c.l.b16 %v3591
        %v3730 = vunpack.c.l.b16 %v3592
        %v3731 = vunpack.c.l.b16 %v3593
        %v3732 = vunpack.c.l.b16 %v3594
        %v3733 = vunpack.c.l.b16 %v3595
        %v3734 = vunpack.c.l.b16 %v3596
        %v3735 = vunpack.c.l.b16 %v3597
        %v3736 = vunpack.c.l.b16 %v3598
        %v3737 = vunpack.c.l.b16 %v3599
        %v3738 = vunpack.c.l.b16 %v3600
        %v3739 = vunpack.c.l.b16 %v3601
        %v3740 = vpack.c.b16 %v3725, %v3724
        %v3741 = vpack.c.b16 %v3727, %v3726
        %v3742 = vpack.c.b16 %v3729, %v3728
        %v3743 = vpack.c.b16 %v3731, %v3730
        %v3744 = vpack.c.b16 %v3733, %v3732
        %v3745 = vpack.c.b16 %v3735, %v3734
        %v3746 = vpack.c.b16 %v3737, %v3736
        %v3747 = vpack.c.b16 %v3739, %v3738
        %3756 = vmatpush.bf16.msra.mxu0 %v3747
        %3757 = vmatpush.bf16.msra.mxu0 %v3746
        %3758 = vmatpush.bf16.msra.mxu0 %v3745
        %3759 = vmatpush.bf16.msra.mxu0 %v3744
        %3760 = vmatpush.bf16.msra.mxu0 %v3743
        %3761 = vmatpush.bf16.msra.mxu0 %v3742
        %3762 = vmatpush.bf16.msra.mxu0 %v3741
        %3763 = vmatpush.bf16.msra.mxu0 %v3740
        %3764 = vmatmul.bf16.gmra.mxu0 %v3582
        %v3765 = vpop.f32.mrf.mxu0
        %v3766 = vadd.f32 %v3689, %v3765
        %v3767 = vpop.f32.mrf.mxu0
        %v3768 = vadd.f32 %v3691, %v3767
        %3769 = vmatmul.bf16.gmra.mxu0 %v3583
        %v3770 = vpop.f32.mrf.mxu0
        %v3771 = vadd.f32 %v3694, %v3770
        %v3772 = vpop.f32.mrf.mxu0
        %v3773 = vadd.f32 %v3696, %v3772
        %3774 = vmatmul.bf16.gmra.mxu0 %v3584
        %v3775 = vpop.f32.mrf.mxu0
        %v3776 = vadd.f32 %v3699, %v3775
        %v3777 = vpop.f32.mrf.mxu0
        %v3778 = vadd.f32 %v3701, %v3777
        %3779 = vmatmul.bf16.gmra.mxu0 %v3585
        %v3780 = vpop.f32.mrf.mxu0
        %v3781 = vadd.f32 %v3704, %v3780
        %v3782 = vpop.f32.mrf.mxu0
        %v3783 = vadd.f32 %v3706, %v3782
        %3784 = vdwg.mxu0
        %v3785 = vrot.slane %v3540, 1
        %v3787 = vrot.slane %v3533, 1
        %v3788 = vrot.slane %v3534, 1
        %v3789 = vsel %vm1334, %v3787, %v3788
        %v3790 = vrot.slane %v3535, 1
        %v3791 = vsel %vm1334, %v3788, %v3790
        %v3792 = vrot.slane %v3536, 1
        %v3793 = vsel %vm1334, %v3790, %v3792
        %v3794 = vrot.slane %v3537, 1
        %v3795 = vsel %vm1334, %v3792, %v3794
        %v3796 = vrot.slane %v3538, 1
        %v3797 = vsel %vm1334, %v3794, %v3796
        %v3798 = vrot.slane %v3539, 1
        %v3799 = vsel %vm1334, %v3796, %v3798
        %v3800 = vsel %vm1334, %v3798, %v3785
        %v3809 = vsel %vm1334, %v3785, %v3787
        %v3810 = vmul.f32 %v3809, %v1370
        %v3811 = vmul.f32 %v3789, %v1375
        %v3812 = vmul.f32 %v3791, %v1380
        %v3813 = vmul.f32 %v3793, %v1385
        %v3814 = vmul.f32 %v3795, %v1390
        %v3815 = vmul.f32 %v3797, %v1395
        %v3816 = vmul.f32 %v3799, %v1400
        %v3817 = vmul.f32 %v3800, %v1405
        %v3818 = vpack.c.bf16 %v3811, %v3810
        %v3819 = vpack.c.bf16 %v3813, %v3812
        %v3820 = vpack.c.bf16 %v3815, %v3814
        %v3821 = vpack.c.bf16 %v3817, %v3816
        %s3822 = scalar_lea.vmem [#allocation8], 128
        %v3823 = vld [vmem:[%s3822] sm:$0xf]
        %v3824 = vld [vmem:[%s3822 + $0x4] sm:$0xf]
        %v3825 = vld [vmem:[%s3822 + $0x8] sm:$0xf]
        %v3826 = vld [vmem:[%s3822 + $0xc] sm:$0xf]
        %v3827 = vld [vmem:[%s3822 + $0x10] sm:$0xf]
        %v3828 = vld [vmem:[%s3822 + $0x14] sm:$0xf]
        %v3829 = vld [vmem:[%s3822 + $0x18] sm:$0xf]
        %v3830 = vld [vmem:[%s3822 + $0x1c] sm:$0xf]
        %v3831 = vld [vmem:[%s3822 + $0x20] sm:$0xf]
        %v3832 = vld [vmem:[%s3822 + $0x24] sm:$0xf]
        %v3833 = vld [vmem:[%s3822 + $0x28] sm:$0xf]
        %v3834 = vld [vmem:[%s3822 + $0x2c] sm:$0xf]
        %v3835 = vld [vmem:[%s3822 + $0x30] sm:$0xf]
        %v3836 = vld [vmem:[%s3822 + $0x34] sm:$0xf]
        %v3837 = vld [vmem:[%s3822 + $0x38] sm:$0xf]
        %v3838 = vld [vmem:[%s3822 + $0x3c] sm:$0xf]
        %v3855 = vunpack.c.l.b16 %v3823
        %v3856 = vunpack.c.l.b16 %v3824
        %v3857 = vunpack.c.l.b16 %v3825
        %v3858 = vunpack.c.l.b16 %v3826
        %v3859 = vunpack.c.l.b16 %v3827
        %v3860 = vunpack.c.l.b16 %v3828
        %v3861 = vunpack.c.l.b16 %v3829
        %v3862 = vunpack.c.l.b16 %v3830
        %v3863 = vunpack.c.l.b16 %v3831
        %v3864 = vunpack.c.l.b16 %v3832
        %v3865 = vunpack.c.l.b16 %v3833
        %v3866 = vunpack.c.l.b16 %v3834
        %v3867 = vunpack.c.l.b16 %v3835
        %v3868 = vunpack.c.l.b16 %v3836
        %v3869 = vunpack.c.l.b16 %v3837
        %v3870 = vunpack.c.l.b16 %v3838
        %v3871 = vpack.c.b16 %v3856, %v3855
        %v3872 = vpack.c.b16 %v3858, %v3857
        %v3873 = vpack.c.b16 %v3860, %v3859
        %v3874 = vpack.c.b16 %v3862, %v3861
        %v3875 = vpack.c.b16 %v3864, %v3863
        %v3876 = vpack.c.b16 %v3866, %v3865
        %v3877 = vpack.c.b16 %v3868, %v3867
        %v3878 = vpack.c.b16 %v3870, %v3869
        %3887 = vmatpush.bf16.msra.mxu0 %v3878
        %3888 = vmatpush.bf16.msra.mxu0 %v3877
        %3889 = vmatpush.bf16.msra.mxu0 %v3876
        %3890 = vmatpush.bf16.msra.mxu0 %v3875
        %3891 = vmatpush.bf16.msra.mxu0 %v3874
        %3892 = vmatpush.bf16.msra.mxu0 %v3873
        %3893 = vmatpush.bf16.msra.mxu0 %v3872
        %3894 = vmatpush.bf16.msra.mxu0 %v3871
        %3895 = vmatmul.bf16.gmra.mxu0 %v3818
        %v3896 = vpop.f32.mrf.mxu0
        %v3897 = vadd.f32 0.0, %v3896
        %v3898 = vpop.f32.mrf.mxu0
        %v3899 = vadd.f32 0.0, %v3898
        %3900 = vmatmul.bf16.gmra.mxu0 %v3819
        %v3901 = vpop.f32.mrf.mxu0
        %v3902 = vadd.f32 0.0, %v3901
        %v3903 = vpop.f32.mrf.mxu0
        %v3904 = vadd.f32 0.0, %v3903
        %3905 = vmatmul.bf16.gmra.mxu0 %v3820
        %v3906 = vpop.f32.mrf.mxu0
        %v3907 = vadd.f32 0.0, %v3906
        %v3908 = vpop.f32.mrf.mxu0
        %v3909 = vadd.f32 0.0, %v3908
        %3910 = vmatmul.bf16.gmra.mxu0 %v3821
        %v3911 = vpop.f32.mrf.mxu0
        %v3912 = vadd.f32 0.0, %v3911
        %v3913 = vpop.f32.mrf.mxu0
        %v3914 = vadd.f32 0.0, %v3913
        %3915 = vdwg.mxu0
        %v3916 = vadd.f32 %v3766, %v3897
        %v3917 = vadd.f32 %v3768, %v3899
        %v3918 = vadd.f32 %v3771, %v3902
        %v3919 = vadd.f32 %v3773, %v3904
        %v3920 = vadd.f32 %v3776, %v3907
        %v3921 = vadd.f32 %v3778, %v3909
        %v3922 = vadd.f32 %v3781, %v3912
        %v3923 = vadd.f32 %v3783, %v3914
        %v3924 = vmul.f32 %v3573, %v1533
        %v3925 = vmul.f32 %v3556, %v1538
        %v3926 = vmul.f32 %v3558, %v1543
        %v3927 = vmul.f32 %v3560, %v1548
        %v3928 = vmul.f32 %v3562, %v1553
        %v3929 = vmul.f32 %v3564, %v1558
        %v3930 = vmul.f32 %v3565, %v1563
        %v3931 = vmul.f32 %v3545, %v1568
        %v3932 = vpack.c.bf16 %v3925, %v3924
        %v3933 = vpack.c.bf16 %v3927, %v3926
        %v3934 = vpack.c.bf16 %v3929, %v3928
        %v3935 = vpack.c.bf16 %v3931, %v3930
        %s3936 = scalar_lea.vmem [#allocation8], 192
        %v3937 = vld [vmem:[%s3936] sm:$0xf]
        %v3938 = vld [vmem:[%s3936 + $0x4] sm:$0xf]
        %v3939 = vld [vmem:[%s3936 + $0x8] sm:$0xf]
        %v3940 = vld [vmem:[%s3936 + $0xc] sm:$0xf]
        %v3941 = vld [vmem:[%s3936 + $0x10] sm:$0xf]
        %v3942 = vld [vmem:[%s3936 + $0x14] sm:$0xf]
        %v3943 = vld [vmem:[%s3936 + $0x18] sm:$0xf]
        %v3944 = vld [vmem:[%s3936 + $0x1c] sm:$0xf]
        %v3945 = vld [vmem:[%s3936 + $0x20] sm:$0xf]
        %v3946 = vld [vmem:[%s3936 + $0x24] sm:$0xf]
        %v3947 = vld [vmem:[%s3936 + $0x28] sm:$0xf]
        %v3948 = vld [vmem:[%s3936 + $0x2c] sm:$0xf]
        %v3949 = vld [vmem:[%s3936 + $0x30] sm:$0xf]
        %v3950 = vld [vmem:[%s3936 + $0x34] sm:$0xf]
        %v3951 = vld [vmem:[%s3936 + $0x38] sm:$0xf]
        %v3952 = vld [vmem:[%s3936 + $0x3c] sm:$0xf]
        %v3969 = vunpack.c.l.b16 %v3937
        %v3970 = vunpack.c.l.b16 %v3938
        %v3971 = vunpack.c.l.b16 %v3939
        %v3972 = vunpack.c.l.b16 %v3940
        %v3973 = vunpack.c.l.b16 %v3941
        %v3974 = vunpack.c.l.b16 %v3942
        %v3975 = vunpack.c.l.b16 %v3943
        %v3976 = vunpack.c.l.b16 %v3944
        %v3977 = vunpack.c.l.b16 %v3945
        %v3978 = vunpack.c.l.b16 %v3946
        %v3979 = vunpack.c.l.b16 %v3947
        %v3980 = vunpack.c.l.b16 %v3948
        %v3981 = vunpack.c.l.b16 %v3949
        %v3982 = vunpack.c.l.b16 %v3950
        %v3983 = vunpack.c.l.b16 %v3951
        %v3984 = vunpack.c.l.b16 %v3952
        %v3985 = vpack.c.b16 %v3970, %v3969
        %v3986 = vpack.c.b16 %v3972, %v3971
        %v3987 = vpack.c.b16 %v3974, %v3973
        %v3988 = vpack.c.b16 %v3976, %v3975
        %v3989 = vpack.c.b16 %v3978, %v3977
        %v3990 = vpack.c.b16 %v3980, %v3979
        %v3991 = vpack.c.b16 %v3982, %v3981
        %v3992 = vpack.c.b16 %v3984, %v3983
        %4001 = vmatpush.bf16.msra.mxu0 %v3992
        %4002 = vmatpush.bf16.msra.mxu0 %v3991
        %4003 = vmatpush.bf16.msra.mxu0 %v3990
        %4004 = vmatpush.bf16.msra.mxu0 %v3989
        %4005 = vmatpush.bf16.msra.mxu0 %v3988
        %4006 = vmatpush.bf16.msra.mxu0 %v3987
        %4007 = vmatpush.bf16.msra.mxu0 %v3986
        %4008 = vmatpush.bf16.msra.mxu0 %v3985
        %4009 = vmatmul.bf16.gmra.mxu0 %v3932
        %v4010 = vpop.f32.mrf.mxu0
        %v4011 = vadd.f32 0.0, %v4010
        %v4012 = vpop.f32.mrf.mxu0
        %v4013 = vadd.f32 0.0, %v4012
        %4014 = vmatmul.bf16.gmra.mxu0 %v3933
        %v4015 = vpop.f32.mrf.mxu0
        %v4016 = vadd.f32 0.0, %v4015
        %v4017 = vpop.f32.mrf.mxu0
        %v4018 = vadd.f32 0.0, %v4017
        %4019 = vmatmul.bf16.gmra.mxu0 %v3934
        %v4020 = vpop.f32.mrf.mxu0
        %v4021 = vadd.f32 0.0, %v4020
        %v4022 = vpop.f32.mrf.mxu0
        %v4023 = vadd.f32 0.0, %v4022
        %4024 = vmatmul.bf16.gmra.mxu0 %v3935
        %v4025 = vpop.f32.mrf.mxu0
        %v4026 = vadd.f32 0.0, %v4025
        %v4027 = vpop.f32.mrf.mxu0
        %v4028 = vadd.f32 0.0, %v4027
        %4029 = vdwg.mxu0
        %v4030 = vadd.f32 %v3916, %v4011
        %v4031 = vadd.f32 %v3917, %v4013
        %v4032 = vadd.f32 %v3918, %v4016
        %v4033 = vadd.f32 %v3919, %v4018
        %v4034 = vadd.f32 %v3920, %v4021
        %v4035 = vadd.f32 %v3921, %v4023
        %v4036 = vadd.f32 %v3922, %v4026
        %v4037 = vadd.f32 %v3923, %v4028
        %v4038 = vpack.c.bf16 %v3534, %v3533
        %v4039 = vpack.c.bf16 %v3536, %v3535
        %v4040 = vpack.c.bf16 %v3538, %v3537
        %v4041 = vpack.c.bf16 %v3540, %v3539
        %s4042 = scalar_lea.vmem [#allocation8], 256
        %v4043 = vld [vmem:[%s4042] sm:$0xf]
        %v4044 = vld [vmem:[%s4042 + $0x4] sm:$0xf]
        %v4045 = vld [vmem:[%s4042 + $0x8] sm:$0xf]
        %v4046 = vld [vmem:[%s4042 + $0xc] sm:$0xf]
        %v4047 = vld [vmem:[%s4042 + $0x10] sm:$0xf]
        %v4048 = vld [vmem:[%s4042 + $0x14] sm:$0xf]
        %v4049 = vld [vmem:[%s4042 + $0x18] sm:$0xf]
        %v4050 = vld [vmem:[%s4042 + $0x1c] sm:$0xf]
        %v4051 = vld [vmem:[%s4042 + $0x20] sm:$0xf]
        %v4052 = vld [vmem:[%s4042 + $0x24] sm:$0xf]
        %v4053 = vld [vmem:[%s4042 + $0x28] sm:$0xf]
        %v4054 = vld [vmem:[%s4042 + $0x2c] sm:$0xf]
        %v4055 = vld [vmem:[%s4042 + $0x30] sm:$0xf]
        %v4056 = vld [vmem:[%s4042 + $0x34] sm:$0xf]
        %v4057 = vld [vmem:[%s4042 + $0x38] sm:$0xf]
        %v4058 = vld [vmem:[%s4042 + $0x3c] sm:$0xf]
        %v4075 = vunpack.c.l.b16 %v4043
        %v4076 = vunpack.c.l.b16 %v4044
        %v4077 = vunpack.c.l.b16 %v4045
        %v4078 = vunpack.c.l.b16 %v4046
        %v4079 = vunpack.c.l.b16 %v4047
        %v4080 = vunpack.c.l.b16 %v4048
        %v4081 = vunpack.c.l.b16 %v4049
        %v4082 = vunpack.c.l.b16 %v4050
        %v4083 = vunpack.c.l.b16 %v4051
        %v4084 = vunpack.c.l.b16 %v4052
        %v4085 = vunpack.c.l.b16 %v4053
        %v4086 = vunpack.c.l.b16 %v4054
        %v4087 = vunpack.c.l.b16 %v4055
        %v4088 = vunpack.c.l.b16 %v4056
        %v4089 = vunpack.c.l.b16 %v4057
        %v4090 = vunpack.c.l.b16 %v4058
        %v4091 = vpack.c.b16 %v4076, %v4075
        %v4092 = vpack.c.b16 %v4078, %v4077
        %v4093 = vpack.c.b16 %v4080, %v4079
        %v4094 = vpack.c.b16 %v4082, %v4081
        %v4095 = vpack.c.b16 %v4084, %v4083
        %v4096 = vpack.c.b16 %v4086, %v4085
        %v4097 = vpack.c.b16 %v4088, %v4087
        %v4098 = vpack.c.b16 %v4090, %v4089
        %4107 = vmatpush.bf16.msra.mxu0 %v4098
        %4108 = vmatpush.bf16.msra.mxu0 %v4097
        %4109 = vmatpush.bf16.msra.mxu0 %v4096
        %4110 = vmatpush.bf16.msra.mxu0 %v4095
        %4111 = vmatpush.bf16.msra.mxu0 %v4094
        %4112 = vmatpush.bf16.msra.mxu0 %v4093
        %4113 = vmatpush.bf16.msra.mxu0 %v4092
        %4114 = vmatpush.bf16.msra.mxu0 %v4091
        %4115 = vmatmul.bf16.gmra.mxu0 %v4038
        %v4116 = vpop.f32.mrf.mxu0
        %v4117 = vadd.f32 0.0, %v4116
        %v4118 = vpop.f32.mrf.mxu0
        %v4119 = vadd.f32 0.0, %v4118
        %4120 = vmatmul.bf16.gmra.mxu0 %v4039
        %v4121 = vpop.f32.mrf.mxu0
        %v4122 = vadd.f32 0.0, %v4121
        %v4123 = vpop.f32.mrf.mxu0
        %v4124 = vadd.f32 0.0, %v4123
        %4125 = vmatmul.bf16.gmra.mxu0 %v4040
        %v4126 = vpop.f32.mrf.mxu0
        %v4127 = vadd.f32 0.0, %v4126
        %v4128 = vpop.f32.mrf.mxu0
        %v4129 = vadd.f32 0.0, %v4128
        %4130 = vmatmul.bf16.gmra.mxu0 %v4041
        %v4131 = vpop.f32.mrf.mxu0
        %v4132 = vadd.f32 0.0, %v4131
        %v4133 = vpop.f32.mrf.mxu0
        %v4134 = vadd.f32 0.0, %v4133
        %4135 = vdwg.mxu0
        %v4136 = vadd.f32 %v4030, %v4117
        %v4137 = vadd.f32 %v4031, %v4119
        %v4138 = vadd.f32 %v4032, %v4122
        %v4139 = vadd.f32 %v4033, %v4124
        %v4140 = vadd.f32 %v4034, %v4127
        %v4141 = vadd.f32 %v4035, %v4129
        %v4142 = vadd.f32 %v4036, %v4132
        %v4143 = vadd.f32 %v4037, %v4134
        %v4144 = vmul.f32 %v3789, %v1802
        %v4145 = vmul.f32 %v3791, %v1807
        %v4146 = vmul.f32 %v3793, %v1812
        %v4147 = vmul.f32 %v3795, %v1817
        %v4148 = vmul.f32 %v3797, %v1822
        %v4149 = vmul.f32 %v3799, %v1827
        %v4150 = vmul.f32 %v3800, %v1832
        %v4151 = vmul.f32 %v3809, %v1837
        %v4152 = vpack.c.bf16 %v4145, %v4144
        %v4153 = vpack.c.bf16 %v4147, %v4146
        %v4154 = vpack.c.bf16 %v4149, %v4148
        %v4155 = vpack.c.bf16 %v4151, %v4150
        %s4156 = scalar_lea.vmem [#allocation8], 320
        %v4157 = vld [vmem:[%s4156] sm:$0xf]
        %v4158 = vld [vmem:[%s4156 + $0x4] sm:$0xf]
        %v4159 = vld [vmem:[%s4156 + $0x8] sm:$0xf]
        %v4160 = vld [vmem:[%s4156 + $0xc] sm:$0xf]
        %v4161 = vld [vmem:[%s4156 + $0x10] sm:$0xf]
        %v4162 = vld [vmem:[%s4156 + $0x14] sm:$0xf]
        %v4163 = vld [vmem:[%s4156 + $0x18] sm:$0xf]
        %v4164 = vld [vmem:[%s4156 + $0x1c] sm:$0xf]
        %v4165 = vld [vmem:[%s4156 + $0x20] sm:$0xf]
        %v4166 = vld [vmem:[%s4156 + $0x24] sm:$0xf]
        %v4167 = vld [vmem:[%s4156 + $0x28] sm:$0xf]
        %v4168 = vld [vmem:[%s4156 + $0x2c] sm:$0xf]
        %v4169 = vld [vmem:[%s4156 + $0x30] sm:$0xf]
        %v4170 = vld [vmem:[%s4156 + $0x34] sm:$0xf]
        %v4171 = vld [vmem:[%s4156 + $0x38] sm:$0xf]
        %v4172 = vld [vmem:[%s4156 + $0x3c] sm:$0xf]
        %v4189 = vunpack.c.l.b16 %v4157
        %v4190 = vunpack.c.l.b16 %v4158
        %v4191 = vunpack.c.l.b16 %v4159
        %v4192 = vunpack.c.l.b16 %v4160
        %v4193 = vunpack.c.l.b16 %v4161
        %v4194 = vunpack.c.l.b16 %v4162
        %v4195 = vunpack.c.l.b16 %v4163
        %v4196 = vunpack.c.l.b16 %v4164
        %v4197 = vunpack.c.l.b16 %v4165
        %v4198 = vunpack.c.l.b16 %v4166
        %v4199 = vunpack.c.l.b16 %v4167
        %v4200 = vunpack.c.l.b16 %v4168
        %v4201 = vunpack.c.l.b16 %v4169
        %v4202 = vunpack.c.l.b16 %v4170
        %v4203 = vunpack.c.l.b16 %v4171
        %v4204 = vunpack.c.l.b16 %v4172
        %v4205 = vpack.c.b16 %v4190, %v4189
        %v4206 = vpack.c.b16 %v4192, %v4191
        %v4207 = vpack.c.b16 %v4194, %v4193
        %v4208 = vpack.c.b16 %v4196, %v4195
        %v4209 = vpack.c.b16 %v4198, %v4197
        %v4210 = vpack.c.b16 %v4200, %v4199
        %v4211 = vpack.c.b16 %v4202, %v4201
        %v4212 = vpack.c.b16 %v4204, %v4203
        %4221 = vmatpush.bf16.msra.mxu0 %v4212
        %4222 = vmatpush.bf16.msra.mxu0 %v4211
        %4223 = vmatpush.bf16.msra.mxu0 %v4210
        %4224 = vmatpush.bf16.msra.mxu0 %v4209
        %4225 = vmatpush.bf16.msra.mxu0 %v4208
        %4226 = vmatpush.bf16.msra.mxu0 %v4207
        %4227 = vmatpush.bf16.msra.mxu0 %v4206
        %4228 = vmatpush.bf16.msra.mxu0 %v4205
        %4229 = vmatmul.bf16.gmra.mxu0 %v4152
        %v4230 = vpop.f32.mrf.mxu0
        %v4231 = vadd.f32 0.0, %v4230
        %v4232 = vpop.f32.mrf.mxu0
        %v4233 = vadd.f32 0.0, %v4232
        %4234 = vmatmul.bf16.gmra.mxu0 %v4153
        %v4235 = vpop.f32.mrf.mxu0
        %v4236 = vadd.f32 0.0, %v4235
        %v4237 = vpop.f32.mrf.mxu0
        %v4238 = vadd.f32 0.0, %v4237
        %4239 = vmatmul.bf16.gmra.mxu0 %v4154
        %v4240 = vpop.f32.mrf.mxu0
        %v4241 = vadd.f32 0.0, %v4240
        %v4242 = vpop.f32.mrf.mxu0
        %v4243 = vadd.f32 0.0, %v4242
        %4244 = vmatmul.bf16.gmra.mxu0 %v4155
        %v4245 = vpop.f32.mrf.mxu0
        %v4246 = vadd.f32 0.0, %v4245
        %v4247 = vpop.f32.mrf.mxu0
        %v4248 = vadd.f32 0.0, %v4247
        %4249 = vdwg.mxu0
        %v4250 = vadd.f32 %v4136, %v4231
        %v4251 = vadd.f32 %v4137, %v4233
        %v4252 = vadd.f32 %v4138, %v4236
        %v4253 = vadd.f32 %v4139, %v4238
        %v4254 = vadd.f32 %v4140, %v4241
        %v4255 = vadd.f32 %v4141, %v4243
        %v4256 = vadd.f32 %v4142, %v4246
        %v4257 = vadd.f32 %v4143, %v4248
        %v4258 = vmul.f32 %v3556, %v1965
        %v4259 = vmul.f32 %v3558, %v1970
        %v4260 = vmul.f32 %v3560, %v1975
        %v4261 = vmul.f32 %v3562, %v1980
        %v4262 = vmul.f32 %v3564, %v1985
        %v4263 = vmul.f32 %v3565, %v1990
        %v4264 = vmul.f32 %v3545, %v1995
        %v4265 = vmul.f32 %v3573, %v2000
        %v4266 = vpack.c.bf16 %v4259, %v4258
        %v4267 = vpack.c.bf16 %v4261, %v4260
        %v4268 = vpack.c.bf16 %v4263, %v4262
        %v4269 = vpack.c.bf16 %v4265, %v4264
        %s4270 = scalar_lea.vmem [#allocation8], 384
        %v4271 = vld [vmem:[%s4270] sm:$0xf]
        %v4272 = vld [vmem:[%s4270 + $0x4] sm:$0xf]
        %v4273 = vld [vmem:[%s4270 + $0x8] sm:$0xf]
        %v4274 = vld [vmem:[%s4270 + $0xc] sm:$0xf]
        %v4275 = vld [vmem:[%s4270 + $0x10] sm:$0xf]
        %v4276 = vld [vmem:[%s4270 + $0x14] sm:$0xf]
        %v4277 = vld [vmem:[%s4270 + $0x18] sm:$0xf]
        %v4278 = vld [vmem:[%s4270 + $0x1c] sm:$0xf]
        %v4279 = vld [vmem:[%s4270 + $0x20] sm:$0xf]
        %v4280 = vld [vmem:[%s4270 + $0x24] sm:$0xf]
        %v4281 = vld [vmem:[%s4270 + $0x28] sm:$0xf]
        %v4282 = vld [vmem:[%s4270 + $0x2c] sm:$0xf]
        %v4283 = vld [vmem:[%s4270 + $0x30] sm:$0xf]
        %v4284 = vld [vmem:[%s4270 + $0x34] sm:$0xf]
        %v4285 = vld [vmem:[%s4270 + $0x38] sm:$0xf]
        %v4286 = vld [vmem:[%s4270 + $0x3c] sm:$0xf]
        %v4303 = vunpack.c.l.b16 %v4271
        %v4304 = vunpack.c.l.b16 %v4272
        %v4305 = vunpack.c.l.b16 %v4273
        %v4306 = vunpack.c.l.b16 %v4274
        %v4307 = vunpack.c.l.b16 %v4275
        %v4308 = vunpack.c.l.b16 %v4276
        %v4309 = vunpack.c.l.b16 %v4277
        %v4310 = vunpack.c.l.b16 %v4278
        %v4311 = vunpack.c.l.b16 %v4279
        %v4312 = vunpack.c.l.b16 %v4280
        %v4313 = vunpack.c.l.b16 %v4281
        %v4314 = vunpack.c.l.b16 %v4282
        %v4315 = vunpack.c.l.b16 %v4283
        %v4316 = vunpack.c.l.b16 %v4284
        %v4317 = vunpack.c.l.b16 %v4285
        %v4318 = vunpack.c.l.b16 %v4286
        %v4319 = vpack.c.b16 %v4304, %v4303
        %v4320 = vpack.c.b16 %v4306, %v4305
        %v4321 = vpack.c.b16 %v4308, %v4307
        %v4322 = vpack.c.b16 %v4310, %v4309
        %v4323 = vpack.c.b16 %v4312, %v4311
        %v4324 = vpack.c.b16 %v4314, %v4313
        %v4325 = vpack.c.b16 %v4316, %v4315
        %v4326 = vpack.c.b16 %v4318, %v4317
        %4335 = vmatpush.bf16.msra.mxu0 %v4326
        %4336 = vmatpush.bf16.msra.mxu0 %v4325
        %4337 = vmatpush.bf16.msra.mxu0 %v4324
        %4338 = vmatpush.bf16.msra.mxu0 %v4323
        %4339 = vmatpush.bf16.msra.mxu0 %v4322
        %4340 = vmatpush.bf16.msra.mxu0 %v4321
        %4341 = vmatpush.bf16.msra.mxu0 %v4320
        %4342 = vmatpush.bf16.msra.mxu0 %v4319
        %4343 = vmatmul.bf16.gmra.mxu0 %v4266
        %v4344 = vpop.f32.mrf.mxu0
        %v4345 = vadd.f32 0.0, %v4344
        %v4346 = vpop.f32.mrf.mxu0
        %v4347 = vadd.f32 0.0, %v4346
        %4348 = vmatmul.bf16.gmra.mxu0 %v4267
        %v4349 = vpop.f32.mrf.mxu0
        %v4350 = vadd.f32 0.0, %v4349
        %v4351 = vpop.f32.mrf.mxu0
        %v4352 = vadd.f32 0.0, %v4351
        %4353 = vmatmul.bf16.gmra.mxu0 %v4268
        %v4354 = vpop.f32.mrf.mxu0
        %v4355 = vadd.f32 0.0, %v4354
        %v4356 = vpop.f32.mrf.mxu0
        %v4357 = vadd.f32 0.0, %v4356
        %4358 = vmatmul.bf16.gmra.mxu0 %v4269
        %v4359 = vpop.f32.mrf.mxu0
        %v4360 = vadd.f32 0.0, %v4359
        %v4361 = vpop.f32.mrf.mxu0
        %v4362 = vadd.f32 0.0, %v4361
        %4363 = vdwg.mxu0
        %v4364 = vadd.f32 %v4250, %v4345
        %v4365 = vadd.f32 %v4251, %v4347
        %v4366 = vadd.f32 %v4252, %v4350
        %v4367 = vadd.f32 %v4253, %v4352
        %v4368 = vadd.f32 %v4254, %v4355
        %v4369 = vadd.f32 %v4255, %v4357
        %v4370 = vadd.f32 %v4256, %v4360
        %v4371 = vadd.f32 %v4257, %v4362
        %v4372 = vmul.f32 %v3534, %v2128
        %v4373 = vmul.f32 %v3535, %v2133
        %v4374 = vmul.f32 %v3536, %v2138
        %v4375 = vmul.f32 %v3537, %v2143
        %v4376 = vmul.f32 %v3538, %v2148
        %v4377 = vmul.f32 %v3539, %v2153
        %v4378 = vmul.f32 %v3540, %v2158
        %v4379 = vmul.f32 %v3533, %v2163
        %v4380 = vpack.c.bf16 %v4373, %v4372
        %v4381 = vpack.c.bf16 %v4375, %v4374
        %v4382 = vpack.c.bf16 %v4377, %v4376
        %v4383 = vpack.c.bf16 %v4379, %v4378
        %s4384 = scalar_lea.vmem [#allocation8], 448
        %v4385 = vld [vmem:[%s4384] sm:$0xf]
        %v4386 = vld [vmem:[%s4384 + $0x4] sm:$0xf]
        %v4387 = vld [vmem:[%s4384 + $0x8] sm:$0xf]
        %v4388 = vld [vmem:[%s4384 + $0xc] sm:$0xf]
        %v4389 = vld [vmem:[%s4384 + $0x10] sm:$0xf]
        %v4390 = vld [vmem:[%s4384 + $0x14] sm:$0xf]
        %v4391 = vld [vmem:[%s4384 + $0x18] sm:$0xf]
        %v4392 = vld [vmem:[%s4384 + $0x1c] sm:$0xf]
        %v4393 = vld [vmem:[%s4384 + $0x20] sm:$0xf]
        %v4394 = vld [vmem:[%s4384 + $0x24] sm:$0xf]
        %v4395 = vld [vmem:[%s4384 + $0x28] sm:$0xf]
        %v4396 = vld [vmem:[%s4384 + $0x2c] sm:$0xf]
        %v4397 = vld [vmem:[%s4384 + $0x30] sm:$0xf]
        %v4398 = vld [vmem:[%s4384 + $0x34] sm:$0xf]
        %v4399 = vld [vmem:[%s4384 + $0x38] sm:$0xf]
        %v4400 = vld [vmem:[%s4384 + $0x3c] sm:$0xf]
        %v4417 = vunpack.c.l.b16 %v4385
        %v4418 = vunpack.c.l.b16 %v4386
        %v4419 = vunpack.c.l.b16 %v4387
        %v4420 = vunpack.c.l.b16 %v4388
        %v4421 = vunpack.c.l.b16 %v4389
        %v4422 = vunpack.c.l.b16 %v4390
        %v4423 = vunpack.c.l.b16 %v4391
        %v4424 = vunpack.c.l.b16 %v4392
        %v4425 = vunpack.c.l.b16 %v4393
        %v4426 = vunpack.c.l.b16 %v4394
        %v4427 = vunpack.c.l.b16 %v4395
        %v4428 = vunpack.c.l.b16 %v4396
        %v4429 = vunpack.c.l.b16 %v4397
        %v4430 = vunpack.c.l.b16 %v4398
        %v4431 = vunpack.c.l.b16 %v4399
        %v4432 = vunpack.c.l.b16 %v4400
        %v4433 = vpack.c.b16 %v4418, %v4417
        %v4434 = vpack.c.b16 %v4420, %v4419
        %v4435 = vpack.c.b16 %v4422, %v4421
        %v4436 = vpack.c.b16 %v4424, %v4423
        %v4437 = vpack.c.b16 %v4426, %v4425
        %v4438 = vpack.c.b16 %v4428, %v4427
        %v4439 = vpack.c.b16 %v4430, %v4429
        %v4440 = vpack.c.b16 %v4432, %v4431
        %4449 = vmatpush.bf16.msra.mxu0 %v4440
        %4450 = vmatpush.bf16.msra.mxu0 %v4439
        %4451 = vmatpush.bf16.msra.mxu0 %v4438
        %4452 = vmatpush.bf16.msra.mxu0 %v4437
        %4453 = vmatpush.bf16.msra.mxu0 %v4436
        %4454 = vmatpush.bf16.msra.mxu0 %v4435
        %4455 = vmatpush.bf16.msra.mxu0 %v4434
        %4456 = vmatpush.bf16.msra.mxu0 %v4433
        %4457 = vmatmul.bf16.gmra.mxu0 %v4380
        %v4458 = vpop.f32.mrf.mxu0
        %v4459 = vadd.f32 0.0, %v4458
        %v4460 = vpop.f32.mrf.mxu0
        %v4461 = vadd.f32 0.0, %v4460
        %4462 = vmatmul.bf16.gmra.mxu0 %v4381
        %v4463 = vpop.f32.mrf.mxu0
        %v4464 = vadd.f32 0.0, %v4463
        %v4465 = vpop.f32.mrf.mxu0
        %v4466 = vadd.f32 0.0, %v4465
        %4467 = vmatmul.bf16.gmra.mxu0 %v4382
        %v4468 = vpop.f32.mrf.mxu0
        %v4469 = vadd.f32 0.0, %v4468
        %v4470 = vpop.f32.mrf.mxu0
        %v4471 = vadd.f32 0.0, %v4470
        %4472 = vmatmul.bf16.gmra.mxu0 %v4383
        %v4473 = vpop.f32.mrf.mxu0
        %v4474 = vadd.f32 0.0, %v4473
        %v4475 = vpop.f32.mrf.mxu0
        %v4476 = vadd.f32 0.0, %v4475
        %4477 = vdwg.mxu0
        %v4478 = vadd.f32 %v4364, %v4459
        %v4479 = vadd.f32 %v4365, %v4461
        %v4480 = vadd.f32 %v4366, %v4464
        %v4481 = vadd.f32 %v4367, %v4466
        %v4482 = vadd.f32 %v4368, %v4469
        %v4483 = vadd.f32 %v4369, %v4471
        %v4484 = vadd.f32 %v4370, %v4474
        %v4485 = vadd.f32 %v4371, %v4476
        %v4486 = vmul.f32 %v3791, %v2291
        %v4487 = vmul.f32 %v3793, %v2296
        %v4488 = vmul.f32 %v3795, %v2301
        %v4489 = vmul.f32 %v3797, %v2306
        %v4490 = vmul.f32 %v3799, %v2311
        %v4491 = vmul.f32 %v3800, %v2316
        %v4492 = vmul.f32 %v3809, %v2321
        %v4493 = vmul.f32 %v3789, %v2326
        %v4494 = vpack.c.bf16 %v4487, %v4486
        %v4495 = vpack.c.bf16 %v4489, %v4488
        %v4496 = vpack.c.bf16 %v4491, %v4490
        %v4497 = vpack.c.bf16 %v4493, %v4492
        %s4498 = scalar_lea.vmem [#allocation8], 512
        %v4499 = vld [vmem:[%s4498] sm:$0xf]
        %v4500 = vld [vmem:[%s4498 + $0x4] sm:$0xf]
        %v4501 = vld [vmem:[%s4498 + $0x8] sm:$0xf]
        %v4502 = vld [vmem:[%s4498 + $0xc] sm:$0xf]
        %v4503 = vld [vmem:[%s4498 + $0x10] sm:$0xf]
        %v4504 = vld [vmem:[%s4498 + $0x14] sm:$0xf]
        %v4505 = vld [vmem:[%s4498 + $0x18] sm:$0xf]
        %v4506 = vld [vmem:[%s4498 + $0x1c] sm:$0xf]
        %v4507 = vld [vmem:[%s4498 + $0x20] sm:$0xf]
        %v4508 = vld [vmem:[%s4498 + $0x24] sm:$0xf]
        %v4509 = vld [vmem:[%s4498 + $0x28] sm:$0xf]
        %v4510 = vld [vmem:[%s4498 + $0x2c] sm:$0xf]
        %v4511 = vld [vmem:[%s4498 + $0x30] sm:$0xf]
        %v4512 = vld [vmem:[%s4498 + $0x34] sm:$0xf]
        %v4513 = vld [vmem:[%s4498 + $0x38] sm:$0xf]
        %v4514 = vld [vmem:[%s4498 + $0x3c] sm:$0xf]
        %v4531 = vunpack.c.l.b16 %v4499
        %v4532 = vunpack.c.l.b16 %v4500
        %v4533 = vunpack.c.l.b16 %v4501
        %v4534 = vunpack.c.l.b16 %v4502
        %v4535 = vunpack.c.l.b16 %v4503
        %v4536 = vunpack.c.l.b16 %v4504
        %v4537 = vunpack.c.l.b16 %v4505
        %v4538 = vunpack.c.l.b16 %v4506
        %v4539 = vunpack.c.l.b16 %v4507
        %v4540 = vunpack.c.l.b16 %v4508
        %v4541 = vunpack.c.l.b16 %v4509
        %v4542 = vunpack.c.l.b16 %v4510
        %v4543 = vunpack.c.l.b16 %v4511
        %v4544 = vunpack.c.l.b16 %v4512
        %v4545 = vunpack.c.l.b16 %v4513
        %v4546 = vunpack.c.l.b16 %v4514
        %v4547 = vpack.c.b16 %v4532, %v4531
        %v4548 = vpack.c.b16 %v4534, %v4533
        %v4549 = vpack.c.b16 %v4536, %v4535
        %v4550 = vpack.c.b16 %v4538, %v4537
        %v4551 = vpack.c.b16 %v4540, %v4539
        %v4552 = vpack.c.b16 %v4542, %v4541
        %v4553 = vpack.c.b16 %v4544, %v4543
        %v4554 = vpack.c.b16 %v4546, %v4545
        %4563 = vmatpush.bf16.msra.mxu0 %v4554
        %4564 = vmatpush.bf16.msra.mxu0 %v4553
        %4565 = vmatpush.bf16.msra.mxu0 %v4552
        %4566 = vmatpush.bf16.msra.mxu0 %v4551
        %4567 = vmatpush.bf16.msra.mxu0 %v4550
        %4568 = vmatpush.bf16.msra.mxu0 %v4549
        %4569 = vmatpush.bf16.msra.mxu0 %v4548
        %4570 = vmatpush.bf16.msra.mxu0 %v4547
        %4571 = vmatmul.bf16.gmra.mxu0 %v4494
        %v4572 = vpop.f32.mrf.mxu0
        %v4573 = vadd.f32 0.0, %v4572
        %v4574 = vpop.f32.mrf.mxu0
        %v4575 = vadd.f32 0.0, %v4574
        %4576 = vmatmul.bf16.gmra.mxu0 %v4495
        %v4577 = vpop.f32.mrf.mxu0
        %v4578 = vadd.f32 0.0, %v4577
        %v4579 = vpop.f32.mrf.mxu0
        %v4580 = vadd.f32 0.0, %v4579
        %4581 = vmatmul.bf16.gmra.mxu0 %v4496
        %v4582 = vpop.f32.mrf.mxu0
        %v4583 = vadd.f32 0.0, %v4582
        %v4584 = vpop.f32.mrf.mxu0
        %v4585 = vadd.f32 0.0, %v4584
        %4586 = vmatmul.bf16.gmra.mxu0 %v4497
        %v4587 = vpop.f32.mrf.mxu0
        %v4588 = vadd.f32 0.0, %v4587
        %v4589 = vpop.f32.mrf.mxu0
        %v4590 = vadd.f32 0.0, %v4589
        %4591 = vdwg.mxu0
        %v4592 = vadd.f32 %v4478, %v4573
        %v4593 = vadd.f32 %v4479, %v4575
        %v4594 = vadd.f32 %v4480, %v4578
        %v4595 = vadd.f32 %v4481, %v4580
        %v4596 = vadd.f32 %v4482, %v4583
        %v4597 = vadd.f32 %v4483, %v4585
        %v4598 = vadd.f32 %v4484, %v4588
        %v4599 = vadd.f32 %v4485, %v4590
        %v4600 = vld [vmem:[%s9] sm:$0x1]
        %v4602 = vperm.slane %v4600, 0
        %v4604 = vadd.f32 %v4592, %v4602
        %v4605 = vadd.f32 %v4593, %v4602
        %v4606 = vadd.f32 %v4594, %v4602
        %v4607 = vadd.f32 %v4595, %v4602
        %v4608 = vadd.f32 %v4596, %v4602
        %v4609 = vadd.f32 %v4597, %v4602
        %v4610 = vadd.f32 %v4598, %v4602
        %v4611 = vadd.f32 %v4599, %v4602
        %v4612 = vmax.f32 %v4604, 0.0
        %v4613 = vmax.f32 %v4605, 0.0
        %v4614 = vmax.f32 %v4606, 0.0
        %v4615 = vmax.f32 %v4607, 0.0
        %v4616 = vmax.f32 %v4608, 0.0
        %v4617 = vmax.f32 %v4609, 0.0
        %v4618 = vmax.f32 %v4610, 0.0
        %v4619 = vmax.f32 %v4611, 0.0
        %v4620 = vpack.c.bf16 %v969, %v966
        %v4621 = vpack.c.bf16 %v975, %v972
        %v4622 = vpack.c.bf16 %v981, %v978
        %v4623 = vpack.c.bf16 %v987, %v984
        %v4624 = vld [vmem:[#allocation10] sm:$0xf]
        %v4625 = vld [vmem:[#allocation10 + $0x4] sm:$0xf]
        %v4626 = vld [vmem:[#allocation10 + $0x8] sm:$0xf]
        %v4627 = vld [vmem:[#allocation10 + $0xc] sm:$0xf]
        %v4628 = vld [vmem:[#allocation10 + $0x10] sm:$0xf]
        %v4629 = vld [vmem:[#allocation10 + $0x14] sm:$0xf]
        %v4630 = vld [vmem:[#allocation10 + $0x18] sm:$0xf]
        %v4631 = vld [vmem:[#allocation10 + $0x1c] sm:$0xf]
        %v4632 = vld [vmem:[#allocation10 + $0x20] sm:$0xf]
        %v4633 = vld [vmem:[#allocation10 + $0x24] sm:$0xf]
        %v4634 = vld [vmem:[#allocation10 + $0x28] sm:$0xf]
        %v4635 = vld [vmem:[#allocation10 + $0x2c] sm:$0xf]
        %v4636 = vld [vmem:[#allocation10 + $0x30] sm:$0xf]
        %v4637 = vld [vmem:[#allocation10 + $0x34] sm:$0xf]
        %v4638 = vld [vmem:[#allocation10 + $0x38] sm:$0xf]
        %v4639 = vld [vmem:[#allocation10 + $0x3c] sm:$0xf]
        %v4640 = vpack.c.bf16 %v2455, %v2454
        %v4641 = vpack.c.bf16 %v2457, %v2456
        %v4642 = vpack.c.bf16 %v2459, %v2458
        %v4643 = vpack.c.bf16 %v2461, %v2460
        %v4644 = vld [vmem:[#allocation11] sm:$0xf]
        %v4645 = vld [vmem:[#allocation11 + $0x4] sm:$0xf]
        %v4646 = vld [vmem:[#allocation11 + $0x8] sm:$0xf]
        %v4647 = vld [vmem:[#allocation11 + $0xc] sm:$0xf]
        %v4648 = vld [vmem:[#allocation11 + $0x10] sm:$0xf]
        %v4649 = vld [vmem:[#allocation11 + $0x14] sm:$0xf]
        %v4650 = vld [vmem:[#allocation11 + $0x18] sm:$0xf]
        %v4651 = vld [vmem:[#allocation11 + $0x1c] sm:$0xf]
        %v4652 = vld [vmem:[#allocation11 + $0x20] sm:$0xf]
        %v4653 = vld [vmem:[#allocation11 + $0x24] sm:$0xf]
        %v4654 = vld [vmem:[#allocation11 + $0x28] sm:$0xf]
        %v4655 = vld [vmem:[#allocation11 + $0x2c] sm:$0xf]
        %v4656 = vld [vmem:[#allocation11 + $0x30] sm:$0xf]
        %v4657 = vld [vmem:[#allocation11 + $0x34] sm:$0xf]
        %v4658 = vld [vmem:[#allocation11 + $0x38] sm:$0xf]
        %v4659 = vld [vmem:[#allocation11 + $0x3c] sm:$0xf]
        %v4676 = vunpack.c.l.b16 %v4644
        %v4677 = vunpack.c.l.b16 %v4645
        %v4678 = vunpack.c.l.b16 %v4646
        %v4679 = vunpack.c.l.b16 %v4647
        %v4680 = vunpack.c.l.b16 %v4648
        %v4681 = vunpack.c.l.b16 %v4649
        %v4682 = vunpack.c.l.b16 %v4650
        %v4683 = vunpack.c.l.b16 %v4651
        %v4684 = vunpack.c.l.b16 %v4652
        %v4685 = vunpack.c.l.b16 %v4653
        %v4686 = vunpack.c.l.b16 %v4654
        %v4687 = vunpack.c.l.b16 %v4655
        %v4688 = vunpack.c.l.b16 %v4656
        %v4689 = vunpack.c.l.b16 %v4657
        %v4690 = vunpack.c.l.b16 %v4658
        %v4691 = vunpack.c.l.b16 %v4659
        %v4692 = vpack.c.b16 %v4677, %v4676
        %v4693 = vpack.c.b16 %v4679, %v4678
        %v4694 = vpack.c.b16 %v4681, %v4680
        %v4695 = vpack.c.b16 %v4683, %v4682
        %v4696 = vpack.c.b16 %v4685, %v4684
        %v4697 = vpack.c.b16 %v4687, %v4686
        %v4698 = vpack.c.b16 %v4689, %v4688
        %v4699 = vpack.c.b16 %v4691, %v4690
        %4708 = vmatpush.bf16.msra.mxu0 %v4699
        %4709 = vmatpush.bf16.msra.mxu0 %v4698
        %4710 = vmatpush.bf16.msra.mxu0 %v4697
        %4711 = vmatpush.bf16.msra.mxu0 %v4696
        %4712 = vmatpush.bf16.msra.mxu0 %v4695
        %4713 = vmatpush.bf16.msra.mxu0 %v4694
        %4714 = vmatpush.bf16.msra.mxu0 %v4693
        %4715 = vmatpush.bf16.msra.mxu0 %v4692
        %4716 = vmatmul.bf16.gmra.mxu0 %v4640
        %v4717 = vpop.f32.mrf.mxu0
        %v4718 = vadd.f32 0.0, %v4717
        %v4719 = vpop.f32.mrf.mxu0
        %v4720 = vadd.f32 0.0, %v4719
        %4721 = vmatmul.bf16.gmra.mxu0 %v4641
        %v4722 = vpop.f32.mrf.mxu0
        %v4723 = vadd.f32 0.0, %v4722
        %v4724 = vpop.f32.mrf.mxu0
        %v4725 = vadd.f32 0.0, %v4724
        %4726 = vmatmul.bf16.gmra.mxu0 %v4642
        %v4727 = vpop.f32.mrf.mxu0
        %v4728 = vadd.f32 0.0, %v4727
        %v4729 = vpop.f32.mrf.mxu0
        %v4730 = vadd.f32 0.0, %v4729
        %4731 = vmatmul.bf16.gmra.mxu0 %v4643
        %v4732 = vpop.f32.mrf.mxu0
        %v4733 = vadd.f32 0.0, %v4732
        %v4734 = vpop.f32.mrf.mxu0
        %v4735 = vadd.f32 0.0, %v4734
        %4736 = vdwg.mxu0
        %v4753 = vunpack.c.l.b16 %v4624
        %v4754 = vunpack.c.l.b16 %v4625
        %v4755 = vunpack.c.l.b16 %v4626
        %v4756 = vunpack.c.l.b16 %v4627
        %v4757 = vunpack.c.l.b16 %v4628
        %v4758 = vunpack.c.l.b16 %v4629
        %v4759 = vunpack.c.l.b16 %v4630
        %v4760 = vunpack.c.l.b16 %v4631
        %v4761 = vunpack.c.l.b16 %v4632
        %v4762 = vunpack.c.l.b16 %v4633
        %v4763 = vunpack.c.l.b16 %v4634
        %v4764 = vunpack.c.l.b16 %v4635
        %v4765 = vunpack.c.l.b16 %v4636
        %v4766 = vunpack.c.l.b16 %v4637
        %v4767 = vunpack.c.l.b16 %v4638
        %v4768 = vunpack.c.l.b16 %v4639
        %v4769 = vpack.c.b16 %v4754, %v4753
        %v4770 = vpack.c.b16 %v4756, %v4755
        %v4771 = vpack.c.b16 %v4758, %v4757
        %v4772 = vpack.c.b16 %v4760, %v4759
        %v4773 = vpack.c.b16 %v4762, %v4761
        %v4774 = vpack.c.b16 %v4764, %v4763
        %v4775 = vpack.c.b16 %v4766, %v4765
        %v4776 = vpack.c.b16 %v4768, %v4767
        %4785 = vmatpush.bf16.msra.mxu0 %v4776
        %4786 = vmatpush.bf16.msra.mxu0 %v4775
        %4787 = vmatpush.bf16.msra.mxu0 %v4774
        %4788 = vmatpush.bf16.msra.mxu0 %v4773
        %4789 = vmatpush.bf16.msra.mxu0 %v4772
        %4790 = vmatpush.bf16.msra.mxu0 %v4771
        %4791 = vmatpush.bf16.msra.mxu0 %v4770
        %4792 = vmatpush.bf16.msra.mxu0 %v4769
        %4793 = vmatmul.bf16.gmra.mxu0 %v4620
        %v4794 = vpop.f32.mrf.mxu0
        %v4795 = vadd.f32 %v4718, %v4794
        %v4796 = vpop.f32.mrf.mxu0
        %v4797 = vadd.f32 %v4720, %v4796
        %4798 = vmatmul.bf16.gmra.mxu0 %v4621
        %v4799 = vpop.f32.mrf.mxu0
        %v4800 = vadd.f32 %v4723, %v4799
        %v4801 = vpop.f32.mrf.mxu0
        %v4802 = vadd.f32 %v4725, %v4801
        %4803 = vmatmul.bf16.gmra.mxu0 %v4622
        %v4804 = vpop.f32.mrf.mxu0
        %v4805 = vadd.f32 %v4728, %v4804
        %v4806 = vpop.f32.mrf.mxu0
        %v4807 = vadd.f32 %v4730, %v4806
        %4808 = vmatmul.bf16.gmra.mxu0 %v4623
        %v4809 = vpop.f32.mrf.mxu0
        %v4810 = vadd.f32 %v4733, %v4809
        %v4811 = vpop.f32.mrf.mxu0
        %v4812 = vadd.f32 %v4735, %v4811
        %4813 = vdwg.mxu0
        %v4814 = vpack.c.bf16 %v4613, %v4612
        %v4815 = vpack.c.bf16 %v4615, %v4614
        %v4816 = vpack.c.bf16 %v4617, %v4616
        %v4817 = vpack.c.bf16 %v4619, %v4618
        %v4818 = vld [vmem:[#allocation13] sm:$0xf]
        %v4819 = vld [vmem:[#allocation13 + $0x4] sm:$0xf]
        %v4820 = vld [vmem:[#allocation13 + $0x8] sm:$0xf]
        %v4821 = vld [vmem:[#allocation13 + $0xc] sm:$0xf]
        %v4822 = vld [vmem:[#allocation13 + $0x10] sm:$0xf]
        %v4823 = vld [vmem:[#allocation13 + $0x14] sm:$0xf]
        %v4824 = vld [vmem:[#allocation13 + $0x18] sm:$0xf]
        %v4825 = vld [vmem:[#allocation13 + $0x1c] sm:$0xf]
        %v4826 = vld [vmem:[#allocation13 + $0x20] sm:$0xf]
        %v4827 = vld [vmem:[#allocation13 + $0x24] sm:$0xf]
        %v4828 = vld [vmem:[#allocation13 + $0x28] sm:$0xf]
        %v4829 = vld [vmem:[#allocation13 + $0x2c] sm:$0xf]
        %v4830 = vld [vmem:[#allocation13 + $0x30] sm:$0xf]
        %v4831 = vld [vmem:[#allocation13 + $0x34] sm:$0xf]
        %v4832 = vld [vmem:[#allocation13 + $0x38] sm:$0xf]
        %v4833 = vld [vmem:[#allocation13 + $0x3c] sm:$0xf]
        %v4850 = vunpack.c.l.b16 %v4818
        %v4851 = vunpack.c.l.b16 %v4819
        %v4852 = vunpack.c.l.b16 %v4820
        %v4853 = vunpack.c.l.b16 %v4821
        %v4854 = vunpack.c.l.b16 %v4822
        %v4855 = vunpack.c.l.b16 %v4823
        %v4856 = vunpack.c.l.b16 %v4824
        %v4857 = vunpack.c.l.b16 %v4825
        %v4858 = vunpack.c.l.b16 %v4826
        %v4859 = vunpack.c.l.b16 %v4827
        %v4860 = vunpack.c.l.b16 %v4828
        %v4861 = vunpack.c.l.b16 %v4829
        %v4862 = vunpack.c.l.b16 %v4830
        %v4863 = vunpack.c.l.b16 %v4831
        %v4864 = vunpack.c.l.b16 %v4832
        %v4865 = vunpack.c.l.b16 %v4833
        %v4866 = vpack.c.b16 %v4851, %v4850
        %v4867 = vpack.c.b16 %v4853, %v4852
        %v4868 = vpack.c.b16 %v4855, %v4854
        %v4869 = vpack.c.b16 %v4857, %v4856
        %v4870 = vpack.c.b16 %v4859, %v4858
        %v4871 = vpack.c.b16 %v4861, %v4860
        %v4872 = vpack.c.b16 %v4863, %v4862
        %v4873 = vpack.c.b16 %v4865, %v4864
        %4882 = vmatpush.bf16.msra.mxu0 %v4873
        %4883 = vmatpush.bf16.msra.mxu0 %v4872
        %4884 = vmatpush.bf16.msra.mxu0 %v4871
        %4885 = vmatpush.bf16.msra.mxu0 %v4870
        %4886 = vmatpush.bf16.msra.mxu0 %v4869
        %4887 = vmatpush.bf16.msra.mxu0 %v4868
        %4888 = vmatpush.bf16.msra.mxu0 %v4867
        %4889 = vmatpush.bf16.msra.mxu0 %v4866
        %4890 = vmatmul.bf16.gmra.mxu0 %v4814
        %v4891 = vpop.f32.mrf.mxu0
        %v4892 = vadd.f32 0.0, %v4891
        %v4893 = vpop.f32.mrf.mxu0
        %v4894 = vadd.f32 0.0, %v4893
        %4895 = vmatmul.bf16.gmra.mxu0 %v4815
        %v4896 = vpop.f32.mrf.mxu0
        %v4897 = vadd.f32 0.0, %v4896
        %v4898 = vpop.f32.mrf.mxu0
        %v4899 = vadd.f32 0.0, %v4898
        %4900 = vmatmul.bf16.gmra.mxu0 %v4816
        %v4901 = vpop.f32.mrf.mxu0
        %v4902 = vadd.f32 0.0, %v4901
        %v4903 = vpop.f32.mrf.mxu0
        %v4904 = vadd.f32 0.0, %v4903
        %4905 = vmatmul.bf16.gmra.mxu0 %v4817
        %v4906 = vpop.f32.mrf.mxu0
        %v4907 = vadd.f32 0.0, %v4906
        %v4908 = vpop.f32.mrf.mxu0
        %v4909 = vadd.f32 0.0, %v4908
        %4910 = vdwg.mxu0
        %v4911 = vadd.f32 %v4795, %v4892
        %v4912 = vadd.f32 %v4797, %v4894
        %v4913 = vadd.f32 %v4800, %v4897
        %v4914 = vadd.f32 %v4802, %v4899
        %v4915 = vadd.f32 %v4805, %v4902
        %v4916 = vadd.f32 %v4807, %v4904
        %v4917 = vadd.f32 %v4810, %v4907
        %v4918 = vadd.f32 %v4812, %v4909
        %v4919 = vld [vmem:[%s13] sm:$0x1]
        %v4921 = vperm.slane %v4919, 0
        %v4923 = vadd.f32 %v4911, %v4921
        %v4924 = vadd.f32 %v4912, %v4921
        %v4925 = vadd.f32 %v4913, %v4921
        %v4926 = vadd.f32 %v4914, %v4921
        %v4927 = vadd.f32 %v4915, %v4921
        %v4928 = vadd.f32 %v4916, %v4921
        %v4929 = vadd.f32 %v4917, %v4921
        %v4930 = vadd.f32 %v4918, %v4921
        %v4931 = vmax.f32 %v4923, 0.0
        %v4932 = vmax.f32 %v4924, 0.0
        %v4933 = vmax.f32 %v4925, 0.0
        %v4934 = vmax.f32 %v4926, 0.0
        %v4935 = vmax.f32 %v4927, 0.0
        %v4936 = vmax.f32 %v4928, 0.0
        %v4937 = vmax.f32 %v4929, 0.0
        %v4938 = vmax.f32 %v4930, 0.0
        %4939 = vst [vmem:[%s586] sm:$0xff] %v4931
        %4940 = vst [vmem:[%s586 + $0x8] sm:$0xff] %v4932
        %4941 = vst [vmem:[%s586 + $0x10] sm:$0xff] %v4933
        %4942 = vst [vmem:[%s586 + $0x18] sm:$0xff] %v4934
        %4943 = vst [vmem:[%s586 + $0x20] sm:$0xff] %v4935
        %4944 = vst [vmem:[%s586 + $0x28] sm:$0xff] %v4936
        %4945 = vst [vmem:[%s586 + $0x30] sm:$0xff] %v4937
        %4946 = vst [vmem:[%s586 + $0x38] sm:$0xff] %v4938
        %s4947 = sand.u32 %s341, 1
        %s4948 = scalar_lea.sflag [#allocation4], %s4947
        %s4949 = sand.u32 %s341, 1
        %s4950 = smul.addr %s4949, 64
        %s4951 = scalar_lea.vmem [#allocation14], %s4950
        // Predicated region
        $region105: #{tpu_custom_call.1} parent=75 // pred_check
          %p4952 = pneg %p351
        $region106: #{tpu_custom_call.1} parent=75 // pred_check_branch
          %4954 = sbr.rel (%p4952) target = $region108
        $region107: #{tpu_custom_call.1} parent=75 // pred_region
          %4956 = vsyncadd %s4948, 0
          %s4957 = smul.addr %s34, 8
          %s4958 = smul.addr %s4957, 8
          %s4959 = scalar_lea.hbm %s14, %s4958
          %s4960 = sshll.u32 %s4951, 4
          %s4961 = int_to_ptr.vmem [resolvable:$true] %s4960
          %s4962 = sshll.u32 %s4959, 4
          %s4963 = int_to_ptr.hbm [resolvable:$true] %s4962
          %4968 = dma.vmem_to_hbm [thread:$0]  %s4961, 1024, %s4963, %s4948, 128, 128, 8
        $region108: #{tpu_custom_call.1} parent=75 // pred_fallthru
          _
      $region76: #{tpu_custom_call.1} parent=5 // pred_fallthru
        _
      %p4969 = scmp.le.s32.totalorder 2, %s29
      // Predicated region
      $region109: #{tpu_custom_call.1} parent=5 // pred_check
        %p4970 = pneg %p4969
      $region110: #{tpu_custom_call.1} parent=5 // pred_check_branch
        %4972 = sbr.rel (%p4970) target = $region112
      $region111: #{tpu_custom_call.1} parent=5 // pred_region
        %s4973 = ssub.s32 %s29, 2
        // Predicated region
        $region113: #{tpu_custom_call.1} parent=111 // pred_check
          %p4974 = pneg %p357
        $region114: #{tpu_custom_call.1} parent=111 // pred_check_branch
          %4976 = sbr.rel (%p4974) target = $region116
        $region115: #{tpu_custom_call.1} parent=111 // pred_region
          %s4977 = sand.u32 %s342, 1
          %s4978 = scalar_lea.sflag [#allocation4], %s4977
          %s4979 = sand.u32 %s342, 1
          %s4980 = smul.addr %s4979, 64
          %s4981 = scalar_lea.vmem [#allocation14], %s4980
          %4983 = dma.done %s4978, 1024
        $region116: #{tpu_custom_call.1} parent=111 // pred_fallthru
          _
      $region112: #{tpu_custom_call.1} parent=5 // pred_fallthru
        _
    $region6: #{tpu_custom_call.1} parent=1 // loop_footer
      %s33 = sadd.s32 1, %s29
    $region7: #{tpu_custom_call.1} parent=1 // loop_footer_branch
      %28 = sbr.rel target = $region3
    $region8: #{tpu_custom_call.1} parent=1 // loop_exit
      _
    %4984 = vsyncpa [#allocation3], 1
    %s4985 = scalar_lea.sflag [#allocation3], 1
    %4986 = vsyncpa %s4985, 1
    %4987 = vsyncpa [#allocation6], 1
    %4988 = vsyncpa [#allocation9], 1
    %4989 = vsyncpa [#allocation12], 1
    %4990 = vsyncpa [#allocation4], 1
    %s4991 = scalar_lea.sflag [#allocation4], 1
    %4992 = vsyncpa %s4991, 1

</llo_original>
